<compile_context>
chip_gen: v5e
topology: v5e:2x2
jax: 0.10.0
libtpu: 0.0.40
codegen_flags: <defaults>
</compile_context>

<pallas_src>
import functools
import math

import jax
import jax.numpy as jnp
from jax import lax
from jax.experimental import pallas as pl
from jax.experimental.pallas import tpu as pltpu

N_HEADS = 8


# ---------------------------------------------------------------------------
# One fused kernel for the entire encoder stack.
#   grid = (B, L); B "parallel" (megacore), L "arbitrary" (layer loop).
#   Activation + char features stay VMEM-resident across all layers of a batch
#   element; per-layer weights are streamed (auto double-buffered) over L.
# ---------------------------------------------------------------------------

def _encoder_kernel(
    # batch-indexed inputs (constant across L -> fetched once per batch element)
    x_in_ref, mask_ref, charflat_ref, adj_ref, convw_ref, convb_ref,
    # layer-stacked weights (indexed by L)
    lng_ref, lnb_ref, wqkv_ref, bqkv_ref, wo_ref, bo_ref,
    wg_ref, bg_ref, wt_ref, bt_ref, w1_ref, b1_ref, w2_ref, b2_ref,
    # output
    o_ref,
    # scratch
    x_sc, char_sc,
    *, n_tree, nheads, eps):

    l = pl.program_id(1)
    n_layers = pl.num_programs(1)

    # ---- once per batch element: load token embeddings + run char "conv" ----
    @pl.when(l == 0)
    def _():
        char_sc[...] = (
            jnp.dot(charflat_ref[...], convw_ref[...],
                    preferred_element_type=jnp.float32) + convb_ref[...])
        x_sc[...] = x_in_ref[...]

    x = x_sc[...]            # (N, E) VMEM-resident activation carry
    lng = lng_ref[...]       # (4, E) stacked LayerNorm gammas for this layer
    lnb = lnb_ref[...]       # (4, E) stacked LayerNorm betas

    Ntok, E = x.shape
    H = nheads
    Dh = E // H

    def ln(v, idx):
        g = lng[idx:idx + 1, :]
        b = lnb[idx:idx + 1, :]
        mu = jnp.mean(v, axis=-1, keepdims=True)
        var = jnp.mean((v - mu) ** 2, axis=-1, keepdims=True)
        return (v - mu) * lax.rsqrt(var + eps) * g + b

    # ---- 1) multi-head self-attention --------------------------------------
    h = ln(x, 0)
    qkv = (jnp.dot(h, wqkv_ref[...], preferred_element_type=jnp.float32)
           + bqkv_ref[...])
    q = qkv[:, 0:E] * (1.0 / math.sqrt(Dh))      # pre-scale q once (hoisted)
    k = qkv[:, E:2 * E]
    v = qkv[:, 2 * E:3 * E]
    # hoisted single broadcast of the additive key mask to all heads
    mask_full = jnp.broadcast_to(mask_ref[...], (H * Ntok, Ntok))

    # per-head scores stacked on the sublane axis -> (H*N, N)
    s_parts = []
    for hh in range(H):                          # static unroll; H tiny
        sl = slice(hh * Dh, (hh + 1) * Dh)
        s_parts.append(lax.dot_general(q[:, sl], k[:, sl],
                                       (((1,), (1,)), ((), ())),
                                       preferred_element_type=jnp.float32))
    s = jnp.concatenate(s_parts, axis=0) + mask_full
    # one batched softmax across all heads
    s = s - jnp.max(s, axis=-1, keepdims=True)
    p = jnp.exp(s)
    p = p * pl.reciprocal(jnp.sum(p, axis=-1, keepdims=True), approx=True)

    # per-head context, concatenated on lanes -> (N, E); ONE output projection
    o_parts = []
    for hh in range(H):
        sl = slice(hh * Dh, (hh + 1) * Dh)
        o_parts.append(jnp.dot(p[hh * Ntok:(hh + 1) * Ntok, :], v[:, sl],
                               preferred_element_type=jnp.float32))
    o_heads = jnp.concatenate(o_parts, axis=-1)                       # (N, E)
    x = x + (jnp.dot(o_heads, wo_ref[...], preferred_element_type=jnp.float32)
             + bo_ref[...])

    # ---- 2) gated fusion with char conv features (fused gate matmul) --------
    h = ln(x, 1)
    c = char_sc[...]
    hc = jnp.concatenate([h, c], axis=-1)                             # (N, 2E)
    g = jax.nn.sigmoid(
        jnp.dot(hc, wg_ref[...], preferred_element_type=jnp.float32) + bg_ref[...])
    x = x + g * h + (1.0 - g) * c

    # ---- 3) tree convolution (first n_tree layers only) ---------------------
    x_sc[...] = x
    @pl.when(l < n_tree)
    def _():
        xv = x_sc[...]
        h2 = ln(xv, 2)
        msg = jnp.dot(adj_ref[...], h2, preferred_element_type=jnp.float32)
        msg = jax.nn.gelu(
            jnp.dot(msg, wt_ref[...], preferred_element_type=jnp.float32)
            + bt_ref[...])
        x_sc[...] = xv + msg
    x = x_sc[...]

    # ---- 4) position-wise feed-forward --------------------------------------
    h = ln(x, 3)
    f = jax.nn.gelu(
        jnp.dot(h, w1_ref[...], preferred_element_type=jnp.float32) + b1_ref[...])
    f = jnp.dot(f, w2_ref[...], preferred_element_type=jnp.float32) + b2_ref[...]
    x_sc[...] = x + f

    # ---- write out once per batch element -----------------------------------
    @pl.when(l == n_layers - 1)
    def _():
        o_ref[...] = x_sc[...]


# ---------------------------------------------------------------------------
# Model wrapper (glue: embedding gathers + mask construction + weight stacking)
# ---------------------------------------------------------------------------

def tree_att_encoder(params, input_code, input_codechar, inputAd,
                     nheads=N_HEADS, eps=1e-5):
    B, N = input_code.shape
    W = input_codechar.shape[-1]
    E = params["token_emb"].shape[1]

    n_tree = len(params["tree_blocks"])
    all_blocks = list(params["tree_blocks"]) + list(params["blocks"])
    L = len(all_blocks)

    weight_keys = ["ln_g", "ln_b", "wqkv", "bqkv", "wo", "bo",
                   "wg", "bg", "wt", "bt", "w1", "b1", "w2", "b2"]
    stacked = {k: jnp.stack([bp[k] for bp in all_blocks]) for k in weight_keys}

    codemask = input_code > 0
    mask_bias = jnp.where(codemask, 0.0, -1e9).astype(jnp.float32).reshape(B, 1, N)

    # char embedding lookup (gather glue); the (1,W) conv itself runs in-kernel
    char_gather = jnp.take(params["char_emb"], input_codechar, axis=0)   # (B,N,W,E)
    char_flat = char_gather.reshape(B, N, W * E)                         # (w,e) flat order

    x = jnp.take(params["token_emb"], input_code, axis=0)                # (B,N,E)
    x = x.astype(jnp.float32)

    def batch_spec(shape):
        nd = len(shape)
        return pl.BlockSpec((None,) + tuple(shape[1:]),
                            lambda b, l, nd=nd: (b,) + (0,) * (nd - 1))

    def const_spec(arr):
        nd = arr.ndim
        return pl.BlockSpec(arr.shape, lambda b, l, nd=nd: (0,) * nd)

    def layer_spec(arr):
        nd = arr.ndim
        return pl.BlockSpec((None,) + tuple(arr.shape[1:]),
                            lambda b, l, nd=nd: (l,) + (0,) * (nd - 1))

    inputs = [x, mask_bias, char_flat, inputAd,
              params["conv_w"], params["conv_b"]]
    specs = [batch_spec(x.shape), batch_spec(mask_bias.shape),
             batch_spec(char_flat.shape), batch_spec(inputAd.shape),
             const_spec(params["conv_w"]), const_spec(params["conv_b"])]
    inputs += [stacked[k] for k in weight_keys]
    specs += [layer_spec(stacked[k]) for k in weight_keys]

    return pl.pallas_call(
        functools.partial(_encoder_kernel, n_tree=n_tree, nheads=nheads, eps=eps),
        out_shape=jax.ShapeDtypeStruct((B, N, E), jnp.float32),
        grid=(B, L),
        in_specs=specs,
        out_specs=pl.BlockSpec((None, N, E), lambda b, l: (b, 0, 0)),
        scratch_shapes=[pltpu.VMEM((N, E), jnp.float32),    # activation carry
                        pltpu.VMEM((N, E), jnp.float32)],   # char conv features
        compiler_params=pltpu.CompilerParams(
            dimension_semantics=("parallel", "arbitrary"),
            vmem_limit_bytes=32 * 1024 * 1024),
    )(*inputs)


# ---------------------------------------------------------------------------
# Deterministic parameter init
# ---------------------------------------------------------------------------

def _w(key, shape, scale=0.02):
    return (scale * jax.random.normal(key, shape)).astype(jnp.float32)


def init_block(key, E, FF):
    ks = jax.random.split(key, 7)
    return {
        "wqkv": _w(ks[0], (E, 3 * E)), "bqkv": jnp.zeros((1, 3 * E), jnp.float32),
        "wo": _w(ks[1], (E, E)), "bo": jnp.zeros((1, E), jnp.float32),
        # fused gate weight: rows [0:E] act on h, rows [E:2E] act on char features
        "wg": _w(ks[2], (2 * E, E)), "bg": jnp.zeros((1, E), jnp.float32),
        "wt": _w(ks[3], (E, E)), "bt": jnp.zeros((1, E), jnp.float32),
        "w1": _w(ks[4], (E, FF)), "b1": jnp.zeros((1, FF), jnp.float32),
        "w2": _w(ks[5], (FF, E)), "b2": jnp.zeros((1, E), jnp.float32),
        "ln_g": jnp.ones((4, E), jnp.float32),
        "ln_b": jnp.zeros((4, E), jnp.float32),
    }


def init_params(key, *, E, W, vocsize, code_vocsize):
    FF = 4 * E
    ks = jax.random.split(key, 10)
    return {
        "char_emb": _w(ks[0], (vocsize, E), 1.0),
        "token_emb": _w(ks[1], (code_vocsize, E), 1.0),
        "conv_w": _w(ks[2], (W * E, E)),
        "conv_b": jnp.zeros((1, E), jnp.float32),
        "tree_blocks": [init_block(ks[3 + i], E, FF) for i in range(3)],
        "blocks": [init_block(ks[6 + i], E, FF) for i in range(3)],
    }


# ---------------------------------------------------------------------------
# Main
# ---------------------------------------------------------------------------

if __name__ == "__main__":
    B, N, W, E = 2, 16, 8, 32          # batch, code length (NlLen), WoLen, embedding_size
    VOCSIZE, CODE_VOCSIZE = 50, 60

    key = jax.random.PRNGKey(0)
    k_par, k_code, k_char, k_adj = jax.random.split(key, 4)

    params = init_params(k_par, E=E, W=W, vocsize=VOCSIZE, code_vocsize=CODE_VOCSIZE)

    input_code = jax.random.randint(k_code, (B, N), 1, CODE_VOCSIZE, dtype=jnp.int32)
    input_code = input_code.at[:, -3:].set(0)      # trailing padding -> exercises codemask
    input_codechar = jax.random.randint(k_char, (B, N, W), 0, VOCSIZE, dtype=jnp.int32)
    inputAd = jax.random.bernoulli(k_adj, 0.3, (B, N, N)).astype(jnp.float32)

    fwd = jax.jit(tree_att_encoder)
    out = fwd(params, input_code, input_codechar, inputAd)
    out = jax.block_until_ready(out)

    assert out.shape == (B, N, E), out.shape
    assert bool(jnp.all(jnp.isfinite(out)))
    print("KERNEL_OK")
</pallas_src>

<mosaic_0001>
module attributes {stable_mosaic.version = 11 : i64} {
  func.func @_encoder_kernel(%arg0: i32, %arg1: i32, %arg2: memref<1x16x32xf32, #tpu.memory_space<vmem>>, %arg3: memref<1x1x16xf32, #tpu.memory_space<vmem>>, %arg4: memref<1x16x256xf32, #tpu.memory_space<vmem>>, %arg5: memref<1x16x16xf32, #tpu.memory_space<vmem>>, %arg6: memref<256x32xf32, #tpu.memory_space<vmem>>, %arg7: memref<1x32xf32, #tpu.memory_space<vmem>>, %arg8: memref<1x4x32xf32, #tpu.memory_space<vmem>>, %arg9: memref<1x4x32xf32, #tpu.memory_space<vmem>>, %arg10: memref<1x32x96xf32, #tpu.memory_space<vmem>>, %arg11: memref<1x1x96xf32, #tpu.memory_space<vmem>>, %arg12: memref<1x32x32xf32, #tpu.memory_space<vmem>>, %arg13: memref<1x1x32xf32, #tpu.memory_space<vmem>>, %arg14: memref<1x64x32xf32, #tpu.memory_space<vmem>>, %arg15: memref<1x1x32xf32, #tpu.memory_space<vmem>>, %arg16: memref<1x32x32xf32, #tpu.memory_space<vmem>>, %arg17: memref<1x1x32xf32, #tpu.memory_space<vmem>>, %arg18: memref<1x32x128xf32, #tpu.memory_space<vmem>>, %arg19: memref<1x1x128xf32, #tpu.memory_space<vmem>>, %arg20: memref<1x128x32xf32, #tpu.memory_space<vmem>>, %arg21: memref<1x1x32xf32, #tpu.memory_space<vmem>>, %arg22: memref<1x16x32xf32, #tpu.memory_space<vmem>>, %arg23: memref<16x32xf32, #tpu.memory_space<vmem>>, %arg24: memref<16x32xf32, #tpu.memory_space<vmem>>) attributes {dimension_semantics = [#tpu.dimension_semantics<parallel>, #tpu.dimension_semantics<arbitrary>], iteration_bounds = array<i64: 2, 6>, scalar_prefetch = 0 : i64, scratch_operands = 2 : i64, tpu.core_type = #tpu.core_type<tc>, window_params = [{transform_indices = @transform_0, window_bounds = array<i64: 1, 16, 32>}, {transform_indices = @transform_1, window_bounds = array<i64: 1, 1, 16>}, {transform_indices = @transform_2, window_bounds = array<i64: 1, 16, 256>}, {transform_indices = @transform_3, window_bounds = array<i64: 1, 16, 16>}, {pipeline_mode = #tpu.pipeline_mode<synchronous>, transform_indices = @transform_4, window_bounds = array<i64: 256, 32>}, {pipeline_mode = #tpu.pipeline_mode<synchronous>, transform_indices = @transform_5, window_bounds = array<i64: 1, 32>}, {transform_indices = @transform_6, window_bounds = array<i64: 1, 4, 32>}, {transform_indices = @transform_7, window_bounds = array<i64: 1, 4, 32>}, {transform_indices = @transform_8, window_bounds = array<i64: 1, 32, 96>}, {transform_indices = @transform_9, window_bounds = array<i64: 1, 1, 96>}, {transform_indices = @transform_10, window_bounds = array<i64: 1, 32, 32>}, {transform_indices = @transform_11, window_bounds = array<i64: 1, 1, 32>}, {transform_indices = @transform_12, window_bounds = array<i64: 1, 64, 32>}, {transform_indices = @transform_13, window_bounds = array<i64: 1, 1, 32>}, {transform_indices = @transform_14, window_bounds = array<i64: 1, 32, 32>}, {transform_indices = @transform_15, window_bounds = array<i64: 1, 1, 32>}, {transform_indices = @transform_16, window_bounds = array<i64: 1, 32, 128>}, {transform_indices = @transform_17, window_bounds = array<i64: 1, 1, 128>}, {transform_indices = @transform_18, window_bounds = array<i64: 1, 128, 32>}, {transform_indices = @transform_19, window_bounds = array<i64: 1, 1, 32>}, {transform_indices = @transform_20, window_bounds = array<i64: 1, 16, 32>}]} {
    %c0_i32 = arith.constant 0 : i32
    %0 = arith.cmpi eq, %arg1, %c0_i32 : i32
    %1 = arith.extui %0 : i1 to i32
    %c0_i32_0 = arith.constant 0 : i32
    %2 = arith.cmpi ne, %1, %c0_i32_0 : i32
    scf.if %2 {
      %c0_95 = arith.constant 0 : index
      %c0_96 = arith.constant 0 : index
      %c0_97 = arith.constant 0 : index
      %222 = vector.load %arg4[%c0_95, %c0_96, %c0_97] : memref<1x16x256xf32, #tpu.memory_space<vmem>>, vector<1x16x256xf32>
      %223 = vector.shape_cast %222 : vector<1x16x256xf32> to vector<16x256xf32>
      %c0_98 = arith.constant 0 : index
      %c0_99 = arith.constant 0 : index
      %224 = vector.load %arg6[%c0_98, %c0_99] : memref<256x32xf32, #tpu.memory_space<vmem>>, vector<256x32xf32>
      %cst_100 = arith.constant dense<0.000000e+00> : vector<16x32xf32>
      %225 = tpu.matmul %223, %224, %cst_100 {dimension_numbers = #tpu.dot_dimension_numbers<[1], [0], [0], [1], [0, 0, 1, 1], [], []>} : vector<16x256xf32>, vector<256x32xf32>, vector<16x32xf32> -> vector<16x32xf32>
      %c0_101 = arith.constant 0 : index
      %c0_102 = arith.constant 0 : index
      %226 = vector.load %arg7[%c0_101, %c0_102] : memref<1x32xf32, #tpu.memory_space<vmem>>, vector<1x32xf32>
      %227 = vector.broadcast %226 : vector<1x32xf32> to vector<16x32xf32>
      %228 = arith.addf %225, %227 : vector<16x32xf32>
      %c0_103 = arith.constant 0 : index
      %c0_104 = arith.constant 0 : index
      %229 = vector.load %arg24[%c0_103, %c0_104] : memref<16x32xf32, #tpu.memory_space<vmem>>, vector<16x32xf32>
      tpu.vector_store %arg24[%c0_103, %c0_104], %228 {strides = array<i32>} : memref<16x32xf32, #tpu.memory_space<vmem>>, vector<16x32xf32>,
      %c0_105 = arith.constant 0 : index
      %c0_106 = arith.constant 0 : index
      %c0_107 = arith.constant 0 : index
      %230 = vector.load %arg2[%c0_105, %c0_106, %c0_107] : memref<1x16x32xf32, #tpu.memory_space<vmem>>, vector<1x16x32xf32>
      %231 = vector.shape_cast %230 : vector<1x16x32xf32> to vector<16x32xf32>
      %c0_108 = arith.constant 0 : index
      %c0_109 = arith.constant 0 : index
      %232 = vector.load %arg23[%c0_108, %c0_109] : memref<16x32xf32, #tpu.memory_space<vmem>>, vector<16x32xf32>
      tpu.vector_store %arg23[%c0_108, %c0_109], %231 {strides = array<i32>} : memref<16x32xf32, #tpu.memory_space<vmem>>, vector<16x32xf32>,
    } else {
    }
    %c0 = arith.constant 0 : index
    %c0_1 = arith.constant 0 : index
    %3 = vector.load %arg23[%c0, %c0_1] : memref<16x32xf32, #tpu.memory_space<vmem>>, vector<16x32xf32>
    %c0_2 = arith.constant 0 : index
    %c0_3 = arith.constant 0 : index
    %c0_4 = arith.constant 0 : index
    %4 = vector.load %arg8[%c0_2, %c0_3, %c0_4] : memref<1x4x32xf32, #tpu.memory_space<vmem>>, vector<1x4x32xf32>
    %5 = vector.shape_cast %4 : vector<1x4x32xf32> to vector<4x32xf32>
    %c0_5 = arith.constant 0 : index
    %c0_6 = arith.constant 0 : index
    %c0_7 = arith.constant 0 : index
    %6 = vector.load %arg9[%c0_5, %c0_6, %c0_7] : memref<1x4x32xf32, #tpu.memory_space<vmem>>, vector<1x4x32xf32>
    %7 = vector.shape_cast %6 : vector<1x4x32xf32> to vector<4x32xf32>
    %8 = vector.extract_strided_slice %5 {offsets = [0, 0], sizes = [1, 32], strides = [1, 1]} : vector<4x32xf32> to vector<1x32xf32>
    %9 = vector.extract_strided_slice %7 {offsets = [0, 0], sizes = [1, 32], strides = [1, 1]} : vector<4x32xf32> to vector<1x32xf32>
    %cst = arith.constant dense<0.000000e+00> : vector<16xf32>
    %10 = vector.multi_reduction <add>, %3, %cst [1] : vector<16x32xf32> to vector<16xf32>
    %11 = vector.shape_cast %10 : vector<16xf32> to vector<16x1xf32>
    %cst_8 = arith.constant 3.200000e+01 : f32
    %12 = vector.broadcast %cst_8 : f32 to vector<16x1xf32>
    %13 = arith.divf %11, %12 : vector<16x1xf32>
    %14 = vector.broadcast %13 : vector<16x1xf32> to vector<16x32xf32>
    %15 = arith.subf %3, %14 : vector<16x32xf32>
    %16 = arith.mulf %15, %15 : vector<16x32xf32>
    %cst_9 = arith.constant dense<0.000000e+00> : vector<16xf32>
    %17 = vector.multi_reduction <add>, %16, %cst_9 [1] : vector<16x32xf32> to vector<16xf32>
    %18 = vector.shape_cast %17 : vector<16xf32> to vector<16x1xf32>
    %cst_10 = arith.constant 3.200000e+01 : f32
    %19 = vector.broadcast %cst_10 : f32 to vector<16x1xf32>
    %20 = arith.divf %18, %19 : vector<16x1xf32>
    %21 = vector.broadcast %13 : vector<16x1xf32> to vector<16x32xf32>
    %22 = arith.subf %3, %21 : vector<16x32xf32>
    %cst_11 = arith.constant 9.99999974E-6 : f32
    %23 = vector.broadcast %cst_11 : f32 to vector<16x1xf32>
    %24 = arith.addf %20, %23 : vector<16x1xf32>
    %25 = math.rsqrt %24 : vector<16x1xf32>
    %26 = vector.broadcast %25 : vector<16x1xf32> to vector<16x32xf32>
    %27 = arith.mulf %22, %26 : vector<16x32xf32>
    %28 = vector.broadcast %8 : vector<1x32xf32> to vector<16x32xf32>
    %29 = arith.mulf %27, %28 : vector<16x32xf32>
    %30 = vector.broadcast %9 : vector<1x32xf32> to vector<16x32xf32>
    %31 = arith.addf %29, %30 : vector<16x32xf32>
    %c0_12 = arith.constant 0 : index
    %c0_13 = arith.constant 0 : index
    %c0_14 = arith.constant 0 : index
    %32 = vector.load %arg10[%c0_12, %c0_13, %c0_14] : memref<1x32x96xf32, #tpu.memory_space<vmem>>, vector<1x32x96xf32>
    %33 = vector.shape_cast %32 : vector<1x32x96xf32> to vector<32x96xf32>
    %cst_15 = arith.constant dense<0.000000e+00> : vector<16x96xf32>
    %34 = tpu.matmul %31, %33, %cst_15 {dimension_numbers = #tpu.dot_dimension_numbers<[1], [0], [0], [1], [0, 0, 1, 1], [], []>} : vector<16x32xf32>, vector<32x96xf32>, vector<16x96xf32> -> vector<16x96xf32>
    %c0_16 = arith.constant 0 : index
    %c0_17 = arith.constant 0 : index
    %c0_18 = arith.constant 0 : index
    %35 = vector.load %arg11[%c0_16, %c0_17, %c0_18] : memref<1x1x96xf32, #tpu.memory_space<vmem>>, vector<1x1x96xf32>
    %36 = vector.shape_cast %35 : vector<1x1x96xf32> to vector<1x96xf32>
    %37 = vector.broadcast %36 : vector<1x96xf32> to vector<16x96xf32>
    %38 = arith.addf %34, %37 : vector<16x96xf32>
    %39 = vector.extract_strided_slice %38 {offsets = [0, 0], sizes = [16, 32], strides = [1, 1]} : vector<16x96xf32> to vector<16x32xf32>
    %cst_19 = arith.constant 5.000000e-01 : f32
    %40 = vector.broadcast %cst_19 : f32 to vector<16x32xf32>
    %41 = arith.mulf %39, %40 : vector<16x32xf32>
    %42 = vector.extract_strided_slice %38 {offsets = [0, 32], sizes = [16, 32], strides = [1, 1]} : vector<16x96xf32> to vector<16x32xf32>
    %43 = vector.extract_strided_slice %38 {offsets = [0, 64], sizes = [16, 32], strides = [1, 1]} : vector<16x96xf32> to vector<16x32xf32>
    %c0_20 = arith.constant 0 : index
    %c0_21 = arith.constant 0 : index
    %c0_22 = arith.constant 0 : index
    %44 = vector.load %arg3[%c0_20, %c0_21, %c0_22] : memref<1x1x16xf32, #tpu.memory_space<vmem>>, vector<1x1x16xf32>
    %45 = vector.shape_cast %44 : vector<1x1x16xf32> to vector<1x16xf32>
    %46 = vector.shape_cast %45 : vector<1x16xf32> to vector<1x16xf32>
    %47 = vector.broadcast %46 : vector<1x16xf32> to vector<128x16xf32>
    %48 = vector.extract_strided_slice %41 {offsets = [0, 0], sizes = [16, 4], strides = [1, 1]} : vector<16x32xf32> to vector<16x4xf32>
    %49 = vector.extract_strided_slice %42 {offsets = [0, 0], sizes = [16, 4], strides = [1, 1]} : vector<16x32xf32> to vector<16x4xf32>
    %cst_23 = arith.constant dense<0.000000e+00> : vector<16x16xf32>
    %50 = tpu.matmul %48, %49, %cst_23 {dimension_numbers = #tpu.dot_dimension_numbers<[1], [1], [0], [0], [0, 0, 1, 0], [], []>} : vector<16x4xf32>, vector<16x4xf32>, vector<16x16xf32> -> vector<16x16xf32>
    %51 = vector.extract_strided_slice %41 {offsets = [0, 4], sizes = [16, 4], strides = [1, 1]} : vector<16x32xf32> to vector<16x4xf32>
    %52 = vector.extract_strided_slice %42 {offsets = [0, 4], sizes = [16, 4], strides = [1, 1]} : vector<16x32xf32> to vector<16x4xf32>
    %cst_24 = arith.constant dense<0.000000e+00> : vector<16x16xf32>
    %53 = tpu.matmul %51, %52, %cst_24 {dimension_numbers = #tpu.dot_dimension_numbers<[1], [1], [0], [0], [0, 0, 1, 0], [], []>} : vector<16x4xf32>, vector<16x4xf32>, vector<16x16xf32> -> vector<16x16xf32>
    %54 = vector.extract_strided_slice %41 {offsets = [0, 8], sizes = [16, 4], strides = [1, 1]} : vector<16x32xf32> to vector<16x4xf32>
    %55 = vector.extract_strided_slice %42 {offsets = [0, 8], sizes = [16, 4], strides = [1, 1]} : vector<16x32xf32> to vector<16x4xf32>
    %cst_25 = arith.constant dense<0.000000e+00> : vector<16x16xf32>
    %56 = tpu.matmul %54, %55, %cst_25 {dimension_numbers = #tpu.dot_dimension_numbers<[1], [1], [0], [0], [0, 0, 1, 0], [], []>} : vector<16x4xf32>, vector<16x4xf32>, vector<16x16xf32> -> vector<16x16xf32>
    %57 = vector.extract_strided_slice %41 {offsets = [0, 12], sizes = [16, 4], strides = [1, 1]} : vector<16x32xf32> to vector<16x4xf32>
    %58 = vector.extract_strided_slice %42 {offsets = [0, 12], sizes = [16, 4], strides = [1, 1]} : vector<16x32xf32> to vector<16x4xf32>
    %cst_26 = arith.constant dense<0.000000e+00> : vector<16x16xf32>
    %59 = tpu.matmul %57, %58, %cst_26 {dimension_numbers = #tpu.dot_dimension_numbers<[1], [1], [0], [0], [0, 0, 1, 0], [], []>} : vector<16x4xf32>, vector<16x4xf32>, vector<16x16xf32> -> vector<16x16xf32>
    %60 = vector.extract_strided_slice %41 {offsets = [0, 16], sizes = [16, 4], strides = [1, 1]} : vector<16x32xf32> to vector<16x4xf32>
    %61 = vector.extract_strided_slice %42 {offsets = [0, 16], sizes = [16, 4], strides = [1, 1]} : vector<16x32xf32> to vector<16x4xf32>
    %cst_27 = arith.constant dense<0.000000e+00> : vector<16x16xf32>
    %62 = tpu.matmul %60, %61, %cst_27 {dimension_numbers = #tpu.dot_dimension_numbers<[1], [1], [0], [0], [0, 0, 1, 0], [], []>} : vector<16x4xf32>, vector<16x4xf32>, vector<16x16xf32> -> vector<16x16xf32>
    %63 = vector.extract_strided_slice %41 {offsets = [0, 20], sizes = [16, 4], strides = [1, 1]} : vector<16x32xf32> to vector<16x4xf32>
    %64 = vector.extract_strided_slice %42 {offsets = [0, 20], sizes = [16, 4], strides = [1, 1]} : vector<16x32xf32> to vector<16x4xf32>
    %cst_28 = arith.constant dense<0.000000e+00> : vector<16x16xf32>
    %65 = tpu.matmul %63, %64, %cst_28 {dimension_numbers = #tpu.dot_dimension_numbers<[1], [1], [0], [0], [0, 0, 1, 0], [], []>} : vector<16x4xf32>, vector<16x4xf32>, vector<16x16xf32> -> vector<16x16xf32>
    %66 = vector.extract_strided_slice %41 {offsets = [0, 24], sizes = [16, 4], strides = [1, 1]} : vector<16x32xf32> to vector<16x4xf32>
    %67 = vector.extract_strided_slice %42 {offsets = [0, 24], sizes = [16, 4], strides = [1, 1]} : vector<16x32xf32> to vector<16x4xf32>
    %cst_29 = arith.constant dense<0.000000e+00> : vector<16x16xf32>
    %68 = tpu.matmul %66, %67, %cst_29 {dimension_numbers = #tpu.dot_dimension_numbers<[1], [1], [0], [0], [0, 0, 1, 0], [], []>} : vector<16x4xf32>, vector<16x4xf32>, vector<16x16xf32> -> vector<16x16xf32>
    %69 = vector.extract_strided_slice %41 {offsets = [0, 28], sizes = [16, 4], strides = [1, 1]} : vector<16x32xf32> to vector<16x4xf32>
    %70 = vector.extract_strided_slice %42 {offsets = [0, 28], sizes = [16, 4], strides = [1, 1]} : vector<16x32xf32> to vector<16x4xf32>
    %cst_30 = arith.constant dense<0.000000e+00> : vector<16x16xf32>
    %71 = tpu.matmul %69, %70, %cst_30 {dimension_numbers = #tpu.dot_dimension_numbers<[1], [1], [0], [0], [0, 0, 1, 0], [], []>} : vector<16x4xf32>, vector<16x4xf32>, vector<16x16xf32> -> vector<16x16xf32>
    %72 = tpu.concatenate %50, %53, %56, %59, %62, %65, %68, %71 in 0 : vector<16x16xf32>, vector<16x16xf32>, vector<16x16xf32>, vector<16x16xf32>, vector<16x16xf32>, vector<16x16xf32>, vector<16x16xf32>, vector<16x16xf32> -> vector<128x16xf32>
    %73 = arith.addf %72, %47 : vector<128x16xf32>
    %cst_31 = arith.constant dense<0xFF800000> : vector<128xf32>
    %74 = vector.multi_reduction <maximumf>, %73, %cst_31 [1] : vector<128x16xf32> to vector<128xf32>
    %75 = vector.shape_cast %74 : vector<128xf32> to vector<128x1xf32>
    %76 = vector.broadcast %75 : vector<128x1xf32> to vector<128x16xf32>
    %77 = arith.subf %73, %76 : vector<128x16xf32>
    %78 = math.exp %77 : vector<128x16xf32>
    %cst_32 = arith.constant dense<0.000000e+00> : vector<128xf32>
    %79 = vector.multi_reduction <add>, %78, %cst_32 [1] : vector<128x16xf32> to vector<128xf32>
    %80 = vector.shape_cast %79 : vector<128xf32> to vector<128x1xf32>
    %81 = tpu.reciprocal %80 {approx = true} : vector<128x1xf32> -> vector<128x1xf32>
    %82 = vector.broadcast %81 : vector<128x1xf32> to vector<128x16xf32>
    %83 = arith.mulf %78, %82 : vector<128x16xf32>
    %84 = vector.extract_strided_slice %83 {offsets = [0, 0], sizes = [16, 16], strides = [1, 1]} : vector<128x16xf32> to vector<16x16xf32>
    %85 = vector.extract_strided_slice %43 {offsets = [0, 0], sizes = [16, 4], strides = [1, 1]} : vector<16x32xf32> to vector<16x4xf32>
    %cst_33 = arith.constant dense<0.000000e+00> : vector<16x4xf32>
    %86 = tpu.matmul %84, %85, %cst_33 {dimension_numbers = #tpu.dot_dimension_numbers<[1], [0], [0], [1], [0, 0, 1, 1], [], []>} : vector<16x16xf32>, vector<16x4xf32>, vector<16x4xf32> -> vector<16x4xf32>
    %87 = vector.extract_strided_slice %83 {offsets = [16, 0], sizes = [16, 16], strides = [1, 1]} : vector<128x16xf32> to vector<16x16xf32>
    %88 = vector.extract_strided_slice %43 {offsets = [0, 4], sizes = [16, 4], strides = [1, 1]} : vector<16x32xf32> to vector<16x4xf32>
    %cst_34 = arith.constant dense<0.000000e+00> : vector<16x4xf32>
    %89 = tpu.matmul %87, %88, %cst_34 {dimension_numbers = #tpu.dot_dimension_numbers<[1], [0], [0], [1], [0, 0, 1, 1], [], []>} : vector<16x16xf32>, vector<16x4xf32>, vector<16x4xf32> -> vector<16x4xf32>
    %90 = vector.extract_strided_slice %83 {offsets = [32, 0], sizes = [16, 16], strides = [1, 1]} : vector<128x16xf32> to vector<16x16xf32>
    %91 = vector.extract_strided_slice %43 {offsets = [0, 8], sizes = [16, 4], strides = [1, 1]} : vector<16x32xf32> to vector<16x4xf32>
    %cst_35 = arith.constant dense<0.000000e+00> : vector<16x4xf32>
    %92 = tpu.matmul %90, %91, %cst_35 {dimension_numbers = #tpu.dot_dimension_numbers<[1], [0], [0], [1], [0, 0, 1, 1], [], []>} : vector<16x16xf32>, vector<16x4xf32>, vector<16x4xf32> -> vector<16x4xf32>
    %93 = vector.extract_strided_slice %83 {offsets = [48, 0], sizes = [16, 16], strides = [1, 1]} : vector<128x16xf32> to vector<16x16xf32>
    %94 = vector.extract_strided_slice %43 {offsets = [0, 12], sizes = [16, 4], strides = [1, 1]} : vector<16x32xf32> to vector<16x4xf32>
    %cst_36 = arith.constant dense<0.000000e+00> : vector<16x4xf32>
    %95 = tpu.matmul %93, %94, %cst_36 {dimension_numbers = #tpu.dot_dimension_numbers<[1], [0], [0], [1], [0, 0, 1, 1], [], []>} : vector<16x16xf32>, vector<16x4xf32>, vector<16x4xf32> -> vector<16x4xf32>
    %96 = vector.extract_strided_slice %83 {offsets = [64, 0], sizes = [16, 16], strides = [1, 1]} : vector<128x16xf32> to vector<16x16xf32>
    %97 = vector.extract_strided_slice %43 {offsets = [0, 16], sizes = [16, 4], strides = [1, 1]} : vector<16x32xf32> to vector<16x4xf32>
    %cst_37 = arith.constant dense<0.000000e+00> : vector<16x4xf32>
    %98 = tpu.matmul %96, %97, %cst_37 {dimension_numbers = #tpu.dot_dimension_numbers<[1], [0], [0], [1], [0, 0, 1, 1], [], []>} : vector<16x16xf32>, vector<16x4xf32>, vector<16x4xf32> -> vector<16x4xf32>
    %99 = vector.extract_strided_slice %83 {offsets = [80, 0], sizes = [16, 16], strides = [1, 1]} : vector<128x16xf32> to vector<16x16xf32>
    %100 = vector.extract_strided_slice %43 {offsets = [0, 20], sizes = [16, 4], strides = [1, 1]} : vector<16x32xf32> to vector<16x4xf32>
    %cst_38 = arith.constant dense<0.000000e+00> : vector<16x4xf32>
    %101 = tpu.matmul %99, %100, %cst_38 {dimension_numbers = #tpu.dot_dimension_numbers<[1], [0], [0], [1], [0, 0, 1, 1], [], []>} : vector<16x16xf32>, vector<16x4xf32>, vector<16x4xf32> -> vector<16x4xf32>
    %102 = vector.extract_strided_slice %83 {offsets = [96, 0], sizes = [16, 16], strides = [1, 1]} : vector<128x16xf32> to vector<16x16xf32>
    %103 = vector.extract_strided_slice %43 {offsets = [0, 24], sizes = [16, 4], strides = [1, 1]} : vector<16x32xf32> to vector<16x4xf32>
    %cst_39 = arith.constant dense<0.000000e+00> : vector<16x4xf32>
    %104 = tpu.matmul %102, %103, %cst_39 {dimension_numbers = #tpu.dot_dimension_numbers<[1], [0], [0], [1], [0, 0, 1, 1], [], []>} : vector<16x16xf32>, vector<16x4xf32>, vector<16x4xf32> -> vector<16x4xf32>
    %105 = vector.extract_strided_slice %83 {offsets = [112, 0], sizes = [16, 16], strides = [1, 1]} : vector<128x16xf32> to vector<16x16xf32>
    %106 = vector.extract_strided_slice %43 {offsets = [0, 28], sizes = [16, 4], strides = [1, 1]} : vector<16x32xf32> to vector<16x4xf32>
    %cst_40 = arith.constant dense<0.000000e+00> : vector<16x4xf32>
    %107 = tpu.matmul %105, %106, %cst_40 {dimension_numbers = #tpu.dot_dimension_numbers<[1], [0], [0], [1], [0, 0, 1, 1], [], []>} : vector<16x16xf32>, vector<16x4xf32>, vector<16x4xf32> -> vector<16x4xf32>
    %108 = tpu.concatenate %86, %89, %92, %95, %98, %101, %104, %107 in 1 : vector<16x4xf32>, vector<16x4xf32>, vector<16x4xf32>, vector<16x4xf32>, vector<16x4xf32>, vector<16x4xf32>, vector<16x4xf32>, vector<16x4xf32> -> vector<16x32xf32>
    %c0_41 = arith.constant 0 : index
    %c0_42 = arith.constant 0 : index
    %c0_43 = arith.constant 0 : index
    %109 = vector.load %arg12[%c0_41, %c0_42, %c0_43] : memref<1x32x32xf32, #tpu.memory_space<vmem>>, vector<1x32x32xf32>
    %110 = vector.shape_cast %109 : vector<1x32x32xf32> to vector<32x32xf32>
    %cst_44 = arith.constant dense<0.000000e+00> : vector<16x32xf32>
    %111 = tpu.matmul %108, %110, %cst_44 {dimension_numbers = #tpu.dot_dimension_numbers<[1], [0], [0], [1], [0, 0, 1, 1], [], []>} : vector<16x32xf32>, vector<32x32xf32>, vector<16x32xf32> -> vector<16x32xf32>
    %c0_45 = arith.constant 0 : index
    %c0_46 = arith.constant 0 : index
    %c0_47 = arith.constant 0 : index
    %112 = vector.load %arg13[%c0_45, %c0_46, %c0_47] : memref<1x1x32xf32, #tpu.memory_space<vmem>>, vector<1x1x32xf32>
    %113 = vector.shape_cast %112 : vector<1x1x32xf32> to vector<1x32xf32>
    %114 = vector.broadcast %113 : vector<1x32xf32> to vector<16x32xf32>
    %115 = arith.addf %111, %114 : vector<16x32xf32>
    %116 = arith.addf %3, %115 : vector<16x32xf32>
    %117 = vector.extract_strided_slice %5 {offsets = [1, 0], sizes = [1, 32], strides = [1, 1]} : vector<4x32xf32> to vector<1x32xf32>
    %118 = vector.extract_strided_slice %7 {offsets = [1, 0], sizes = [1, 32], strides = [1, 1]} : vector<4x32xf32> to vector<1x32xf32>
    %cst_48 = arith.constant dense<0.000000e+00> : vector<16xf32>
    %119 = vector.multi_reduction <add>, %116, %cst_48 [1] : vector<16x32xf32> to vector<16xf32>
    %120 = vector.shape_cast %119 : vector<16xf32> to vector<16x1xf32>
    %cst_49 = arith.constant 3.200000e+01 : f32
    %121 = vector.broadcast %cst_49 : f32 to vector<16x1xf32>
    %122 = arith.divf %120, %121 : vector<16x1xf32>
    %123 = vector.broadcast %122 : vector<16x1xf32> to vector<16x32xf32>
    %124 = arith.subf %116, %123 : vector<16x32xf32>
    %125 = arith.mulf %124, %124 : vector<16x32xf32>
    %cst_50 = arith.constant dense<0.000000e+00> : vector<16xf32>
    %126 = vector.multi_reduction <add>, %125, %cst_50 [1] : vector<16x32xf32> to vector<16xf32>
    %127 = vector.shape_cast %126 : vector<16xf32> to vector<16x1xf32>
    %cst_51 = arith.constant 3.200000e+01 : f32
    %128 = vector.broadcast %cst_51 : f32 to vector<16x1xf32>
    %129 = arith.divf %127, %128 : vector<16x1xf32>
    %130 = vector.broadcast %122 : vector<16x1xf32> to vector<16x32xf32>
    %131 = arith.subf %116, %130 : vector<16x32xf32>
    %cst_52 = arith.constant 9.99999974E-6 : f32
    %132 = vector.broadcast %cst_52 : f32 to vector<16x1xf32>
    %133 = arith.addf %129, %132 : vector<16x1xf32>
    %134 = math.rsqrt %133 : vector<16x1xf32>
    %135 = vector.broadcast %134 : vector<16x1xf32> to vector<16x32xf32>
    %136 = arith.mulf %131, %135 : vector<16x32xf32>
    %137 = vector.broadcast %117 : vector<1x32xf32> to vector<16x32xf32>
    %138 = arith.mulf %136, %137 : vector<16x32xf32>
    %139 = vector.broadcast %118 : vector<1x32xf32> to vector<16x32xf32>
    %140 = arith.addf %138, %139 : vector<16x32xf32>
    %c0_53 = arith.constant 0 : index
    %c0_54 = arith.constant 0 : index
    %141 = vector.load %arg24[%c0_53, %c0_54] : memref<16x32xf32, #tpu.memory_space<vmem>>, vector<16x32xf32>
    %142 = tpu.concatenate %140, %141 in 1 : vector<16x32xf32>, vector<16x32xf32> -> vector<16x64xf32>
    %c0_55 = arith.constant 0 : index
    %c0_56 = arith.constant 0 : index
    %c0_57 = arith.constant 0 : index
    %143 = vector.load %arg14[%c0_55, %c0_56, %c0_57] : memref<1x64x32xf32, #tpu.memory_space<vmem>>, vector<1x64x32xf32>
    %144 = vector.shape_cast %143 : vector<1x64x32xf32> to vector<64x32xf32>
    %cst_58 = arith.constant dense<0.000000e+00> : vector<16x32xf32>
    %145 = tpu.matmul %142, %144, %cst_58 {dimension_numbers = #tpu.dot_dimension_numbers<[1], [0], [0], [1], [0, 0, 1, 1], [], []>} : vector<16x64xf32>, vector<64x32xf32>, vector<16x32xf32> -> vector<16x32xf32>
    %c0_59 = arith.constant 0 : index
    %c0_60 = arith.constant 0 : index
    %c0_61 = arith.constant 0 : index
    %146 = vector.load %arg15[%c0_59, %c0_60, %c0_61] : memref<1x1x32xf32, #tpu.memory_space<vmem>>, vector<1x1x32xf32>
    %147 = vector.shape_cast %146 : vector<1x1x32xf32> to vector<1x32xf32>
    %148 = vector.broadcast %147 : vector<1x32xf32> to vector<16x32xf32>
    %149 = arith.addf %145, %148 : vector<16x32xf32>
    %150 = arith.negf %149 : vector<16x32xf32>
    %151 = math.exp %150 : vector<16x32xf32>
    %cst_62 = arith.constant 1.000000e+00 : f32
    %152 = vector.broadcast %cst_62 : f32 to vector<16x32xf32>
    %153 = arith.addf %152, %151 : vector<16x32xf32>
    %154 = arith.divf %152, %153 : vector<16x32xf32>
    %155 = arith.mulf %154, %140 : vector<16x32xf32>
    %156 = arith.addf %116, %155 : vector<16x32xf32>
    %cst_63 = arith.constant 1.000000e+00 : f32
    %157 = vector.broadcast %cst_63 : f32 to vector<16x32xf32>
    %158 = arith.subf %157, %154 : vector<16x32xf32>
    %159 = arith.mulf %158, %141 : vector<16x32xf32>
    %160 = arith.addf %156, %159 : vector<16x32xf32>
    %c0_64 = arith.constant 0 : index
    %c0_65 = arith.constant 0 : index
    %161 = vector.load %arg23[%c0_64, %c0_65] : memref<16x32xf32, #tpu.memory_space<vmem>>, vector<16x32xf32>
    tpu.vector_store %arg23[%c0_64, %c0_65], %160 {strides = array<i32>} : memref<16x32xf32, #tpu.memory_space<vmem>>, vector<16x32xf32>,
    %c3_i32 = arith.constant 3 : i32
    %162 = arith.cmpi slt, %arg1, %c3_i32 : i32
    %163 = arith.extui %162 : i1 to i32
    %c0_i32_66 = arith.constant 0 : i32
    %164 = arith.cmpi ne, %163, %c0_i32_66 : i32
    scf.if %164 {
      %c0_95 = arith.constant 0 : index
      %c0_96 = arith.constant 0 : index
      %222 = vector.load %arg23[%c0_95, %c0_96] : memref<16x32xf32, #tpu.memory_space<vmem>>, vector<16x32xf32>
      %223 = vector.extract_strided_slice %5 {offsets = [2, 0], sizes = [1, 32], strides = [1, 1]} : vector<4x32xf32> to vector<1x32xf32>
      %224 = vector.extract_strided_slice %7 {offsets = [2, 0], sizes = [1, 32], strides = [1, 1]} : vector<4x32xf32> to vector<1x32xf32>
      %cst_97 = arith.constant dense<0.000000e+00> : vector<16xf32>
      %225 = vector.multi_reduction <add>, %222, %cst_97 [1] : vector<16x32xf32> to vector<16xf32>
      %226 = vector.shape_cast %225 : vector<16xf32> to vector<16x1xf32>
      %cst_98 = arith.constant 3.200000e+01 : f32
      %227 = vector.broadcast %cst_98 : f32 to vector<16x1xf32>
      %228 = arith.divf %226, %227 : vector<16x1xf32>
      %229 = vector.broadcast %228 : vector<16x1xf32> to vector<16x32xf32>
      %230 = arith.subf %222, %229 : vector<16x32xf32>
      %231 = arith.mulf %230, %230 : vector<16x32xf32>
      %cst_99 = arith.constant dense<0.000000e+00> : vector<16xf32>
      %232 = vector.multi_reduction <add>, %231, %cst_99 [1] : vector<16x32xf32> to vector<16xf32>
      %233 = vector.shape_cast %232 : vector<16xf32> to vector<16x1xf32>
      %cst_100 = arith.constant 3.200000e+01 : f32
      %234 = vector.broadcast %cst_100 : f32 to vector<16x1xf32>
      %235 = arith.divf %233, %234 : vector<16x1xf32>
      %236 = vector.broadcast %228 : vector<16x1xf32> to vector<16x32xf32>
      %237 = arith.subf %222, %236 : vector<16x32xf32>
      %cst_101 = arith.constant 9.99999974E-6 : f32
      %238 = vector.broadcast %cst_101 : f32 to vector<16x1xf32>
      %239 = arith.addf %235, %238 : vector<16x1xf32>
      %240 = math.rsqrt %239 : vector<16x1xf32>
      %241 = vector.broadcast %240 : vector<16x1xf32> to vector<16x32xf32>
      %242 = arith.mulf %237, %241 : vector<16x32xf32>
      %243 = vector.broadcast %223 : vector<1x32xf32> to vector<16x32xf32>
      %244 = arith.mulf %242, %243 : vector<16x32xf32>
      %245 = vector.broadcast %224 : vector<1x32xf32> to vector<16x32xf32>
      %246 = arith.addf %244, %245 : vector<16x32xf32>
      %c0_102 = arith.constant 0 : index
      %c0_103 = arith.constant 0 : index
      %c0_104 = arith.constant 0 : index
      %247 = vector.load %arg5[%c0_102, %c0_103, %c0_104] : memref<1x16x16xf32, #tpu.memory_space<vmem>>, vector<1x16x16xf32>
      %248 = vector.shape_cast %247 : vector<1x16x16xf32> to vector<16x16xf32>
      %cst_105 = arith.constant dense<0.000000e+00> : vector<16x32xf32>
      %249 = tpu.matmul %248, %246, %cst_105 {dimension_numbers = #tpu.dot_dimension_numbers<[1], [0], [0], [1], [0, 0, 1, 1], [], []>} : vector<16x16xf32>, vector<16x32xf32>, vector<16x32xf32> -> vector<16x32xf32>
      %c0_106 = arith.constant 0 : index
      %c0_107 = arith.constant 0 : index
      %c0_108 = arith.constant 0 : index
      %250 = vector.load %arg16[%c0_106, %c0_107, %c0_108] : memref<1x32x32xf32, #tpu.memory_space<vmem>>, vector<1x32x32xf32>
      %251 = vector.shape_cast %250 : vector<1x32x32xf32> to vector<32x32xf32>
      %cst_109 = arith.constant dense<0.000000e+00> : vector<16x32xf32>
      %252 = tpu.matmul %249, %251, %cst_109 {dimension_numbers = #tpu.dot_dimension_numbers<[1], [0], [0], [1], [0, 0, 1, 1], [], []>} : vector<16x32xf32>, vector<32x32xf32>, vector<16x32xf32> -> vector<16x32xf32>
      %c0_110 = arith.constant 0 : index
      %c0_111 = arith.constant 0 : index
      %c0_112 = arith.constant 0 : index
      %253 = vector.load %arg17[%c0_110, %c0_111, %c0_112] : memref<1x1x32xf32, #tpu.memory_space<vmem>>, vector<1x1x32xf32>
      %254 = vector.shape_cast %253 : vector<1x1x32xf32> to vector<1x32xf32>
      %255 = vector.broadcast %254 : vector<1x32xf32> to vector<16x32xf32>
      %256 = arith.addf %252, %255 : vector<16x32xf32>
      %257 = arith.mulf %256, %256 : vector<16x32xf32>
      %258 = arith.mulf %256, %257 : vector<16x32xf32>
      %cst_113 = arith.constant 4.471500e-02 : f32
      %259 = vector.broadcast %cst_113 : f32 to vector<16x32xf32>
      %260 = arith.mulf %259, %258 : vector<16x32xf32>
      %261 = arith.addf %256, %260 : vector<16x32xf32>
      %cst_114 = arith.constant 0.797884583 : f32
      %262 = vector.broadcast %cst_114 : f32 to vector<16x32xf32>
      %263 = arith.mulf %262, %261 : vector<16x32xf32>
      %264 = math.tanh %263 : vector<16x32xf32>
      %cst_115 = arith.constant 1.000000e+00 : f32
      %265 = vector.broadcast %cst_115 : f32 to vector<16x32xf32>
      %266 = arith.addf %265, %264 : vector<16x32xf32>
      %cst_116 = arith.constant 5.000000e-01 : f32
      %267 = vector.broadcast %cst_116 : f32 to vector<16x32xf32>
      %268 = arith.mulf %267, %266 : vector<16x32xf32>
      %269 = arith.mulf %256, %268 : vector<16x32xf32>
      %270 = arith.addf %222, %269 : vector<16x32xf32>
      %c0_117 = arith.constant 0 : index
      %c0_118 = arith.constant 0 : index
      %271 = vector.load %arg23[%c0_117, %c0_118] : memref<16x32xf32, #tpu.memory_space<vmem>>, vector<16x32xf32>
      tpu.vector_store %arg23[%c0_117, %c0_118], %270 {strides = array<i32>} : memref<16x32xf32, #tpu.memory_space<vmem>>, vector<16x32xf32>,
    } else {
    }
    %c0_67 = arith.constant 0 : index
    %c0_68 = arith.constant 0 : index
    %165 = vector.load %arg23[%c0_67, %c0_68] : memref<16x32xf32, #tpu.memory_space<vmem>>, vector<16x32xf32>
    %166 = vector.extract_strided_slice %5 {offsets = [3, 0], sizes = [1, 32], strides = [1, 1]} : vector<4x32xf32> to vector<1x32xf32>
    %167 = vector.extract_strided_slice %7 {offsets = [3, 0], sizes = [1, 32], strides = [1, 1]} : vector<4x32xf32> to vector<1x32xf32>
    %cst_69 = arith.constant dense<0.000000e+00> : vector<16xf32>
    %168 = vector.multi_reduction <add>, %165, %cst_69 [1] : vector<16x32xf32> to vector<16xf32>
    %169 = vector.shape_cast %168 : vector<16xf32> to vector<16x1xf32>
    %cst_70 = arith.constant 3.200000e+01 : f32
    %170 = vector.broadcast %cst_70 : f32 to vector<16x1xf32>
    %171 = arith.divf %169, %170 : vector<16x1xf32>
    %172 = vector.broadcast %171 : vector<16x1xf32> to vector<16x32xf32>
    %173 = arith.subf %165, %172 : vector<16x32xf32>
    %174 = arith.mulf %173, %173 : vector<16x32xf32>
    %cst_71 = arith.constant dense<0.000000e+00> : vector<16xf32>
    %175 = vector.multi_reduction <add>, %174, %cst_71 [1] : vector<16x32xf32> to vector<16xf32>
    %176 = vector.shape_cast %175 : vector<16xf32> to vector<16x1xf32>
    %cst_72 = arith.constant 3.200000e+01 : f32
    %177 = vector.broadcast %cst_72 : f32 to vector<16x1xf32>
    %178 = arith.divf %176, %177 : vector<16x1xf32>
    %179 = vector.broadcast %171 : vector<16x1xf32> to vector<16x32xf32>
    %180 = arith.subf %165, %179 : vector<16x32xf32>
    %cst_73 = arith.constant 9.99999974E-6 : f32
    %181 = vector.broadcast %cst_73 : f32 to vector<16x1xf32>
    %182 = arith.addf %178, %181 : vector<16x1xf32>
    %183 = math.rsqrt %182 : vector<16x1xf32>
    %184 = vector.broadcast %183 : vector<16x1xf32> to vector<16x32xf32>
    %185 = arith.mulf %180, %184 : vector<16x32xf32>
    %186 = vector.broadcast %166 : vector<1x32xf32> to vector<16x32xf32>
    %187 = arith.mulf %185, %186 : vector<16x32xf32>
    %188 = vector.broadcast %167 : vector<1x32xf32> to vector<16x32xf32>
    %189 = arith.addf %187, %188 : vector<16x32xf32>
    %c0_74 = arith.constant 0 : index
    %c0_75 = arith.constant 0 : index
    %c0_76 = arith.constant 0 : index
    %190 = vector.load %arg18[%c0_74, %c0_75, %c0_76] : memref<1x32x128xf32, #tpu.memory_space<vmem>>, vector<1x32x128xf32>
    %191 = vector.shape_cast %190 : vector<1x32x128xf32> to vector<32x128xf32>
    %cst_77 = arith.constant dense<0.000000e+00> : vector<16x128xf32>
    %192 = tpu.matmul %189, %191, %cst_77 {dimension_numbers = #tpu.dot_dimension_numbers<[1], [0], [0], [1], [0, 0, 1, 1], [], []>} : vector<16x32xf32>, vector<32x128xf32>, vector<16x128xf32> -> vector<16x128xf32>
    %c0_78 = arith.constant 0 : index
    %c0_79 = arith.constant 0 : index
    %c0_80 = arith.constant 0 : index
    %193 = vector.load %arg19[%c0_78, %c0_79, %c0_80] : memref<1x1x128xf32, #tpu.memory_space<vmem>>, vector<1x1x128xf32>
    %194 = vector.shape_cast %193 : vector<1x1x128xf32> to vector<1x128xf32>
    %195 = vector.broadcast %194 : vector<1x128xf32> to vector<16x128xf32>
    %196 = arith.addf %192, %195 : vector<16x128xf32>
    %197 = arith.mulf %196, %196 : vector<16x128xf32>
    %198 = arith.mulf %196, %197 : vector<16x128xf32>
    %cst_81 = arith.constant 4.471500e-02 : f32
    %199 = vector.broadcast %cst_81 : f32 to vector<16x128xf32>
    %200 = arith.mulf %199, %198 : vector<16x128xf32>
    %201 = arith.addf %196, %200 : vector<16x128xf32>
    %cst_82 = arith.constant 0.797884583 : f32
    %202 = vector.broadcast %cst_82 : f32 to vector<16x128xf32>
    %203 = arith.mulf %202, %201 : vector<16x128xf32>
    %204 = math.tanh %203 : vector<16x128xf32>
    %cst_83 = arith.constant 1.000000e+00 : f32
    %205 = vector.broadcast %cst_83 : f32 to vector<16x128xf32>
    %206 = arith.addf %205, %204 : vector<16x128xf32>
    %cst_84 = arith.constant 5.000000e-01 : f32
    %207 = vector.broadcast %cst_84 : f32 to vector<16x128xf32>
    %208 = arith.mulf %207, %206 : vector<16x128xf32>
    %209 = arith.mulf %196, %208 : vector<16x128xf32>
    %c0_85 = arith.constant 0 : index
    %c0_86 = arith.constant 0 : index
    %c0_87 = arith.constant 0 : index
    %210 = vector.load %arg20[%c0_85, %c0_86, %c0_87] : memref<1x128x32xf32, #tpu.memory_space<vmem>>, vector<1x128x32xf32>
    %211 = vector.shape_cast %210 : vector<1x128x32xf32> to vector<128x32xf32>
    %cst_88 = arith.constant dense<0.000000e+00> : vector<16x32xf32>
    %212 = tpu.matmul %209, %211, %cst_88 {dimension_numbers = #tpu.dot_dimension_numbers<[1], [0], [0], [1], [0, 0, 1, 1], [], []>} : vector<16x128xf32>, vector<128x32xf32>, vector<16x32xf32> -> vector<16x32xf32>
    %c0_89 = arith.constant 0 : index
    %c0_90 = arith.constant 0 : index
    %c0_91 = arith.constant 0 : index
    %213 = vector.load %arg21[%c0_89, %c0_90, %c0_91] : memref<1x1x32xf32, #tpu.memory_space<vmem>>, vector<1x1x32xf32>
    %214 = vector.shape_cast %213 : vector<1x1x32xf32> to vector<1x32xf32>
    %215 = vector.broadcast %214 : vector<1x32xf32> to vector<16x32xf32>
    %216 = arith.addf %212, %215 : vector<16x32xf32>
    %217 = arith.addf %165, %216 : vector<16x32xf32>
    %c0_92 = arith.constant 0 : index
    %c0_93 = arith.constant 0 : index
    %218 = vector.load %arg23[%c0_92, %c0_93] : memref<16x32xf32, #tpu.memory_space<vmem>>, vector<16x32xf32>
    tpu.vector_store %arg23[%c0_92, %c0_93], %217 {strides = array<i32>} : memref<16x32xf32, #tpu.memory_space<vmem>>, vector<16x32xf32>,
    %c5_i32 = arith.constant 5 : i32
    %219 = arith.cmpi eq, %arg1, %c5_i32 : i32
    %220 = arith.extui %219 : i1 to i32
    %c0_i32_94 = arith.constant 0 : i32
    %221 = arith.cmpi ne, %220, %c0_i32_94 : i32
    scf.if %221 {
      %c0_95 = arith.constant 0 : index
      %c0_96 = arith.constant 0 : index
      %222 = vector.load %arg23[%c0_95, %c0_96] : memref<16x32xf32, #tpu.memory_space<vmem>>, vector<16x32xf32>
      %c0_97 = arith.constant 0 : index
      %c0_98 = arith.constant 0 : index
      %c0_99 = arith.constant 0 : index
      %223 = vector.load %arg22[%c0_97, %c0_98, %c0_99] : memref<1x16x32xf32, #tpu.memory_space<vmem>>, vector<1x16x32xf32>
      %224 = vector.shape_cast %223 : vector<1x16x32xf32> to vector<16x32xf32>
      %225 = vector.shape_cast %222 : vector<16x32xf32> to vector<1x16x32xf32>
      tpu.vector_store %arg22[%c0_97, %c0_98, %c0_99], %225 {strides = array<i32>} : memref<1x16x32xf32, #tpu.memory_space<vmem>>, vector<1x16x32xf32>,
    } else {
    }
    return
  }
  func.func @transform_0(%arg0: i32, %arg1: i32) -> (i32, i32, i32) {
    %c0_i32 = arith.constant 0 : i32
    %c0_i32_0 = arith.constant 0 : i32
    %c0_i32_1 = arith.constant 0 : i32
    return %arg0, %c0_i32, %c0_i32_0 : i32, i32, i32
  }
  func.func @transform_1(%arg0: i32, %arg1: i32) -> (i32, i32, i32) {
    %c0_i32 = arith.constant 0 : i32
    %c0_i32_0 = arith.constant 0 : i32
    %c0_i32_1 = arith.constant 0 : i32
    return %arg0, %c0_i32, %c0_i32_0 : i32, i32, i32
  }
  func.func @transform_2(%arg0: i32, %arg1: i32) -> (i32, i32, i32) {
    %c0_i32 = arith.constant 0 : i32
    %c0_i32_0 = arith.constant 0 : i32
    %c0_i32_1 = arith.constant 0 : i32
    return %arg0, %c0_i32, %c0_i32_0 : i32, i32, i32
  }
  func.func @transform_3(%arg0: i32, %arg1: i32) -> (i32, i32, i32) {
    %c0_i32 = arith.constant 0 : i32
    %c0_i32_0 = arith.constant 0 : i32
    %c0_i32_1 = arith.constant 0 : i32
    return %arg0, %c0_i32, %c0_i32_0 : i32, i32, i32
  }
  func.func @transform_4(%arg0: i32, %arg1: i32) -> (i32, i32) {
    %c0_i32 = arith.constant 0 : i32
    %c0_i32_0 = arith.constant 0 : i32
    %c0_i32_1 = arith.constant 0 : i32
    return %c0_i32, %c0_i32_0 : i32, i32
  }
  func.func @transform_5(%arg0: i32, %arg1: i32) -> (i32, i32) {
    %c0_i32 = arith.constant 0 : i32
    %c0_i32_0 = arith.constant 0 : i32
    %c0_i32_1 = arith.constant 0 : i32
    return %c0_i32, %c0_i32_0 : i32, i32
  }
  func.func @transform_6(%arg0: i32, %arg1: i32) -> (i32, i32, i32) {
    %c0_i32 = arith.constant 0 : i32
    %c0_i32_0 = arith.constant 0 : i32
    %c0_i32_1 = arith.constant 0 : i32
    return %arg1, %c0_i32, %c0_i32_0 : i32, i32, i32
  }
  func.func @transform_7(%arg0: i32, %arg1: i32) -> (i32, i32, i32) {
    %c0_i32 = arith.constant 0 : i32
    %c0_i32_0 = arith.constant 0 : i32
    %c0_i32_1 = arith.constant 0 : i32
    return %arg1, %c0_i32, %c0_i32_0 : i32, i32, i32
  }
  func.func @transform_8(%arg0: i32, %arg1: i32) -> (i32, i32, i32) {
    %c0_i32 = arith.constant 0 : i32
    %c0_i32_0 = arith.constant 0 : i32
    %c0_i32_1 = arith.constant 0 : i32
    return %arg1, %c0_i32, %c0_i32_0 : i32, i32, i32
  }
  func.func @transform_9(%arg0: i32, %arg1: i32) -> (i32, i32, i32) {
    %c0_i32 = arith.constant 0 : i32
    %c0_i32_0 = arith.constant 0 : i32
    %c0_i32_1 = arith.constant 0 : i32
    return %arg1, %c0_i32, %c0_i32_0 : i32, i32, i32
  }
  func.func @transform_10(%arg0: i32, %arg1: i32) -> (i32, i32, i32) {
    %c0_i32 = arith.constant 0 : i32
    %c0_i32_0 = arith.constant 0 : i32
    %c0_i32_1 = arith.constant 0 : i32
    return %arg1, %c0_i32, %c0_i32_0 : i32, i32, i32
  }
  func.func @transform_11(%arg0: i32, %arg1: i32) -> (i32, i32, i32) {
    %c0_i32 = arith.constant 0 : i32
    %c0_i32_0 = arith.constant 0 : i32
    %c0_i32_1 = arith.constant 0 : i32
    return %arg1, %c0_i32, %c0_i32_0 : i32, i32, i32
  }
  func.func @transform_12(%arg0: i32, %arg1: i32) -> (i32, i32, i32) {
    %c0_i32 = arith.constant 0 : i32
    %c0_i32_0 = arith.constant 0 : i32
    %c0_i32_1 = arith.constant 0 : i32
    return %arg1, %c0_i32, %c0_i32_0 : i32, i32, i32
  }
  func.func @transform_13(%arg0: i32, %arg1: i32) -> (i32, i32, i32) {
    %c0_i32 = arith.constant 0 : i32
    %c0_i32_0 = arith.constant 0 : i32
    %c0_i32_1 = arith.constant 0 : i32
    return %arg1, %c0_i32, %c0_i32_0 : i32, i32, i32
  }
  func.func @transform_14(%arg0: i32, %arg1: i32) -> (i32, i32, i32) {
    %c0_i32 = arith.constant 0 : i32
    %c0_i32_0 = arith.constant 0 : i32
    %c0_i32_1 = arith.constant 0 : i32
    return %arg1, %c0_i32, %c0_i32_0 : i32, i32, i32
  }
  func.func @transform_15(%arg0: i32, %arg1: i32) -> (i32, i32, i32) {
    %c0_i32 = arith.constant 0 : i32
    %c0_i32_0 = arith.constant 0 : i32
    %c0_i32_1 = arith.constant 0 : i32
    return %arg1, %c0_i32, %c0_i32_0 : i32, i32, i32
  }
  func.func @transform_16(%arg0: i32, %arg1: i32) -> (i32, i32, i32) {
    %c0_i32 = arith.constant 0 : i32
    %c0_i32_0 = arith.constant 0 : i32
    %c0_i32_1 = arith.constant 0 : i32
    return %arg1, %c0_i32, %c0_i32_0 : i32, i32, i32
  }
  func.func @transform_17(%arg0: i32, %arg1: i32) -> (i32, i32, i32) {
    %c0_i32 = arith.constant 0 : i32
    %c0_i32_0 = arith.constant 0 : i32
    %c0_i32_1 = arith.constant 0 : i32
    return %arg1, %c0_i32, %c0_i32_0 : i32, i32, i32
  }
  func.func @transform_18(%arg0: i32, %arg1: i32) -> (i32, i32, i32) {
    %c0_i32 = arith.constant 0 : i32
    %c0_i32_0 = arith.constant 0 : i32
    %c0_i32_1 = arith.constant 0 : i32
    return %arg1, %c0_i32, %c0_i32_0 : i32, i32, i32
  }
  func.func @transform_19(%arg0: i32, %arg1: i32) -> (i32, i32, i32) {
    %c0_i32 = arith.constant 0 : i32
    %c0_i32_0 = arith.constant 0 : i32
    %c0_i32_1 = arith.constant 0 : i32
    return %arg1, %c0_i32, %c0_i32_0 : i32, i32, i32
  }
  func.func @transform_20(%arg0: i32, %arg1: i32) -> (i32, i32, i32) {
    %c0_i32 = arith.constant 0 : i32
    %c0_i32_0 = arith.constant 0 : i32
    %c0_i32_1 = arith.constant 0 : i32
    return %arg0, %c0_i32, %c0_i32_0 : i32, i32, i32
  }
}

</mosaic_0001>

<llo_original>
// kernel: tree_att_encoder.1
$region0: #{tree_att_encoder.1}
  #allocation0 [shape = 'u32[]', space=smem, size = 0x4, offset = 0x4, fixed_abs, tag = 'smem constant byte address 0x4 - core index']
  #allocation1 [shape = 'u32[72,128]{1,0:T(1,128)}', space=vmem, size = 0x9000, scoped, tag = 'internal scratch']
  #allocation2 [shape = 'f32[16,32]{1,0:T(8,128)}', space=vmem, size = 0x2000, scoped, tag = 'scratch operand']
  #allocation3 [shape = 'f32[16,32]{1,0:T(8,128)}', space=vmem, size = 0x2000, scoped, tag = 'scratch operand']
  %s0 = inlined_call_operand.vmem [shape: f32[2,16,32], index: 0, kind: input, shape index: {}]
  %s1 = inlined_call_operand.vmem [shape: f32[2,1,16], index: 1, kind: input, shape index: {}]
  %s2 = inlined_call_operand.vmem [shape: f32[2,16,256], index: 2, kind: input, shape index: {}]
  %s3 = inlined_call_operand.vmem [shape: f32[2,16,16], index: 3, kind: input, shape index: {}]
  %s4 = inlined_call_operand.vmem [shape: f32[256,32], index: 4, kind: input, shape index: {}]
  %s5 = inlined_call_operand.vmem [shape: f32[1,32], index: 5, kind: input, shape index: {}]
  %s6 = inlined_call_operand.vmem [shape: f32[6,4,32], index: 6, kind: input, shape index: {}]
  %s7 = inlined_call_operand.vmem [shape: f32[6,4,32], index: 7, kind: input, shape index: {}]
  %s8 = inlined_call_operand.vmem [shape: f32[6,32,96], index: 8, kind: input, shape index: {}]
  %s9 = inlined_call_operand.vmem [shape: f32[6,1,96], index: 9, kind: input, shape index: {}]
  %s10 = inlined_call_operand.vmem [shape: f32[6,32,32], index: 10, kind: input, shape index: {}]
  %s11 = inlined_call_operand.vmem [shape: f32[6,1,32], index: 11, kind: input, shape index: {}]
  %s12 = inlined_call_operand.vmem [shape: f32[6,64,32], index: 12, kind: input, shape index: {}]
  %s13 = inlined_call_operand.vmem [shape: f32[6,1,32], index: 13, kind: input, shape index: {}]
  %s14 = inlined_call_operand.vmem [shape: f32[6,32,32], index: 14, kind: input, shape index: {}]
  %s15 = inlined_call_operand.vmem [shape: f32[6,1,32], index: 15, kind: input, shape index: {}]
  %s16 = inlined_call_operand.vmem [shape: f32[6,32,128], index: 16, kind: input, shape index: {}]
  %s17 = inlined_call_operand.vmem [shape: f32[6,1,128], index: 17, kind: input, shape index: {}]
  %s18 = inlined_call_operand.vmem [shape: f32[6,128,32], index: 18, kind: input, shape index: {}]
  %s19 = inlined_call_operand.vmem [shape: f32[6,1,32], index: 19, kind: input, shape index: {}]
  %s20 = inlined_call_operand.hbm [shape: f32[2,16,32], index: 20, kind: output, shape index: {}]
  %s21 = sld [smem:[#allocation0]]
  $region125: #{tree_att_encoder.1} parent=0
    _
  %s23 = ssub.s32 1, %s21
  %s24 = scalar_select 0, %s23, %s21
  $region1: #{tree_att_encoder.1} parent=0
    #allocation4 [shape = 'u8[16384]{0}', space=vmem, size = 0x4000, scoped, tag = 'output window, operand 0']
    #allocation5 [shape = 's32[2]{0}', space=sflag, size = 0x8, scoped, tag = 'scoped memory for tree_att_encoder.1']
    %25 = vsyncpa [#allocation5], 0
    %s26 = scalar_lea.sflag [#allocation5], 1
    %27 = vsyncpa %s26, 0
    loop: start=0, step=1, limit=14
    $region2: #{tree_att_encoder.1} parent=1 // loop_pre_header
      _
    $region3: #{tree_att_encoder.1} parent=1 // loop_header
      %s29 = sphi 0, %s33
      %p30 = scmp.ge.s32.totalorder %s29, 14
      %s36 = sphi 0, %s48
      %s37 = sphi 0, %s44
      %s38 = sphi 0, %s36
      %s39 = sphi 0, %s37
      %s40 = sphi 0, %s38
      %s41 = sphi 0, %s39
      %s51 = sphi 0, %s53
      %s54 = sphi 0, %s51
      %s55 = sphi 0, %s54
      %s71 = sphi 0, %s55
      %s77 = sphi 0, %s79
      %s80 = sphi 0, %s77
      %s81 = sphi 0, %s80
      %s97 = sphi 0, %s81
      %s103 = sphi 0, %s105
      %s106 = sphi 0, %s103
      %s107 = sphi 0, %s106
      %s123 = sphi 0, %s107
      %s129 = sphi 0, %s131
      %s132 = sphi 0, %s129
      %s133 = sphi 0, %s132
      %s149 = sphi 0, %s133
      %s153 = sphi 0, %s153
      %s155 = sphi 0, %s153
      %s156 = sphi 0, %s155
      %s170 = sphi 0, %s156
      %s174 = sphi 0, %s174
      %s176 = sphi 0, %s174
      %s177 = sphi 0, %s176
      %s191 = sphi 0, %s177
      %s197 = sphi 0, %s199
      %s200 = sphi 0, %s197
      %s201 = sphi 0, %s200
      %s217 = sphi 0, %s201
      %s223 = sphi 0, %s225
      %s226 = sphi 0, %s223
      %s227 = sphi 0, %s226
      %s243 = sphi 0, %s227
      %s249 = sphi 0, %s251
      %s252 = sphi 0, %s249
      %s253 = sphi 0, %s252
      %s269 = sphi 0, %s253
      %s275 = sphi 0, %s277
      %s278 = sphi 0, %s275
      %s279 = sphi 0, %s278
      %s295 = sphi 0, %s279
      %s301 = sphi 0, %s303
      %s304 = sphi 0, %s301
      %s305 = sphi 0, %s304
      %s321 = sphi 0, %s305
      %s327 = sphi 0, %s329
      %s330 = sphi 0, %s327
      %s331 = sphi 0, %s330
      %s347 = sphi 0, %s331
      %s353 = sphi 0, %s355
      %s356 = sphi 0, %s353
      %s357 = sphi 0, %s356
      %s373 = sphi 0, %s357
      %s379 = sphi 0, %s381
      %s382 = sphi 0, %s379
      %s383 = sphi 0, %s382
      %s399 = sphi 0, %s383
      %s405 = sphi 0, %s407
      %s408 = sphi 0, %s405
      %s409 = sphi 0, %s408
      %s425 = sphi 0, %s409
      %s431 = sphi 0, %s433
      %s434 = sphi 0, %s431
      %s435 = sphi 0, %s434
      %s451 = sphi 0, %s435
      %s457 = sphi 0, %s459
      %s460 = sphi 0, %s457
      %s461 = sphi 0, %s460
      %s477 = sphi 0, %s461
      %s483 = sphi 0, %s485
      %s486 = sphi 0, %s483
      %s487 = sphi 0, %s486
      %s503 = sphi 0, %s487
      %s509 = sphi 0, %s511
      %s512 = sphi 0, %s509
      %s513 = sphi 0, %s512
      %s529 = sphi 0, %s513
      %s535 = sphi 0, %s537
      %s538 = sphi 0, %s535
      %s539 = sphi 0, %s538
      %s555 = sphi 0, %s539
      %s561 = sphi 0, %s563
      %s564 = sphi 0, %s561
      %s565 = sphi 0, %s564
      %s581 = sphi 0, %s565
    $region4: #{tree_att_encoder.1} parent=1 // loop_header_branch
      %32 = sbr.rel (%p30) target = $region8
    $region5: #{tree_att_encoder.1} parent=1 // loop_body
      %s34 = ssub.s32 %s29, 1
      %s35 = ssub.s32 %s29, 2
      %s42 = sadd.s32 1, %s37
      %p43 = scmp.ge.s32.totalorder %s42, 6
      %s44 = scalar_select %p43, 0, %s42
      %s45 = sadd.s32 1, %s36
      %s46 = scalar_select %p43, %s45, %s36
      %p47 = scmp.ge.s32.totalorder %s46, 2
      %s48 = scalar_select %p47, 0, %s46
      %s49 = ssub.s32 %s36, %s48
      %p50 = scmp.eq.s32.totalorder %s49, 0
      %s52 = sadd.s32 %s51, 1
      %s53 = scalar_select %p50, %s51, %s52
      %p56 = pneg %p50
      %p57 = scmp.eq.s32.totalorder %s29, 11
      %p58 = por %p56, %p57
      %p59 = scmp.ne.s32.totalorder %s51, %s54
      %p60 = scmp.eq.s32.totalorder %s29, 0
      %p61 = por %p59, %p60
      %p62 = scmp.ne.s32.totalorder %s51, %s54
      %p63 = scmp.eq.s32.totalorder %s34, 11
      %p64 = por %p62, %p63
      %p65 = scmp.ne.s32.totalorder %s54, %s55
      %p66 = scmp.eq.s32.totalorder %s34, 0
      %p67 = por %p65, %p66
      %p68 = scmp.ne.s32.totalorder %s54, %s55
      %p69 = scmp.eq.s32.totalorder %s35, 11
      %p70 = por %p68, %p69
      %p72 = scmp.ne.s32.totalorder %s55, %s71
      %p73 = scmp.eq.s32.totalorder %s35, 0
      %p74 = por %p72, %p73
      %s75 = ssub.s32 %s36, %s48
      %p76 = scmp.eq.s32.totalorder %s75, 0
      %s78 = sadd.s32 %s77, 1
      %s79 = scalar_select %p76, %s77, %s78
      %p82 = pneg %p76
      %p83 = scmp.eq.s32.totalorder %s29, 11
      %p84 = por %p82, %p83
      %p85 = scmp.ne.s32.totalorder %s77, %s80
      %p86 = scmp.eq.s32.totalorder %s29, 0
      %p87 = por %p85, %p86
      %p88 = scmp.ne.s32.totalorder %s77, %s80
      %p89 = scmp.eq.s32.totalorder %s34, 11
      %p90 = por %p88, %p89
      %p91 = scmp.ne.s32.totalorder %s80, %s81
      %p92 = scmp.eq.s32.totalorder %s34, 0
      %p93 = por %p91, %p92
      %p94 = scmp.ne.s32.totalorder %s80, %s81
      %p95 = scmp.eq.s32.totalorder %s35, 11
      %p96 = por %p94, %p95
      %p98 = scmp.ne.s32.totalorder %s81, %s97
      %p99 = scmp.eq.s32.totalorder %s35, 0
      %p100 = por %p98, %p99
      %s101 = ssub.s32 %s36, %s48
      %p102 = scmp.eq.s32.totalorder %s101, 0
      %s104 = sadd.s32 %s103, 1
      %s105 = scalar_select %p102, %s103, %s104
      %p108 = pneg %p102
      %p109 = scmp.eq.s32.totalorder %s29, 11
      %p110 = por %p108, %p109
      %p111 = scmp.ne.s32.totalorder %s103, %s106
      %p112 = scmp.eq.s32.totalorder %s29, 0
      %p113 = por %p111, %p112
      %p114 = scmp.ne.s32.totalorder %s103, %s106
      %p115 = scmp.eq.s32.totalorder %s34, 11
      %p116 = por %p114, %p115
      %p117 = scmp.ne.s32.totalorder %s106, %s107
      %p118 = scmp.eq.s32.totalorder %s34, 0
      %p119 = por %p117, %p118
      %p120 = scmp.ne.s32.totalorder %s106, %s107
      %p121 = scmp.eq.s32.totalorder %s35, 11
      %p122 = por %p120, %p121
      %p124 = scmp.ne.s32.totalorder %s107, %s123
      %p125 = scmp.eq.s32.totalorder %s35, 0
      %p126 = por %p124, %p125
      %s127 = ssub.s32 %s36, %s48
      %p128 = scmp.eq.s32.totalorder %s127, 0
      %s130 = sadd.s32 %s129, 1
      %s131 = scalar_select %p128, %s129, %s130
      %p134 = pneg %p128
      %p135 = scmp.eq.s32.totalorder %s29, 11
      %p136 = por %p134, %p135
      %p137 = scmp.ne.s32.totalorder %s129, %s132
      %p138 = scmp.eq.s32.totalorder %s29, 0
      %p139 = por %p137, %p138
      %p140 = scmp.ne.s32.totalorder %s129, %s132
      %p141 = scmp.eq.s32.totalorder %s34, 11
      %p142 = por %p140, %p141
      %p143 = scmp.ne.s32.totalorder %s132, %s133
      %p144 = scmp.eq.s32.totalorder %s34, 0
      %p145 = por %p143, %p144
      %p146 = scmp.ne.s32.totalorder %s132, %s133
      %p147 = scmp.eq.s32.totalorder %s35, 11
      %p148 = por %p146, %p147
      %p150 = scmp.ne.s32.totalorder %s133, %s149
      %p151 = scmp.eq.s32.totalorder %s35, 0
      %p152 = por %p150, %p151
      %s154 = sadd.s32 %s153, 1
      %p157 = scmp.eq.s32.totalorder %s29, 11
      %p158 = scmp.ne.s32.totalorder %s153, %s155
      %p159 = scmp.eq.s32.totalorder %s29, 0
      %p160 = por %p158, %p159
      %p161 = scmp.ne.s32.totalorder %s153, %s155
      %p162 = scmp.eq.s32.totalorder %s34, 11
      %p163 = por %p161, %p162
      %p164 = scmp.ne.s32.totalorder %s155, %s156
      %p165 = scmp.eq.s32.totalorder %s34, 0
      %p166 = por %p164, %p165
      %p167 = scmp.ne.s32.totalorder %s155, %s156
      %p168 = scmp.eq.s32.totalorder %s35, 11
      %p169 = por %p167, %p168
      %p171 = scmp.ne.s32.totalorder %s156, %s170
      %p172 = scmp.eq.s32.totalorder %s35, 0
      %p173 = por %p171, %p172
      %s175 = sadd.s32 %s174, 1
      %p178 = scmp.eq.s32.totalorder %s29, 11
      %p179 = scmp.ne.s32.totalorder %s174, %s176
      %p180 = scmp.eq.s32.totalorder %s29, 0
      %p181 = por %p179, %p180
      %p182 = scmp.ne.s32.totalorder %s174, %s176
      %p183 = scmp.eq.s32.totalorder %s34, 11
      %p184 = por %p182, %p183
      %p185 = scmp.ne.s32.totalorder %s176, %s177
      %p186 = scmp.eq.s32.totalorder %s34, 0
      %p187 = por %p185, %p186
      %p188 = scmp.ne.s32.totalorder %s176, %s177
      %p189 = scmp.eq.s32.totalorder %s35, 11
      %p190 = por %p188, %p189
      %p192 = scmp.ne.s32.totalorder %s177, %s191
      %p193 = scmp.eq.s32.totalorder %s35, 0
      %p194 = por %p192, %p193
      %s195 = ssub.s32 %s37, %s44
      %p196 = scmp.eq.s32.totalorder %s195, 0
      %s198 = sadd.s32 %s197, 1
      %s199 = scalar_select %p196, %s197, %s198
      %p202 = pneg %p196
      %p203 = scmp.eq.s32.totalorder %s29, 11
      %p204 = por %p202, %p203
      %p205 = scmp.ne.s32.totalorder %s197, %s200
      %p206 = scmp.eq.s32.totalorder %s29, 0
      %p207 = por %p205, %p206
      %p208 = scmp.ne.s32.totalorder %s197, %s200
      %p209 = scmp.eq.s32.totalorder %s34, 11
      %p210 = por %p208, %p209
      %p211 = scmp.ne.s32.totalorder %s200, %s201
      %p212 = scmp.eq.s32.totalorder %s34, 0
      %p213 = por %p211, %p212
      %p214 = scmp.ne.s32.totalorder %s200, %s201
      %p215 = scmp.eq.s32.totalorder %s35, 11
      %p216 = por %p214, %p215
      %p218 = scmp.ne.s32.totalorder %s201, %s217
      %p219 = scmp.eq.s32.totalorder %s35, 0
      %p220 = por %p218, %p219
      %s221 = ssub.s32 %s37, %s44
      %p222 = scmp.eq.s32.totalorder %s221, 0
      %s224 = sadd.s32 %s223, 1
      %s225 = scalar_select %p222, %s223, %s224
      %p228 = pneg %p222
      %p229 = scmp.eq.s32.totalorder %s29, 11
      %p230 = por %p228, %p229
      %p231 = scmp.ne.s32.totalorder %s223, %s226
      %p232 = scmp.eq.s32.totalorder %s29, 0
      %p233 = por %p231, %p232
      %p234 = scmp.ne.s32.totalorder %s223, %s226
      %p235 = scmp.eq.s32.totalorder %s34, 11
      %p236 = por %p234, %p235
      %p237 = scmp.ne.s32.totalorder %s226, %s227
      %p238 = scmp.eq.s32.totalorder %s34, 0
      %p239 = por %p237, %p238
      %p240 = scmp.ne.s32.totalorder %s226, %s227
      %p241 = scmp.eq.s32.totalorder %s35, 11
      %p242 = por %p240, %p241
      %p244 = scmp.ne.s32.totalorder %s227, %s243
      %p245 = scmp.eq.s32.totalorder %s35, 0
      %p246 = por %p244, %p245
      %s247 = ssub.s32 %s37, %s44
      %p248 = scmp.eq.s32.totalorder %s247, 0
      %s250 = sadd.s32 %s249, 1
      %s251 = scalar_select %p248, %s249, %s250
      %p254 = pneg %p248
      %p255 = scmp.eq.s32.totalorder %s29, 11
      %p256 = por %p254, %p255
      %p257 = scmp.ne.s32.totalorder %s249, %s252
      %p258 = scmp.eq.s32.totalorder %s29, 0
      %p259 = por %p257, %p258
      %p260 = scmp.ne.s32.totalorder %s249, %s252
      %p261 = scmp.eq.s32.totalorder %s34, 11
      %p262 = por %p260, %p261
      %p263 = scmp.ne.s32.totalorder %s252, %s253
      %p264 = scmp.eq.s32.totalorder %s34, 0
      %p265 = por %p263, %p264
      %p266 = scmp.ne.s32.totalorder %s252, %s253
      %p267 = scmp.eq.s32.totalorder %s35, 11
      %p268 = por %p266, %p267
      %p270 = scmp.ne.s32.totalorder %s253, %s269
      %p271 = scmp.eq.s32.totalorder %s35, 0
      %p272 = por %p270, %p271
      %s273 = ssub.s32 %s37, %s44
      %p274 = scmp.eq.s32.totalorder %s273, 0
      %s276 = sadd.s32 %s275, 1
      %s277 = scalar_select %p274, %s275, %s276
      %p280 = pneg %p274
      %p281 = scmp.eq.s32.totalorder %s29, 11
      %p282 = por %p280, %p281
      %p283 = scmp.ne.s32.totalorder %s275, %s278
      %p284 = scmp.eq.s32.totalorder %s29, 0
      %p285 = por %p283, %p284
      %p286 = scmp.ne.s32.totalorder %s275, %s278
      %p287 = scmp.eq.s32.totalorder %s34, 11
      %p288 = por %p286, %p287
      %p289 = scmp.ne.s32.totalorder %s278, %s279
      %p290 = scmp.eq.s32.totalorder %s34, 0
      %p291 = por %p289, %p290
      %p292 = scmp.ne.s32.totalorder %s278, %s279
      %p293 = scmp.eq.s32.totalorder %s35, 11
      %p294 = por %p292, %p293
      %p296 = scmp.ne.s32.totalorder %s279, %s295
      %p297 = scmp.eq.s32.totalorder %s35, 0
      %p298 = por %p296, %p297
      %s299 = ssub.s32 %s37, %s44
      %p300 = scmp.eq.s32.totalorder %s299, 0
      %s302 = sadd.s32 %s301, 1
      %s303 = scalar_select %p300, %s301, %s302
      %p306 = pneg %p300
      %p307 = scmp.eq.s32.totalorder %s29, 11
      %p308 = por %p306, %p307
      %p309 = scmp.ne.s32.totalorder %s301, %s304
      %p310 = scmp.eq.s32.totalorder %s29, 0
      %p311 = por %p309, %p310
      %p312 = scmp.ne.s32.totalorder %s301, %s304
      %p313 = scmp.eq.s32.totalorder %s34, 11
      %p314 = por %p312, %p313
      %p315 = scmp.ne.s32.totalorder %s304, %s305
      %p316 = scmp.eq.s32.totalorder %s34, 0
      %p317 = por %p315, %p316
      %p318 = scmp.ne.s32.totalorder %s304, %s305
      %p319 = scmp.eq.s32.totalorder %s35, 11
      %p320 = por %p318, %p319
      %p322 = scmp.ne.s32.totalorder %s305, %s321
      %p323 = scmp.eq.s32.totalorder %s35, 0
      %p324 = por %p322, %p323
      %s325 = ssub.s32 %s37, %s44
      %p326 = scmp.eq.s32.totalorder %s325, 0
      %s328 = sadd.s32 %s327, 1
      %s329 = scalar_select %p326, %s327, %s328
      %p332 = pneg %p326
      %p333 = scmp.eq.s32.totalorder %s29, 11
      %p334 = por %p332, %p333
      %p335 = scmp.ne.s32.totalorder %s327, %s330
      %p336 = scmp.eq.s32.totalorder %s29, 0
      %p337 = por %p335, %p336
      %p338 = scmp.ne.s32.totalorder %s327, %s330
      %p339 = scmp.eq.s32.totalorder %s34, 11
      %p340 = por %p338, %p339
      %p341 = scmp.ne.s32.totalorder %s330, %s331
      %p342 = scmp.eq.s32.totalorder %s34, 0
      %p343 = por %p341, %p342
      %p344 = scmp.ne.s32.totalorder %s330, %s331
      %p345 = scmp.eq.s32.totalorder %s35, 11
      %p346 = por %p344, %p345
      %p348 = scmp.ne.s32.totalorder %s331, %s347
      %p349 = scmp.eq.s32.totalorder %s35, 0
      %p350 = por %p348, %p349
      %s351 = ssub.s32 %s37, %s44
      %p352 = scmp.eq.s32.totalorder %s351, 0
      %s354 = sadd.s32 %s353, 1
      %s355 = scalar_select %p352, %s353, %s354
      %p358 = pneg %p352
      %p359 = scmp.eq.s32.totalorder %s29, 11
      %p360 = por %p358, %p359
      %p361 = scmp.ne.s32.totalorder %s353, %s356
      %p362 = scmp.eq.s32.totalorder %s29, 0
      %p363 = por %p361, %p362
      %p364 = scmp.ne.s32.totalorder %s353, %s356
      %p365 = scmp.eq.s32.totalorder %s34, 11
      %p366 = por %p364, %p365
      %p367 = scmp.ne.s32.totalorder %s356, %s357
      %p368 = scmp.eq.s32.totalorder %s34, 0
      %p369 = por %p367, %p368
      %p370 = scmp.ne.s32.totalorder %s356, %s357
      %p371 = scmp.eq.s32.totalorder %s35, 11
      %p372 = por %p370, %p371
      %p374 = scmp.ne.s32.totalorder %s357, %s373
      %p375 = scmp.eq.s32.totalorder %s35, 0
      %p376 = por %p374, %p375
      %s377 = ssub.s32 %s37, %s44
      %p378 = scmp.eq.s32.totalorder %s377, 0
      %s380 = sadd.s32 %s379, 1
      %s381 = scalar_select %p378, %s379, %s380
      %p384 = pneg %p378
      %p385 = scmp.eq.s32.totalorder %s29, 11
      %p386 = por %p384, %p385
      %p387 = scmp.ne.s32.totalorder %s379, %s382
      %p388 = scmp.eq.s32.totalorder %s29, 0
      %p389 = por %p387, %p388
      %p390 = scmp.ne.s32.totalorder %s379, %s382
      %p391 = scmp.eq.s32.totalorder %s34, 11
      %p392 = por %p390, %p391
      %p393 = scmp.ne.s32.totalorder %s382, %s383
      %p394 = scmp.eq.s32.totalorder %s34, 0
      %p395 = por %p393, %p394
      %p396 = scmp.ne.s32.totalorder %s382, %s383
      %p397 = scmp.eq.s32.totalorder %s35, 11
      %p398 = por %p396, %p397
      %p400 = scmp.ne.s32.totalorder %s383, %s399
      %p401 = scmp.eq.s32.totalorder %s35, 0
      %p402 = por %p400, %p401
      %s403 = ssub.s32 %s37, %s44
      %p404 = scmp.eq.s32.totalorder %s403, 0
      %s406 = sadd.s32 %s405, 1
      %s407 = scalar_select %p404, %s405, %s406
      %p410 = pneg %p404
      %p411 = scmp.eq.s32.totalorder %s29, 11
      %p412 = por %p410, %p411
      %p413 = scmp.ne.s32.totalorder %s405, %s408
      %p414 = scmp.eq.s32.totalorder %s29, 0
      %p415 = por %p413, %p414
      %p416 = scmp.ne.s32.totalorder %s405, %s408
      %p417 = scmp.eq.s32.totalorder %s34, 11
      %p418 = por %p416, %p417
      %p419 = scmp.ne.s32.totalorder %s408, %s409
      %p420 = scmp.eq.s32.totalorder %s34, 0
      %p421 = por %p419, %p420
      %p422 = scmp.ne.s32.totalorder %s408, %s409
      %p423 = scmp.eq.s32.totalorder %s35, 11
      %p424 = por %p422, %p423
      %p426 = scmp.ne.s32.totalorder %s409, %s425
      %p427 = scmp.eq.s32.totalorder %s35, 0
      %p428 = por %p426, %p427
      %s429 = ssub.s32 %s37, %s44
      %p430 = scmp.eq.s32.totalorder %s429, 0
      %s432 = sadd.s32 %s431, 1
      %s433 = scalar_select %p430, %s431, %s432
      %p436 = pneg %p430
      %p437 = scmp.eq.s32.totalorder %s29, 11
      %p438 = por %p436, %p437
      %p439 = scmp.ne.s32.totalorder %s431, %s434
      %p440 = scmp.eq.s32.totalorder %s29, 0
      %p441 = por %p439, %p440
      %p442 = scmp.ne.s32.totalorder %s431, %s434
      %p443 = scmp.eq.s32.totalorder %s34, 11
      %p444 = por %p442, %p443
      %p445 = scmp.ne.s32.totalorder %s434, %s435
      %p446 = scmp.eq.s32.totalorder %s34, 0
      %p447 = por %p445, %p446
      %p448 = scmp.ne.s32.totalorder %s434, %s435
      %p449 = scmp.eq.s32.totalorder %s35, 11
      %p450 = por %p448, %p449
      %p452 = scmp.ne.s32.totalorder %s435, %s451
      %p453 = scmp.eq.s32.totalorder %s35, 0
      %p454 = por %p452, %p453
      %s455 = ssub.s32 %s37, %s44
      %p456 = scmp.eq.s32.totalorder %s455, 0
      %s458 = sadd.s32 %s457, 1
      %s459 = scalar_select %p456, %s457, %s458
      %p462 = pneg %p456
      %p463 = scmp.eq.s32.totalorder %s29, 11
      %p464 = por %p462, %p463
      %p465 = scmp.ne.s32.totalorder %s457, %s460
      %p466 = scmp.eq.s32.totalorder %s29, 0
      %p467 = por %p465, %p466
      %p468 = scmp.ne.s32.totalorder %s457, %s460
      %p469 = scmp.eq.s32.totalorder %s34, 11
      %p470 = por %p468, %p469
      %p471 = scmp.ne.s32.totalorder %s460, %s461
      %p472 = scmp.eq.s32.totalorder %s34, 0
      %p473 = por %p471, %p472
      %p474 = scmp.ne.s32.totalorder %s460, %s461
      %p475 = scmp.eq.s32.totalorder %s35, 11
      %p476 = por %p474, %p475
      %p478 = scmp.ne.s32.totalorder %s461, %s477
      %p479 = scmp.eq.s32.totalorder %s35, 0
      %p480 = por %p478, %p479
      %s481 = ssub.s32 %s37, %s44
      %p482 = scmp.eq.s32.totalorder %s481, 0
      %s484 = sadd.s32 %s483, 1
      %s485 = scalar_select %p482, %s483, %s484
      %p488 = pneg %p482
      %p489 = scmp.eq.s32.totalorder %s29, 11
      %p490 = por %p488, %p489
      %p491 = scmp.ne.s32.totalorder %s483, %s486
      %p492 = scmp.eq.s32.totalorder %s29, 0
      %p493 = por %p491, %p492
      %p494 = scmp.ne.s32.totalorder %s483, %s486
      %p495 = scmp.eq.s32.totalorder %s34, 11
      %p496 = por %p494, %p495
      %p497 = scmp.ne.s32.totalorder %s486, %s487
      %p498 = scmp.eq.s32.totalorder %s34, 0
      %p499 = por %p497, %p498
      %p500 = scmp.ne.s32.totalorder %s486, %s487
      %p501 = scmp.eq.s32.totalorder %s35, 11
      %p502 = por %p500, %p501
      %p504 = scmp.ne.s32.totalorder %s487, %s503
      %p505 = scmp.eq.s32.totalorder %s35, 0
      %p506 = por %p504, %p505
      %s507 = ssub.s32 %s37, %s44
      %p508 = scmp.eq.s32.totalorder %s507, 0
      %s510 = sadd.s32 %s509, 1
      %s511 = scalar_select %p508, %s509, %s510
      %p514 = pneg %p508
      %p515 = scmp.eq.s32.totalorder %s29, 11
      %p516 = por %p514, %p515
      %p517 = scmp.ne.s32.totalorder %s509, %s512
      %p518 = scmp.eq.s32.totalorder %s29, 0
      %p519 = por %p517, %p518
      %p520 = scmp.ne.s32.totalorder %s509, %s512
      %p521 = scmp.eq.s32.totalorder %s34, 11
      %p522 = por %p520, %p521
      %p523 = scmp.ne.s32.totalorder %s512, %s513
      %p524 = scmp.eq.s32.totalorder %s34, 0
      %p525 = por %p523, %p524
      %p526 = scmp.ne.s32.totalorder %s512, %s513
      %p527 = scmp.eq.s32.totalorder %s35, 11
      %p528 = por %p526, %p527
      %p530 = scmp.ne.s32.totalorder %s513, %s529
      %p531 = scmp.eq.s32.totalorder %s35, 0
      %p532 = por %p530, %p531
      %s533 = ssub.s32 %s37, %s44
      %p534 = scmp.eq.s32.totalorder %s533, 0
      %s536 = sadd.s32 %s535, 1
      %s537 = scalar_select %p534, %s535, %s536
      %p540 = pneg %p534
      %p541 = scmp.eq.s32.totalorder %s29, 11
      %p542 = por %p540, %p541
      %p543 = scmp.ne.s32.totalorder %s535, %s538
      %p544 = scmp.eq.s32.totalorder %s29, 0
      %p545 = por %p543, %p544
      %p546 = scmp.ne.s32.totalorder %s535, %s538
      %p547 = scmp.eq.s32.totalorder %s34, 11
      %p548 = por %p546, %p547
      %p549 = scmp.ne.s32.totalorder %s538, %s539
      %p550 = scmp.eq.s32.totalorder %s34, 0
      %p551 = por %p549, %p550
      %p552 = scmp.ne.s32.totalorder %s538, %s539
      %p553 = scmp.eq.s32.totalorder %s35, 11
      %p554 = por %p552, %p553
      %p556 = scmp.ne.s32.totalorder %s539, %s555
      %p557 = scmp.eq.s32.totalorder %s35, 0
      %p558 = por %p556, %p557
      %s559 = ssub.s32 %s36, %s48
      %p560 = scmp.eq.s32.totalorder %s559, 0
      %s562 = sadd.s32 %s561, 1
      %s563 = scalar_select %p560, %s561, %s562
      %p566 = pneg %p560
      %p567 = scmp.eq.s32.totalorder %s29, 11
      %p568 = por %p566, %p567
      %p569 = scmp.ne.s32.totalorder %s561, %s564
      %p570 = scmp.eq.s32.totalorder %s29, 0
      %p571 = por %p569, %p570
      %p572 = scmp.ne.s32.totalorder %s561, %s564
      %p573 = scmp.eq.s32.totalorder %s34, 11
      %p574 = por %p572, %p573
      %p575 = scmp.ne.s32.totalorder %s564, %s565
      %p576 = scmp.eq.s32.totalorder %s34, 0
      %p577 = por %p575, %p576
      %p578 = scmp.ne.s32.totalorder %s564, %s565
      %p579 = scmp.eq.s32.totalorder %s35, 11
      %p580 = por %p578, %p579
      %p582 = scmp.ne.s32.totalorder %s565, %s581
      %p583 = scmp.eq.s32.totalorder %s35, 0
      %p584 = por %p582, %p583
      %p585 = scmp.le.s32.totalorder 1, %s29
      %p586 = scmp.lt.s32.totalorder %s29, 13
      %p587 = pnand %p585, %p586
      %p588 = pneg %p587
      // Predicated region
      $region9: #{tree_att_encoder.1} parent=5 // pred_check
        _
      $region10: #{tree_att_encoder.1} parent=5 // pred_check_branch
        %590 = sbr.rel (%p587) target = $region12
      $region11: #{tree_att_encoder.1} parent=5 // pred_region
        %s591 = ssub.s32 %s29, 1
        // Predicated region
        $region13: #{tree_att_encoder.1} parent=11 // pred_check
          %p592 = pneg %p166
        $region14: #{tree_att_encoder.1} parent=11 // pred_check_branch
          %594 = sbr.rel (%p592) target = $region16
        $region15: #{tree_att_encoder.1} parent=11 // pred_region
          _
        $region16: #{tree_att_encoder.1} parent=11 // pred_fallthru
          _
        // Predicated region
        $region17: #{tree_att_encoder.1} parent=11 // pred_check
          %p595 = pneg %p187
        $region18: #{tree_att_encoder.1} parent=11 // pred_check_branch
          %597 = sbr.rel (%p595) target = $region20
        $region19: #{tree_att_encoder.1} parent=11 // pred_region
          _
        $region20: #{tree_att_encoder.1} parent=11 // pred_fallthru
          _
      $region12: #{tree_att_encoder.1} parent=5 // pred_fallthru
        _
      %p598 = scmp.lt.s32.totalorder %s29, 12
      // Predicated region
      $region21: #{tree_att_encoder.1} parent=5 // pred_check
        %p599 = pneg %p598
      $region22: #{tree_att_encoder.1} parent=5 // pred_check_branch
        %601 = sbr.rel (%p599) target = $region24
      $region23: #{tree_att_encoder.1} parent=5 // pred_region
        // Predicated region
        $region25: #{tree_att_encoder.1} parent=23 // pred_check
          %p602 = pneg %p61
        $region26: #{tree_att_encoder.1} parent=23 // pred_check_branch
          %604 = sbr.rel (%p602) target = $region28
        $region27: #{tree_att_encoder.1} parent=23 // pred_region
          %p605 = scmp.lt.s32.totalorder %s36, 1
          %s606 = scalar_select %p605, %s36, 1
          %s607 = smul.addr %s606, 2
          %s608 = smul.addr %s607, 8
          %s609 = scalar_lea.vmem %s0, %s608
        $region28: #{tree_att_encoder.1} parent=23 // pred_fallthru
          _
        // Predicated region
        $region29: #{tree_att_encoder.1} parent=23 // pred_check
          %p610 = pneg %p87
        $region30: #{tree_att_encoder.1} parent=23 // pred_check_branch
          %612 = sbr.rel (%p610) target = $region32
        $region31: #{tree_att_encoder.1} parent=23 // pred_region
          %p613 = scmp.lt.s32.totalorder %s36, 1
          %s614 = scalar_select %p613, %s36, 1
          %s615 = scalar_lea.vmem %s1, %s614
        $region32: #{tree_att_encoder.1} parent=23 // pred_fallthru
          _
        // Predicated region
        $region33: #{tree_att_encoder.1} parent=23 // pred_check
          %p616 = pneg %p113
        $region34: #{tree_att_encoder.1} parent=23 // pred_check_branch
          %618 = sbr.rel (%p616) target = $region36
        $region35: #{tree_att_encoder.1} parent=23 // pred_region
          %p619 = scmp.lt.s32.totalorder %s36, 1
          %s620 = scalar_select %p619, %s36, 1
          %s621 = smul.addr %s620, 4
          %s622 = smul.addr %s621, 8
          %s623 = scalar_lea.vmem %s2, %s622
        $region36: #{tree_att_encoder.1} parent=23 // pred_fallthru
          _
        // Predicated region
        $region37: #{tree_att_encoder.1} parent=23 // pred_check
          %p624 = pneg %p139
        $region38: #{tree_att_encoder.1} parent=23 // pred_check_branch
          %626 = sbr.rel (%p624) target = $region40
        $region39: #{tree_att_encoder.1} parent=23 // pred_region
          %p627 = scmp.lt.s32.totalorder %s36, 1
          %s628 = scalar_select %p627, %s36, 1
          %s629 = smul.addr %s628, 2
          %s630 = smul.addr %s629, 8
          %s631 = scalar_lea.vmem %s3, %s630
        $region40: #{tree_att_encoder.1} parent=23 // pred_fallthru
          _
        // Predicated region
        $region41: #{tree_att_encoder.1} parent=23 // pred_check
          %p632 = pneg %p207
        $region42: #{tree_att_encoder.1} parent=23 // pred_check_branch
          %634 = sbr.rel (%p632) target = $region44
        $region43: #{tree_att_encoder.1} parent=23 // pred_region
          %p635 = scmp.lt.s32.totalorder %s37, 5
          %s636 = scalar_select %p635, %s37, 5
          %s637 = smul.addr %s636, 4
          %s638 = scalar_lea.vmem %s6, %s637
        $region44: #{tree_att_encoder.1} parent=23 // pred_fallthru
          _
        // Predicated region
        $region45: #{tree_att_encoder.1} parent=23 // pred_check
          %p639 = pneg %p233
        $region46: #{tree_att_encoder.1} parent=23 // pred_check_branch
          %641 = sbr.rel (%p639) target = $region48
        $region47: #{tree_att_encoder.1} parent=23 // pred_region
          %p642 = scmp.lt.s32.totalorder %s37, 5
          %s643 = scalar_select %p642, %s37, 5
          %s644 = smul.addr %s643, 4
          %s645 = scalar_lea.vmem %s7, %s644
        $region48: #{tree_att_encoder.1} parent=23 // pred_fallthru
          _
        // Predicated region
        $region49: #{tree_att_encoder.1} parent=23 // pred_check
          %p646 = pneg %p259
        $region50: #{tree_att_encoder.1} parent=23 // pred_check_branch
          %648 = sbr.rel (%p646) target = $region52
        $region51: #{tree_att_encoder.1} parent=23 // pred_region
          %p649 = scmp.lt.s32.totalorder %s37, 5
          %s650 = scalar_select %p649, %s37, 5
          %s651 = smul.addr %s650, 4
          %s652 = smul.addr %s651, 8
          %s653 = scalar_lea.vmem %s8, %s652
        $region52: #{tree_att_encoder.1} parent=23 // pred_fallthru
          _
        // Predicated region
        $region53: #{tree_att_encoder.1} parent=23 // pred_check
          %p654 = pneg %p285
        $region54: #{tree_att_encoder.1} parent=23 // pred_check_branch
          %656 = sbr.rel (%p654) target = $region56
        $region55: #{tree_att_encoder.1} parent=23 // pred_region
          %p657 = scmp.lt.s32.totalorder %s37, 5
          %s658 = scalar_select %p657, %s37, 5
          %s659 = scalar_lea.vmem %s9, %s658
        $region56: #{tree_att_encoder.1} parent=23 // pred_fallthru
          _
        // Predicated region
        $region57: #{tree_att_encoder.1} parent=23 // pred_check
          %p660 = pneg %p311
        $region58: #{tree_att_encoder.1} parent=23 // pred_check_branch
          %662 = sbr.rel (%p660) target = $region60
        $region59: #{tree_att_encoder.1} parent=23 // pred_region
          %p663 = scmp.lt.s32.totalorder %s37, 5
          %s664 = scalar_select %p663, %s37, 5
          %s665 = smul.addr %s664, 4
          %s666 = smul.addr %s665, 8
          %s667 = scalar_lea.vmem %s10, %s666
        $region60: #{tree_att_encoder.1} parent=23 // pred_fallthru
          _
        // Predicated region
        $region61: #{tree_att_encoder.1} parent=23 // pred_check
          %p668 = pneg %p337
        $region62: #{tree_att_encoder.1} parent=23 // pred_check_branch
          %670 = sbr.rel (%p668) target = $region64
        $region63: #{tree_att_encoder.1} parent=23 // pred_region
          %p671 = scmp.lt.s32.totalorder %s37, 5
          %s672 = scalar_select %p671, %s37, 5
          %s673 = scalar_lea.vmem %s11, %s672
        $region64: #{tree_att_encoder.1} parent=23 // pred_fallthru
          _
        // Predicated region
        $region65: #{tree_att_encoder.1} parent=23 // pred_check
          %p674 = pneg %p363
        $region66: #{tree_att_encoder.1} parent=23 // pred_check_branch
          %676 = sbr.rel (%p674) target = $region68
        $region67: #{tree_att_encoder.1} parent=23 // pred_region
          %p677 = scmp.lt.s32.totalorder %s37, 5
          %s678 = scalar_select %p677, %s37, 5
          %s679 = smul.addr %s678, 8
          %s680 = smul.addr %s679, 8
          %s681 = scalar_lea.vmem %s12, %s680
        $region68: #{tree_att_encoder.1} parent=23 // pred_fallthru
          _
        // Predicated region
        $region69: #{tree_att_encoder.1} parent=23 // pred_check
          %p682 = pneg %p389
        $region70: #{tree_att_encoder.1} parent=23 // pred_check_branch
          %684 = sbr.rel (%p682) target = $region72
        $region71: #{tree_att_encoder.1} parent=23 // pred_region
          %p685 = scmp.lt.s32.totalorder %s37, 5
          %s686 = scalar_select %p685, %s37, 5
          %s687 = scalar_lea.vmem %s13, %s686
        $region72: #{tree_att_encoder.1} parent=23 // pred_fallthru
          _
        // Predicated region
        $region73: #{tree_att_encoder.1} parent=23 // pred_check
          %p688 = pneg %p415
        $region74: #{tree_att_encoder.1} parent=23 // pred_check_branch
          %690 = sbr.rel (%p688) target = $region76
        $region75: #{tree_att_encoder.1} parent=23 // pred_region
          %p691 = scmp.lt.s32.totalorder %s37, 5
          %s692 = scalar_select %p691, %s37, 5
          %s693 = smul.addr %s692, 4
          %s694 = smul.addr %s693, 8
          %s695 = scalar_lea.vmem %s14, %s694
        $region76: #{tree_att_encoder.1} parent=23 // pred_fallthru
          _
        // Predicated region
        $region77: #{tree_att_encoder.1} parent=23 // pred_check
          %p696 = pneg %p441
        $region78: #{tree_att_encoder.1} parent=23 // pred_check_branch
          %698 = sbr.rel (%p696) target = $region80
        $region79: #{tree_att_encoder.1} parent=23 // pred_region
          %p699 = scmp.lt.s32.totalorder %s37, 5
          %s700 = scalar_select %p699, %s37, 5
          %s701 = scalar_lea.vmem %s15, %s700
        $region80: #{tree_att_encoder.1} parent=23 // pred_fallthru
          _
        // Predicated region
        $region81: #{tree_att_encoder.1} parent=23 // pred_check
          %p702 = pneg %p467
        $region82: #{tree_att_encoder.1} parent=23 // pred_check_branch
          %704 = sbr.rel (%p702) target = $region84
        $region83: #{tree_att_encoder.1} parent=23 // pred_region
          %p705 = scmp.lt.s32.totalorder %s37, 5
          %s706 = scalar_select %p705, %s37, 5
          %s707 = smul.addr %s706, 4
          %s708 = smul.addr %s707, 8
          %s709 = scalar_lea.vmem %s16, %s708
        $region84: #{tree_att_encoder.1} parent=23 // pred_fallthru
          _
        // Predicated region
        $region85: #{tree_att_encoder.1} parent=23 // pred_check
          %p710 = pneg %p493
        $region86: #{tree_att_encoder.1} parent=23 // pred_check_branch
          %712 = sbr.rel (%p710) target = $region88
        $region87: #{tree_att_encoder.1} parent=23 // pred_region
          %p713 = scmp.lt.s32.totalorder %s37, 5
          %s714 = scalar_select %p713, %s37, 5
          %s715 = scalar_lea.vmem %s17, %s714
        $region88: #{tree_att_encoder.1} parent=23 // pred_fallthru
          _
        // Predicated region
        $region89: #{tree_att_encoder.1} parent=23 // pred_check
          %p716 = pneg %p519
        $region90: #{tree_att_encoder.1} parent=23 // pred_check_branch
          %718 = sbr.rel (%p716) target = $region92
        $region91: #{tree_att_encoder.1} parent=23 // pred_region
          %p719 = scmp.lt.s32.totalorder %s37, 5
          %s720 = scalar_select %p719, %s37, 5
          %s721 = smul.addr %s720, 16
          %s722 = smul.addr %s721, 8
          %s723 = scalar_lea.vmem %s18, %s722
        $region92: #{tree_att_encoder.1} parent=23 // pred_fallthru
          _
        // Predicated region
        $region93: #{tree_att_encoder.1} parent=23 // pred_check
          %p724 = pneg %p545
        $region94: #{tree_att_encoder.1} parent=23 // pred_check_branch
          %726 = sbr.rel (%p724) target = $region96
        $region95: #{tree_att_encoder.1} parent=23 // pred_region
          %p727 = scmp.lt.s32.totalorder %s37, 5
          %s728 = scalar_select %p727, %s37, 5
          %s729 = scalar_lea.vmem %s19, %s728
        $region96: #{tree_att_encoder.1} parent=23 // pred_fallthru
          _
      $region24: #{tree_att_encoder.1} parent=5 // pred_fallthru
        _
      %p730 = scmp.le.s32.totalorder 1, %s29
      %p731 = scmp.lt.s32.totalorder %s29, 13
      %p732 = pnand %p730, %p731
      %p733 = pneg %p732
      // Predicated region
      $region97: #{tree_att_encoder.1} parent=5 // pred_check
        _
      $region98: #{tree_att_encoder.1} parent=5 // pred_check_branch
        %735 = sbr.rel (%p732) target = $region100
      $region99: #{tree_att_encoder.1} parent=5 // pred_region
        %s736 = ssub.s32 %s29, 1
        %p737 = scmp.lt.s32.totalorder %s38, 1
        %s738 = scalar_select %p737, %s38, 1
        %s739 = smul.addr %s738, 2
        %s740 = smul.addr %s739, 8
        %s741 = scalar_lea.vmem %s0, %s740
        %p742 = pneg %p67
        %p743 = pneg %p64
        %p744 = scmp.lt.s32.totalorder %s38, 1
        %s745 = scalar_select %p744, %s38, 1
        %s746 = scalar_lea.vmem %s1, %s745
        %p747 = pneg %p93
        %p748 = pneg %p90
        %p749 = scmp.lt.s32.totalorder %s38, 1
        %s750 = scalar_select %p749, %s38, 1
        %s751 = smul.addr %s750, 4
        %s752 = smul.addr %s751, 8
        %s753 = scalar_lea.vmem %s2, %s752
        %p754 = pneg %p119
        %p755 = pneg %p116
        %p756 = scmp.lt.s32.totalorder %s38, 1
        %s757 = scalar_select %p756, %s38, 1
        %s758 = smul.addr %s757, 2
        %s759 = smul.addr %s758, 8
        %s760 = scalar_lea.vmem %s3, %s759
        %p761 = pneg %p145
        %p762 = pneg %p142
        %p763 = pneg %p166
        %p764 = pneg %p163
        %p765 = pneg %p187
        %p766 = pneg %p184
        %p767 = scmp.lt.s32.totalorder %s39, 5
        %s768 = scalar_select %p767, %s39, 5
        %s769 = smul.addr %s768, 4
        %s770 = scalar_lea.vmem %s6, %s769
        %p771 = pneg %p213
        %p772 = pneg %p210
        %p773 = scmp.lt.s32.totalorder %s39, 5
        %s774 = scalar_select %p773, %s39, 5
        %s775 = smul.addr %s774, 4
        %s776 = scalar_lea.vmem %s7, %s775
        %p777 = pneg %p239
        %p778 = pneg %p236
        %p779 = scmp.lt.s32.totalorder %s39, 5
        %s780 = scalar_select %p779, %s39, 5
        %s781 = smul.addr %s780, 4
        %s782 = smul.addr %s781, 8
        %s783 = scalar_lea.vmem %s8, %s782
        %p784 = pneg %p265
        %p785 = pneg %p262
        %p786 = scmp.lt.s32.totalorder %s39, 5
        %s787 = scalar_select %p786, %s39, 5
        %s788 = scalar_lea.vmem %s9, %s787
        %p789 = pneg %p291
        %p790 = pneg %p288
        %p791 = scmp.lt.s32.totalorder %s39, 5
        %s792 = scalar_select %p791, %s39, 5
        %s793 = smul.addr %s792, 4
        %s794 = smul.addr %s793, 8
        %s795 = scalar_lea.vmem %s10, %s794
        %p796 = pneg %p317
        %p797 = pneg %p314
        %p798 = scmp.lt.s32.totalorder %s39, 5
        %s799 = scalar_select %p798, %s39, 5
        %s800 = scalar_lea.vmem %s11, %s799
        %p801 = pneg %p343
        %p802 = pneg %p340
        %p803 = scmp.lt.s32.totalorder %s39, 5
        %s804 = scalar_select %p803, %s39, 5
        %s805 = smul.addr %s804, 8
        %s806 = smul.addr %s805, 8
        %s807 = scalar_lea.vmem %s12, %s806
        %p808 = pneg %p369
        %p809 = pneg %p366
        %p810 = scmp.lt.s32.totalorder %s39, 5
        %s811 = scalar_select %p810, %s39, 5
        %s812 = scalar_lea.vmem %s13, %s811
        %p813 = pneg %p395
        %p814 = pneg %p392
        %p815 = scmp.lt.s32.totalorder %s39, 5
        %s816 = scalar_select %p815, %s39, 5
        %s817 = smul.addr %s816, 4
        %s818 = smul.addr %s817, 8
        %s819 = scalar_lea.vmem %s14, %s818
        %p820 = pneg %p421
        %p821 = pneg %p418
        %p822 = scmp.lt.s32.totalorder %s39, 5
        %s823 = scalar_select %p822, %s39, 5
        %s824 = scalar_lea.vmem %s15, %s823
        %p825 = pneg %p447
        %p826 = pneg %p444
        %p827 = scmp.lt.s32.totalorder %s39, 5
        %s828 = scalar_select %p827, %s39, 5
        %s829 = smul.addr %s828, 4
        %s830 = smul.addr %s829, 8
        %s831 = scalar_lea.vmem %s16, %s830
        %p832 = pneg %p473
        %p833 = pneg %p470
        %p834 = scmp.lt.s32.totalorder %s39, 5
        %s835 = scalar_select %p834, %s39, 5
        %s836 = scalar_lea.vmem %s17, %s835
        %p837 = pneg %p499
        %p838 = pneg %p496
        %p839 = scmp.lt.s32.totalorder %s39, 5
        %s840 = scalar_select %p839, %s39, 5
        %s841 = smul.addr %s840, 16
        %s842 = smul.addr %s841, 8
        %s843 = scalar_lea.vmem %s18, %s842
        %p844 = pneg %p525
        %p845 = pneg %p522
        %p846 = scmp.lt.s32.totalorder %s39, 5
        %s847 = scalar_select %p846, %s39, 5
        %s848 = scalar_lea.vmem %s19, %s847
        %p849 = pneg %p551
        %p850 = pneg %p548
        %p851 = pneg %p577
        %p852 = pneg %p574
        %s853 = sand.u32 %s564, 1
        %s854 = scalar_lea.sflag [#allocation5], %s853
        %s855 = sand.u32 %s564, 1
        %s856 = smul.addr %s855, 16
        %s857 = scalar_lea.vmem [#allocation4], %s856
        %p858 = scmp.lt.s32.totalorder %s38, 1
        %s859 = scalar_select %p858, %s38, 1
        %s860 = smul.addr %s859, 2
        %s861 = smul.addr %s860, 8
        %s862 = scalar_lea.vmem %s0, %s861
        %p863 = scmp.lt.s32.totalorder %s38, 1
        %s864 = scalar_select %p863, %s38, 1
        %s865 = scalar_lea.vmem %s1, %s864
        %p866 = scmp.lt.s32.totalorder %s38, 1
        %s867 = scalar_select %p866, %s38, 1
        %s868 = smul.addr %s867, 4
        %s869 = smul.addr %s868, 8
        %s870 = scalar_lea.vmem %s2, %s869
        %p871 = scmp.lt.s32.totalorder %s38, 1
        %s872 = scalar_select %p871, %s38, 1
        %s873 = smul.addr %s872, 2
        %s874 = smul.addr %s873, 8
        %s875 = scalar_lea.vmem %s3, %s874
        %p876 = scmp.lt.s32.totalorder %s39, 5
        %s877 = scalar_select %p876, %s39, 5
        %s878 = smul.addr %s877, 4
        %s879 = scalar_lea.vmem %s6, %s878
        %p880 = scmp.lt.s32.totalorder %s39, 5
        %s881 = scalar_select %p880, %s39, 5
        %s882 = smul.addr %s881, 4
        %s883 = scalar_lea.vmem %s7, %s882
        %p884 = scmp.lt.s32.totalorder %s39, 5
        %s885 = scalar_select %p884, %s39, 5
        %s886 = smul.addr %s885, 4
        %s887 = smul.addr %s886, 8
        %s888 = scalar_lea.vmem %s8, %s887
        %p889 = scmp.lt.s32.totalorder %s39, 5
        %s890 = scalar_select %p889, %s39, 5
        %s891 = scalar_lea.vmem %s9, %s890
        %p892 = scmp.lt.s32.totalorder %s39, 5
        %s893 = scalar_select %p892, %s39, 5
        %s894 = smul.addr %s893, 4
        %s895 = smul.addr %s894, 8
        %s896 = scalar_lea.vmem %s10, %s895
        %p897 = scmp.lt.s32.totalorder %s39, 5
        %s898 = scalar_select %p897, %s39, 5
        %s899 = scalar_lea.vmem %s11, %s898
        %p900 = scmp.lt.s32.totalorder %s39, 5
        %s901 = scalar_select %p900, %s39, 5
        %s902 = smul.addr %s901, 8
        %s903 = smul.addr %s902, 8
        %s904 = scalar_lea.vmem %s12, %s903
        %p905 = scmp.lt.s32.totalorder %s39, 5
        %s906 = scalar_select %p905, %s39, 5
        %s907 = scalar_lea.vmem %s13, %s906
        %p908 = scmp.lt.s32.totalorder %s39, 5
        %s909 = scalar_select %p908, %s39, 5
        %s910 = smul.addr %s909, 4
        %s911 = smul.addr %s910, 8
        %s912 = scalar_lea.vmem %s14, %s911
        %p913 = scmp.lt.s32.totalorder %s39, 5
        %s914 = scalar_select %p913, %s39, 5
        %s915 = scalar_lea.vmem %s15, %s914
        %p916 = scmp.lt.s32.totalorder %s39, 5
        %s917 = scalar_select %p916, %s39, 5
        %s918 = smul.addr %s917, 4
        %s919 = smul.addr %s918, 8
        %s920 = scalar_lea.vmem %s16, %s919
        %p921 = scmp.lt.s32.totalorder %s39, 5
        %s922 = scalar_select %p921, %s39, 5
        %s923 = scalar_lea.vmem %s17, %s922
        %p924 = scmp.lt.s32.totalorder %s39, 5
        %s925 = scalar_select %p924, %s39, 5
        %s926 = smul.addr %s925, 16
        %s927 = smul.addr %s926, 8
        %s928 = scalar_lea.vmem %s18, %s927
        %p929 = scmp.lt.s32.totalorder %s39, 5
        %s930 = scalar_select %p929, %s39, 5
        %s931 = scalar_lea.vmem %s19, %s930
        %p932 = scmp.eq.s32.totalorder %s39, 0
        // Predicated region
        $region101: #{tree_att_encoder.1} parent=99 // pred_check
          %p933 = pneg %p932
        $region102: #{tree_att_encoder.1} parent=99 // pred_check_branch
          %935 = sbr.rel (%p933) target = $region104
        $region103: #{tree_att_encoder.1} parent=99 // pred_region
          %v936 = vld [vmem:[%s870] sm:$0xff]
          %v937 = vld [vmem:[%s870 + $0x8] sm:$0xff]
          %v938 = vld [vmem:[%s870 + $0x10] sm:$0xff]
          %v939 = vld [vmem:[%s870 + $0x18] sm:$0xff]
          %v940 = vld [vmem:[%s4] sm:$0xff]
          %v941 = vld [vmem:[%s4 + $0x8] sm:$0xff]
          %v942 = vld [vmem:[%s4 + $0x10] sm:$0xff]
          %v943 = vld [vmem:[%s4 + $0x18] sm:$0xff]
          %v944 = vld [vmem:[%s4 + $0x20] sm:$0xff]
          %v945 = vld [vmem:[%s4 + $0x28] sm:$0xff]
          %v946 = vld [vmem:[%s4 + $0x30] sm:$0xff]
          %v947 = vld [vmem:[%s4 + $0x38] sm:$0xff]
          %v948 = vld [vmem:[%s4 + $0x40] sm:$0xff]
          %v949 = vld [vmem:[%s4 + $0x48] sm:$0xff]
          %v950 = vld [vmem:[%s4 + $0x50] sm:$0xff]
          %v951 = vld [vmem:[%s4 + $0x58] sm:$0xff]
          %v952 = vld [vmem:[%s4 + $0x60] sm:$0xff]
          %v953 = vld [vmem:[%s4 + $0x68] sm:$0xff]
          %v954 = vld [vmem:[%s4 + $0x70] sm:$0xff]
          %v955 = vld [vmem:[%s4 + $0x78] sm:$0xff]
          %v956 = vld [vmem:[%s4 + $0x80] sm:$0xff]
          %v957 = vld [vmem:[%s4 + $0x88] sm:$0xff]
          %v958 = vld [vmem:[%s4 + $0x90] sm:$0xff]
          %v959 = vld [vmem:[%s4 + $0x98] sm:$0xff]
          %v960 = vld [vmem:[%s4 + $0xa0] sm:$0xff]
          %v961 = vld [vmem:[%s4 + $0xa8] sm:$0xff]
          %v962 = vld [vmem:[%s4 + $0xb0] sm:$0xff]
          %v963 = vld [vmem:[%s4 + $0xb8] sm:$0xff]
          %v964 = vld [vmem:[%s4 + $0xc0] sm:$0xff]
          %v965 = vld [vmem:[%s4 + $0xc8] sm:$0xff]
          %v966 = vld [vmem:[%s4 + $0xd0] sm:$0xff]
          %v967 = vld [vmem:[%s4 + $0xd8] sm:$0xff]
          %v968 = vld [vmem:[%s4 + $0xe0] sm:$0xff]
          %v969 = vld [vmem:[%s4 + $0xe8] sm:$0xff]
          %v970 = vld [vmem:[%s4 + $0xf0] sm:$0xff]
          %v971 = vld [vmem:[%s4 + $0xf8] sm:$0xff]
          %v972 = vld [vmem:[%s5] sm:$0x1]
          %v974 = vperm.slane %v972, 0
          %976 = vmatpush.msra.mxu0 %v955
          %977 = vmatpush.msra.mxu0 %v954
          %978 = vmatpush.msra.mxu0 %v953
          %979 = vmatpush.msra.mxu0 %v952
          %980 = vmatpush.msra.mxu0 %v951
          %981 = vmatpush.msra.mxu0 %v950
          %982 = vmatpush.msra.mxu0 %v949
          %983 = vmatpush.msra.mxu0 %v948
          %984 = vmatpush.msra.mxu0 %v947
          %985 = vmatpush.msra.mxu0 %v946
          %986 = vmatpush.msra.mxu0 %v945
          %987 = vmatpush.msra.mxu0 %v944
          %988 = vmatpush.msra.mxu0 %v943
          %989 = vmatpush.msra.mxu0 %v942
          %990 = vmatpush.msra.mxu0 %v941
          %991 = vmatpush.msra.mxu0 %v940
          %992 = vmatmul.f32.gmra.mxu0 %v936
          %v993 = vpop.f32.mrf.mxu0
          %v994 = vadd.f32 %v974, %v993
          %995 = vmatmul.f32.gmra.mxu0 %v938
          %v996 = vpop.f32.mrf.mxu0
          %v997 = vadd.f32 %v974, %v996
          %998 = vdwg.mxu0
          %999 = vmatpush.msra.mxu0 %v971
          %1000 = vmatpush.msra.mxu0 %v970
          %1001 = vmatpush.msra.mxu0 %v969
          %1002 = vmatpush.msra.mxu0 %v968
          %1003 = vmatpush.msra.mxu0 %v967
          %1004 = vmatpush.msra.mxu0 %v966
          %1005 = vmatpush.msra.mxu0 %v965
          %1006 = vmatpush.msra.mxu0 %v964
          %1007 = vmatpush.msra.mxu0 %v963
          %1008 = vmatpush.msra.mxu0 %v962
          %1009 = vmatpush.msra.mxu0 %v961
          %1010 = vmatpush.msra.mxu0 %v960
          %1011 = vmatpush.msra.mxu0 %v959
          %1012 = vmatpush.msra.mxu0 %v958
          %1013 = vmatpush.msra.mxu0 %v957
          %1014 = vmatpush.msra.mxu0 %v956
          %1015 = vmatmul.f32.gmra.mxu0 %v937
          %v1016 = vpop.f32.mrf.mxu0
          %v1017 = vadd.f32 %v994, %v1016
          %1018 = vmatmul.f32.gmra.mxu0 %v939
          %v1019 = vpop.f32.mrf.mxu0
          %v1020 = vadd.f32 %v997, %v1019
          %1021 = vdwg.mxu0
          %vm1022 = vcmask 261120
          %1023 = vst.msk [vmem:[#allocation3] sm:$0xff] %vm1022, %v1017
          %1024 = vst.msk [vmem:[#allocation3 + $0x8] sm:$0xff] %vm1022, %v1020
          %v1025 = vld [vmem:[%s862] sm:$0xff]
          %v1026 = vld [vmem:[%s862 + $0x8] sm:$0xff]
          %1027 = vst.msk [vmem:[#allocation2] sm:$0xff] %vm1022, %v1025
          %1028 = vst.msk [vmem:[#allocation2 + $0x8] sm:$0xff] %vm1022, %v1026
        $region104: #{tree_att_encoder.1} parent=99 // pred_fallthru
          _
        %v1029 = vld [vmem:[#allocation2] sm:$0xff]
        %v1030 = vld [vmem:[#allocation2 + $0x8] sm:$0xff]
        %v1031 = vld [vmem:[%s879] sm:$0xf]
        %v1032 = vld [vmem:[%s883] sm:$0xf]
        %vm1033 = vcmask 261120
        %v1034 = vsel %vm1033, %v1029, 0.0
        %1035 = vadd.xlane.f32.xlu0 %v1034
        %v1036 = vpop.xlane.xlu0 %1035
        %v1037 = vsel %vm1033, %v1030, 0.0
        %1038 = vadd.xlane.f32.xlu0 %v1037
        %v1039 = vpop.xlane.xlu0 %1038
        %v1040 = vrcp.pop 32.0
        %v1041 = vmul.f32 32.0, %v1040
        %v1042 = vsub.f32 1.0, %v1041
        %v1043 = vmul.f32 %v1040, %v1042
        %v1044 = vadd.f32 %v1040, %v1043
        %vm1045 = vweird.f32 %v1040
        %v1046 = vsel %vm1045, %v1040, %v1044
        %v1047 = vmul.f32 %v1036, %v1046
        %v1048 = vmul.f32 %v1039, %v1046
        %v1049 = vsub.f32 %v1029, %v1047
        %v1050 = vsub.f32 %v1030, %v1048
        %v1051 = vmul.f32 %v1049, %v1049
        %v1052 = vmul.f32 %v1050, %v1050
        %v1053 = vsel %vm1033, %v1051, 0.0
        %1054 = vadd.xlane.f32.xlu0 %v1053
        %v1055 = vpop.xlane.xlu0 %1054
        %v1056 = vsel %vm1033, %v1052, 0.0
        %1057 = vadd.xlane.f32.xlu0 %v1056
        %v1058 = vpop.xlane.xlu0 %1057
        %v1059 = vmul.f32 %v1055, %v1046
        %v1060 = vmul.f32 %v1058, %v1046
        %v1061 = vadd.f32 %v1059, 1e-05
        %v1062 = vadd.f32 %v1060, 1e-05
        %v1063 = vrsqrt.pop %v1061
        %v1064 = vmul.f32 %v1063, %v1061
        %v1065 = vmul.f32 %v1064, %v1063
        %v1066 = vmul.f32 0.5, %v1065
        %v1067 = vsub.f32 1.5, %v1066
        %v1068 = vmul.f32 %v1063, %v1067
        %vm1069 = vweird.f32 %v1061
        %vm1070 = vweird.f32 %v1063
        %vm1071 = vmor %vm1069, %vm1070
        %v1072 = vsel %vm1071, %v1063, %v1068
        %v1073 = vrsqrt.pop %v1062
        %v1074 = vmul.f32 %v1073, %v1062
        %v1075 = vmul.f32 %v1074, %v1073
        %v1076 = vmul.f32 0.5, %v1075
        %v1077 = vsub.f32 1.5, %v1076
        %v1078 = vmul.f32 %v1073, %v1077
        %vm1079 = vweird.f32 %v1062
        %vm1080 = vweird.f32 %v1073
        %vm1081 = vmor %vm1079, %vm1080
        %v1082 = vsel %vm1081, %v1073, %v1078
        %v1083 = vmul.f32 %v1049, %v1072
        %v1084 = vmul.f32 %v1050, %v1082
        %v1085 = vperm.slane %v1031, 0
        %v1086 = vmul.f32 %v1083, %v1085
        %v1087 = vmul.f32 %v1084, %v1085
        %v1088 = vperm.slane %v1032, 0
        %v1089 = vadd.f32 %v1086, %v1088
        %v1090 = vadd.f32 %v1087, %v1088
        %v1091 = vld [vmem:[%s888] sm:$0xff]
        %v1092 = vld [vmem:[%s888 + $0x8] sm:$0xff]
        %v1093 = vld [vmem:[%s888 + $0x10] sm:$0xff]
        %v1094 = vld [vmem:[%s888 + $0x18] sm:$0xff]
        %v1095 = vld [vmem:[%s891] sm:$0x1]
        %v1097 = vperm.slane %v1095, 0
        %v1100 = vsel %vm1033, %v1089, 0
        %v1103 = vsel %vm1033, %v1090, 0
        %1105 = vmatpush.msra.mxu0 0.0
        %1106 = vmatpush.msra.mxu0 0.0
        %1107 = vmatpush.msra.mxu0 0.0
        %1108 = vmatpush.msra.mxu0 0.0
        %1109 = vmatpush.msra.mxu0 0.0
        %1110 = vmatpush.msra.mxu0 0.0
        %1111 = vmatpush.msra.mxu0 0.0
        %1112 = vmatpush.msra.mxu0 0.0
        %1113 = vmatpush.msra.mxu0 0.0
        %1114 = vmatpush.msra.mxu0 0.0
        %1115 = vmatpush.msra.mxu0 0.0
        %1116 = vmatpush.msra.mxu0 0.0
        %1117 = vmatpush.msra.mxu0 %v1094
        %1118 = vmatpush.msra.mxu0 %v1093
        %1119 = vmatpush.msra.mxu0 %v1092
        %1120 = vmatpush.msra.mxu0 %v1091
        %1121 = vmatmul.f32.gmra.mxu0 %v1100
        %v1122 = vpop.f32.mrf.mxu0
        %v1123 = vadd.f32 %v1097, %v1122
        %1124 = vmatmul.f32.gmra.mxu0 %v1103
        %v1125 = vpop.f32.mrf.mxu0
        %v1126 = vadd.f32 %v1097, %v1125
        %1127 = vdwg.mxu0
        %v1128 = vmul.f32 %v1123, 0.5
        %v1129 = vmul.f32 %v1126, 0.5
        %v1130 = vld [vmem:[%s865] sm:$0x1]
        %v1132 = vperm.slane %v1130, 0
        %1136 = vrot.lane.b32.xlu0 %v1123, 96
        %v1137 = vpop.permute.xlu0 %1136
        %1138 = vrot.lane.b32.xlu0 %v1126, 96
        %v1139 = vpop.permute.xlu0 %1138
        %vm1140 = vcmask 31744
        %v1142 = vsel %vm1140, %v1128, 0
        %v1145 = vsel %vm1140, %v1129, 0
        %v1147 = vsel %vm1140, %v1137, 0
        %v1149 = vsel %vm1140, %v1139, 0
        %1151 = vmatpush.xpose.msra.mxu0 0.0
        %1152 = vmatpush.xpose.msra.mxu0 0.0
        %1153 = vmatpush.xpose.msra.mxu0 0.0
        %1154 = vmatpush.xpose.msra.mxu0 0.0
        %1155 = vmatpush.xpose.msra.mxu0 0.0
        %1156 = vmatpush.xpose.msra.mxu0 0.0
        %1157 = vmatpush.xpose.msra.mxu0 0.0
        %1158 = vmatpush.xpose.msra.mxu0 0.0
        %1159 = vmatpush.xpose.msra.mxu0 0.0
        %1160 = vmatpush.xpose.msra.mxu0 0.0
        %1161 = vmatpush.xpose.msra.mxu0 0.0
        %1162 = vmatpush.xpose.msra.mxu0 0.0
        %1163 = vmatpush.xpose.msra.mxu0 0.0
        %1164 = vmatpush.xpose.msra.mxu0 0.0
        %1165 = vmatpush.xpose.msra.mxu0 %v1149
        %1166 = vmatpush.xpose.msra.mxu0 %v1147
        %1167 = vmatmul.f32.gmra.mxu0 %v1142
        %v1168 = vpop.f32.mrf.mxu0
        %v1169 = vadd.f32 0.0, %v1168
        %1170 = vmatmul.f32.gmra.mxu0 %v1145
        %v1171 = vpop.f32.mrf.mxu0
        %v1172 = vadd.f32 0.0, %v1171
        %1173 = vdwg.mxu0
        %1174 = vrot.lane.b32.xlu0 %v1128, 124
        %v1175 = vpop.permute.xlu0 %1174
        %1176 = vrot.lane.b32.xlu0 %v1129, 124
        %v1177 = vpop.permute.xlu0 %1176
        %1178 = vrot.lane.b32.xlu0 %v1123, 92
        %v1179 = vpop.permute.xlu0 %1178
        %1180 = vrot.lane.b32.xlu0 %v1126, 92
        %v1181 = vpop.permute.xlu0 %1180
        %v1182 = vsel %vm1140, %v1175, 0
        %v1184 = vsel %vm1140, %v1177, 0
        %v1186 = vsel %vm1140, %v1179, 0
        %v1188 = vsel %vm1140, %v1181, 0
        %1190 = vmatpush.xpose.msra.mxu0 0.0
        %1191 = vmatpush.xpose.msra.mxu0 0.0
        %1192 = vmatpush.xpose.msra.mxu0 0.0
        %1193 = vmatpush.xpose.msra.mxu0 0.0
        %1194 = vmatpush.xpose.msra.mxu0 0.0
        %1195 = vmatpush.xpose.msra.mxu0 0.0
        %1196 = vmatpush.xpose.msra.mxu0 0.0
        %1197 = vmatpush.xpose.msra.mxu0 0.0
        %1198 = vmatpush.xpose.msra.mxu0 0.0
        %1199 = vmatpush.xpose.msra.mxu0 0.0
        %1200 = vmatpush.xpose.msra.mxu0 0.0
        %1201 = vmatpush.xpose.msra.mxu0 0.0
        %1202 = vmatpush.xpose.msra.mxu0 0.0
        %1203 = vmatpush.xpose.msra.mxu0 0.0
        %1204 = vmatpush.xpose.msra.mxu0 %v1188
        %1205 = vmatpush.xpose.msra.mxu0 %v1186
        %1206 = vmatmul.f32.gmra.mxu0 %v1182
        %v1207 = vpop.f32.mrf.mxu0
        %v1208 = vadd.f32 0.0, %v1207
        %1209 = vmatmul.f32.gmra.mxu0 %v1184
        %v1210 = vpop.f32.mrf.mxu0
        %v1211 = vadd.f32 0.0, %v1210
        %1212 = vdwg.mxu0
        %1213 = vrot.lane.b32.xlu0 %v1128, 120
        %v1214 = vpop.permute.xlu0 %1213
        %1215 = vrot.lane.b32.xlu0 %v1129, 120
        %v1216 = vpop.permute.xlu0 %1215
        %1217 = vrot.lane.b32.xlu0 %v1123, 88
        %v1218 = vpop.permute.xlu0 %1217
        %1219 = vrot.lane.b32.xlu0 %v1126, 88
        %v1220 = vpop.permute.xlu0 %1219
        %v1221 = vsel %vm1140, %v1214, 0
        %v1223 = vsel %vm1140, %v1216, 0
        %v1225 = vsel %vm1140, %v1218, 0
        %v1227 = vsel %vm1140, %v1220, 0
        %1229 = vmatpush.xpose.msra.mxu0 0.0
        %1230 = vmatpush.xpose.msra.mxu0 0.0
        %1231 = vmatpush.xpose.msra.mxu0 0.0
        %1232 = vmatpush.xpose.msra.mxu0 0.0
        %1233 = vmatpush.xpose.msra.mxu0 0.0
        %1234 = vmatpush.xpose.msra.mxu0 0.0
        %1235 = vmatpush.xpose.msra.mxu0 0.0
        %1236 = vmatpush.xpose.msra.mxu0 0.0
        %1237 = vmatpush.xpose.msra.mxu0 0.0
        %1238 = vmatpush.xpose.msra.mxu0 0.0
        %1239 = vmatpush.xpose.msra.mxu0 0.0
        %1240 = vmatpush.xpose.msra.mxu0 0.0
        %1241 = vmatpush.xpose.msra.mxu0 0.0
        %1242 = vmatpush.xpose.msra.mxu0 0.0
        %1243 = vmatpush.xpose.msra.mxu0 %v1227
        %1244 = vmatpush.xpose.msra.mxu0 %v1225
        %1245 = vmatmul.f32.gmra.mxu0 %v1221
        %v1246 = vpop.f32.mrf.mxu0
        %v1247 = vadd.f32 0.0, %v1246
        %1248 = vmatmul.f32.gmra.mxu0 %v1223
        %v1249 = vpop.f32.mrf.mxu0
        %v1250 = vadd.f32 0.0, %v1249
        %1251 = vdwg.mxu0
        %1252 = vrot.lane.b32.xlu0 %v1128, 116
        %v1253 = vpop.permute.xlu0 %1252
        %1254 = vrot.lane.b32.xlu0 %v1129, 116
        %v1255 = vpop.permute.xlu0 %1254
        %1256 = vrot.lane.b32.xlu0 %v1123, 84
        %v1257 = vpop.permute.xlu0 %1256
        %1258 = vrot.lane.b32.xlu0 %v1126, 84
        %v1259 = vpop.permute.xlu0 %1258
        %v1260 = vsel %vm1140, %v1253, 0
        %v1262 = vsel %vm1140, %v1255, 0
        %v1264 = vsel %vm1140, %v1257, 0
        %v1266 = vsel %vm1140, %v1259, 0
        %1268 = vmatpush.xpose.msra.mxu0 0.0
        %1269 = vmatpush.xpose.msra.mxu0 0.0
        %1270 = vmatpush.xpose.msra.mxu0 0.0
        %1271 = vmatpush.xpose.msra.mxu0 0.0
        %1272 = vmatpush.xpose.msra.mxu0 0.0
        %1273 = vmatpush.xpose.msra.mxu0 0.0
        %1274 = vmatpush.xpose.msra.mxu0 0.0
        %1275 = vmatpush.xpose.msra.mxu0 0.0
        %1276 = vmatpush.xpose.msra.mxu0 0.0
        %1277 = vmatpush.xpose.msra.mxu0 0.0
        %1278 = vmatpush.xpose.msra.mxu0 0.0
        %1279 = vmatpush.xpose.msra.mxu0 0.0
        %1280 = vmatpush.xpose.msra.mxu0 0.0
        %1281 = vmatpush.xpose.msra.mxu0 0.0
        %1282 = vmatpush.xpose.msra.mxu0 %v1266
        %1283 = vmatpush.xpose.msra.mxu0 %v1264
        %1284 = vmatmul.f32.gmra.mxu0 %v1260
        %v1285 = vpop.f32.mrf.mxu0
        %v1286 = vadd.f32 0.0, %v1285
        %1287 = vmatmul.f32.gmra.mxu0 %v1262
        %v1288 = vpop.f32.mrf.mxu0
        %v1289 = vadd.f32 0.0, %v1288
        %1290 = vdwg.mxu0
        %1291 = vrot.lane.b32.xlu0 %v1128, 112
        %v1292 = vpop.permute.xlu0 %1291
        %1293 = vrot.lane.b32.xlu0 %v1129, 112
        %v1294 = vpop.permute.xlu0 %1293
        %1295 = vrot.lane.b32.xlu0 %v1123, 80
        %v1296 = vpop.permute.xlu0 %1295
        %1297 = vrot.lane.b32.xlu0 %v1126, 80
        %v1298 = vpop.permute.xlu0 %1297
        %v1299 = vsel %vm1140, %v1292, 0
        %v1301 = vsel %vm1140, %v1294, 0
        %v1303 = vsel %vm1140, %v1296, 0
        %v1305 = vsel %vm1140, %v1298, 0
        %1307 = vmatpush.xpose.msra.mxu0 0.0
        %1308 = vmatpush.xpose.msra.mxu0 0.0
        %1309 = vmatpush.xpose.msra.mxu0 0.0
        %1310 = vmatpush.xpose.msra.mxu0 0.0
        %1311 = vmatpush.xpose.msra.mxu0 0.0
        %1312 = vmatpush.xpose.msra.mxu0 0.0
        %1313 = vmatpush.xpose.msra.mxu0 0.0
        %1314 = vmatpush.xpose.msra.mxu0 0.0
        %1315 = vmatpush.xpose.msra.mxu0 0.0
        %1316 = vmatpush.xpose.msra.mxu0 0.0
        %1317 = vmatpush.xpose.msra.mxu0 0.0
        %1318 = vmatpush.xpose.msra.mxu0 0.0
        %1319 = vmatpush.xpose.msra.mxu0 0.0
        %1320 = vmatpush.xpose.msra.mxu0 0.0
        %1321 = vmatpush.xpose.msra.mxu0 %v1305
        %1322 = vmatpush.xpose.msra.mxu0 %v1303
        %1323 = vmatmul.f32.gmra.mxu0 %v1299
        %v1324 = vpop.f32.mrf.mxu0
        %v1325 = vadd.f32 0.0, %v1324
        %1326 = vmatmul.f32.gmra.mxu0 %v1301
        %v1327 = vpop.f32.mrf.mxu0
        %v1328 = vadd.f32 0.0, %v1327
        %1329 = vdwg.mxu0
        %1330 = vrot.lane.b32.xlu0 %v1128, 108
        %v1331 = vpop.permute.xlu0 %1330
        %1332 = vrot.lane.b32.xlu0 %v1129, 108
        %v1333 = vpop.permute.xlu0 %1332
        %1334 = vrot.lane.b32.xlu0 %v1123, 76
        %v1335 = vpop.permute.xlu0 %1334
        %1336 = vrot.lane.b32.xlu0 %v1126, 76
        %v1337 = vpop.permute.xlu0 %1336
        %v1338 = vsel %vm1140, %v1331, 0
        %v1340 = vsel %vm1140, %v1333, 0
        %v1342 = vsel %vm1140, %v1335, 0
        %v1344 = vsel %vm1140, %v1337, 0
        %1346 = vmatpush.xpose.msra.mxu0 0.0
        %1347 = vmatpush.xpose.msra.mxu0 0.0
        %1348 = vmatpush.xpose.msra.mxu0 0.0
        %1349 = vmatpush.xpose.msra.mxu0 0.0
        %1350 = vmatpush.xpose.msra.mxu0 0.0
        %1351 = vmatpush.xpose.msra.mxu0 0.0
        %1352 = vmatpush.xpose.msra.mxu0 0.0
        %1353 = vmatpush.xpose.msra.mxu0 0.0
        %1354 = vmatpush.xpose.msra.mxu0 0.0
        %1355 = vmatpush.xpose.msra.mxu0 0.0
        %1356 = vmatpush.xpose.msra.mxu0 0.0
        %1357 = vmatpush.xpose.msra.mxu0 0.0
        %1358 = vmatpush.xpose.msra.mxu0 0.0
        %1359 = vmatpush.xpose.msra.mxu0 0.0
        %1360 = vmatpush.xpose.msra.mxu0 %v1344
        %1361 = vmatpush.xpose.msra.mxu0 %v1342
        %1362 = vmatmul.f32.gmra.mxu0 %v1338
        %v1363 = vpop.f32.mrf.mxu0
        %v1364 = vadd.f32 0.0, %v1363
        %1365 = vmatmul.f32.gmra.mxu0 %v1340
        %v1366 = vpop.f32.mrf.mxu0
        %v1367 = vadd.f32 0.0, %v1366
        %1368 = vdwg.mxu0
        %1369 = vrot.lane.b32.xlu0 %v1128, 104
        %v1370 = vpop.permute.xlu0 %1369
        %1371 = vrot.lane.b32.xlu0 %v1129, 104
        %v1372 = vpop.permute.xlu0 %1371
        %1373 = vrot.lane.b32.xlu0 %v1123, 72
        %v1374 = vpop.permute.xlu0 %1373
        %1375 = vrot.lane.b32.xlu0 %v1126, 72
        %v1376 = vpop.permute.xlu0 %1375
        %v1377 = vsel %vm1140, %v1370, 0
        %v1379 = vsel %vm1140, %v1372, 0
        %v1381 = vsel %vm1140, %v1374, 0
        %v1383 = vsel %vm1140, %v1376, 0
        %1385 = vmatpush.xpose.msra.mxu0 0.0
        %1386 = vmatpush.xpose.msra.mxu0 0.0
        %1387 = vmatpush.xpose.msra.mxu0 0.0
        %1388 = vmatpush.xpose.msra.mxu0 0.0
        %1389 = vmatpush.xpose.msra.mxu0 0.0
        %1390 = vmatpush.xpose.msra.mxu0 0.0
        %1391 = vmatpush.xpose.msra.mxu0 0.0
        %1392 = vmatpush.xpose.msra.mxu0 0.0
        %1393 = vmatpush.xpose.msra.mxu0 0.0
        %1394 = vmatpush.xpose.msra.mxu0 0.0
        %1395 = vmatpush.xpose.msra.mxu0 0.0
        %1396 = vmatpush.xpose.msra.mxu0 0.0
        %1397 = vmatpush.xpose.msra.mxu0 0.0
        %1398 = vmatpush.xpose.msra.mxu0 0.0
        %1399 = vmatpush.xpose.msra.mxu0 %v1383
        %1400 = vmatpush.xpose.msra.mxu0 %v1381
        %1401 = vmatmul.f32.gmra.mxu0 %v1377
        %v1402 = vpop.f32.mrf.mxu0
        %v1403 = vadd.f32 0.0, %v1402
        %1404 = vmatmul.f32.gmra.mxu0 %v1379
        %v1405 = vpop.f32.mrf.mxu0
        %v1406 = vadd.f32 0.0, %v1405
        %1407 = vdwg.mxu0
        %1408 = vrot.lane.b32.xlu0 %v1128, 100
        %v1409 = vpop.permute.xlu0 %1408
        %1410 = vrot.lane.b32.xlu0 %v1129, 100
        %v1411 = vpop.permute.xlu0 %1410
        %1412 = vrot.lane.b32.xlu0 %v1123, 68
        %v1413 = vpop.permute.xlu0 %1412
        %1414 = vrot.lane.b32.xlu0 %v1126, 68
        %v1415 = vpop.permute.xlu0 %1414
        %v1416 = vsel %vm1140, %v1409, 0
        %v1418 = vsel %vm1140, %v1411, 0
        %v1420 = vsel %vm1140, %v1413, 0
        %v1422 = vsel %vm1140, %v1415, 0
        %1424 = vmatpush.xpose.msra.mxu0 0.0
        %1425 = vmatpush.xpose.msra.mxu0 0.0
        %1426 = vmatpush.xpose.msra.mxu0 0.0
        %1427 = vmatpush.xpose.msra.mxu0 0.0
        %1428 = vmatpush.xpose.msra.mxu0 0.0
        %1429 = vmatpush.xpose.msra.mxu0 0.0
        %1430 = vmatpush.xpose.msra.mxu0 0.0
        %1431 = vmatpush.xpose.msra.mxu0 0.0
        %1432 = vmatpush.xpose.msra.mxu0 0.0
        %1433 = vmatpush.xpose.msra.mxu0 0.0
        %1434 = vmatpush.xpose.msra.mxu0 0.0
        %1435 = vmatpush.xpose.msra.mxu0 0.0
        %1436 = vmatpush.xpose.msra.mxu0 0.0
        %1437 = vmatpush.xpose.msra.mxu0 0.0
        %1438 = vmatpush.xpose.msra.mxu0 %v1422
        %1439 = vmatpush.xpose.msra.mxu0 %v1420
        %1440 = vmatmul.f32.gmra.mxu0 %v1416
        %v1441 = vpop.f32.mrf.mxu0
        %v1442 = vadd.f32 0.0, %v1441
        %1443 = vmatmul.f32.gmra.mxu0 %v1418
        %v1444 = vpop.f32.mrf.mxu0
        %v1445 = vadd.f32 0.0, %v1444
        %1446 = vdwg.mxu0
        %v1447 = vadd.f32 %v1169, %v1132
        %v1448 = vadd.f32 %v1172, %v1132
        %v1449 = vadd.f32 %v1208, %v1132
        %v1450 = vadd.f32 %v1211, %v1132
        %v1451 = vadd.f32 %v1247, %v1132
        %v1452 = vadd.f32 %v1250, %v1132
        %v1453 = vadd.f32 %v1286, %v1132
        %v1454 = vadd.f32 %v1289, %v1132
        %v1455 = vadd.f32 %v1325, %v1132
        %v1456 = vadd.f32 %v1328, %v1132
        %v1457 = vadd.f32 %v1364, %v1132
        %v1458 = vadd.f32 %v1367, %v1132
        %v1459 = vadd.f32 %v1403, %v1132
        %v1460 = vadd.f32 %v1406, %v1132
        %v1461 = vadd.f32 %v1442, %v1132
        %v1462 = vadd.f32 %v1445, %v1132
        %vm1463 = vcmask 130048
        %v1464 = vsel %vm1463, %v1447, -inf
        %1465 = vmax.xlane.f32.xlu0 %v1464
        %v1466 = vpop.xlane.xlu0 %1465
        %v1467 = vsel %vm1463, %v1448, -inf
        %1468 = vmax.xlane.f32.xlu0 %v1467
        %v1469 = vpop.xlane.xlu0 %1468
        %v1470 = vsel %vm1463, %v1449, -inf
        %1471 = vmax.xlane.f32.xlu0 %v1470
        %v1472 = vpop.xlane.xlu0 %1471
        %v1473 = vsel %vm1463, %v1450, -inf
        %1474 = vmax.xlane.f32.xlu0 %v1473
        %v1475 = vpop.xlane.xlu0 %1474
        %v1476 = vsel %vm1463, %v1451, -inf
        %1477 = vmax.xlane.f32.xlu0 %v1476
        %v1478 = vpop.xlane.xlu0 %1477
        %v1479 = vsel %vm1463, %v1452, -inf
        %1480 = vmax.xlane.f32.xlu0 %v1479
        %v1481 = vpop.xlane.xlu0 %1480
        %v1482 = vsel %vm1463, %v1453, -inf
        %1483 = vmax.xlane.f32.xlu0 %v1482
        %v1484 = vpop.xlane.xlu0 %1483
        %v1485 = vsel %vm1463, %v1454, -inf
        %1486 = vmax.xlane.f32.xlu0 %v1485
        %v1487 = vpop.xlane.xlu0 %1486
        %v1488 = vsel %vm1463, %v1455, -inf
        %1489 = vmax.xlane.f32.xlu0 %v1488
        %v1490 = vpop.xlane.xlu0 %1489
        %v1491 = vsel %vm1463, %v1456, -inf
        %1492 = vmax.xlane.f32.xlu0 %v1491
        %v1493 = vpop.xlane.xlu0 %1492
        %v1494 = vsel %vm1463, %v1457, -inf
        %1495 = vmax.xlane.f32.xlu0 %v1494
        %v1496 = vpop.xlane.xlu0 %1495
        %v1497 = vsel %vm1463, %v1458, -inf
        %1498 = vmax.xlane.f32.xlu0 %v1497
        %v1499 = vpop.xlane.xlu0 %1498
        %v1500 = vsel %vm1463, %v1459, -inf
        %1501 = vmax.xlane.f32.xlu0 %v1500
        %v1502 = vpop.xlane.xlu0 %1501
        %v1503 = vsel %vm1463, %v1460, -inf
        %1504 = vmax.xlane.f32.xlu0 %v1503
        %v1505 = vpop.xlane.xlu0 %1504
        %v1506 = vsel %vm1463, %v1461, -inf
        %1507 = vmax.xlane.f32.xlu0 %v1506
        %v1508 = vpop.xlane.xlu0 %1507
        %v1509 = vsel %vm1463, %v1462, -inf
        %1510 = vmax.xlane.f32.xlu0 %v1509
        %v1511 = vpop.xlane.xlu0 %1510
        %v1512 = vsub.f32 %v1447, %v1466
        %v1513 = vsub.f32 %v1448, %v1469
        %v1514 = vsub.f32 %v1449, %v1472
        %v1515 = vsub.f32 %v1450, %v1475
        %v1516 = vsub.f32 %v1451, %v1478
        %v1517 = vsub.f32 %v1452, %v1481
        %v1518 = vsub.f32 %v1453, %v1484
        %v1519 = vsub.f32 %v1454, %v1487
        %v1520 = vsub.f32 %v1455, %v1490
        %v1521 = vsub.f32 %v1456, %v1493
        %v1522 = vsub.f32 %v1457, %v1496
        %v1523 = vsub.f32 %v1458, %v1499
        %v1524 = vsub.f32 %v1459, %v1502
        %v1525 = vsub.f32 %v1460, %v1505
        %v1526 = vsub.f32 %v1461, %v1508
        %v1527 = vsub.f32 %v1462, %v1511
        %v1528 = vmul.f32 %v1512, 1.442695
        %v1529 = vpow.pop %v1528
        %v1530 = vmul.f32 %v1513, 1.442695
        %v1531 = vpow.pop %v1530
        %v1532 = vmul.f32 %v1514, 1.442695
        %v1533 = vpow.pop %v1532
        %v1534 = vmul.f32 %v1515, 1.442695
        %v1535 = vpow.pop %v1534
        %v1536 = vmul.f32 %v1516, 1.442695
        %v1537 = vpow.pop %v1536
        %v1538 = vmul.f32 %v1517, 1.442695
        %v1539 = vpow.pop %v1538
        %v1540 = vmul.f32 %v1518, 1.442695
        %v1541 = vpow.pop %v1540
        %v1542 = vmul.f32 %v1519, 1.442695
        %v1543 = vpow.pop %v1542
        %v1544 = vmul.f32 %v1520, 1.442695
        %v1545 = vpow.pop %v1544
        %v1546 = vmul.f32 %v1521, 1.442695
        %v1547 = vpow.pop %v1546
        %v1548 = vmul.f32 %v1522, 1.442695
        %v1549 = vpow.pop %v1548
        %v1550 = vmul.f32 %v1523, 1.442695
        %v1551 = vpow.pop %v1550
        %v1552 = vmul.f32 %v1524, 1.442695
        %v1553 = vpow.pop %v1552
        %v1554 = vmul.f32 %v1525, 1.442695
        %v1555 = vpow.pop %v1554
        %v1556 = vmul.f32 %v1526, 1.442695
        %v1557 = vpow.pop %v1556
        %v1558 = vmul.f32 %v1527, 1.442695
        %v1559 = vpow.pop %v1558
        %v1560 = vsel %vm1463, %v1529, 0.0
        %1561 = vadd.xlane.f32.xlu0 %v1560
        %v1562 = vpop.xlane.xlu0 %1561
        %v1563 = vsel %vm1463, %v1531, 0.0
        %1564 = vadd.xlane.f32.xlu0 %v1563
        %v1565 = vpop.xlane.xlu0 %1564
        %v1566 = vsel %vm1463, %v1533, 0.0
        %1567 = vadd.xlane.f32.xlu0 %v1566
        %v1568 = vpop.xlane.xlu0 %1567
        %v1569 = vsel %vm1463, %v1535, 0.0
        %1570 = vadd.xlane.f32.xlu0 %v1569
        %v1571 = vpop.xlane.xlu0 %1570
        %v1572 = vsel %vm1463, %v1537, 0.0
        %1573 = vadd.xlane.f32.xlu0 %v1572
        %v1574 = vpop.xlane.xlu0 %1573
        %v1575 = vsel %vm1463, %v1539, 0.0
        %1576 = vadd.xlane.f32.xlu0 %v1575
        %v1577 = vpop.xlane.xlu0 %1576
        %v1578 = vsel %vm1463, %v1541, 0.0
        %1579 = vadd.xlane.f32.xlu0 %v1578
        %v1580 = vpop.xlane.xlu0 %1579
        %v1581 = vsel %vm1463, %v1543, 0.0
        %1582 = vadd.xlane.f32.xlu0 %v1581
        %v1583 = vpop.xlane.xlu0 %1582
        %v1584 = vsel %vm1463, %v1545, 0.0
        %1585 = vadd.xlane.f32.xlu0 %v1584
        %v1586 = vpop.xlane.xlu0 %1585
        %v1587 = vsel %vm1463, %v1547, 0.0
        %1588 = vadd.xlane.f32.xlu0 %v1587
        %v1589 = vpop.xlane.xlu0 %1588
        %v1590 = vsel %vm1463, %v1549, 0.0
        %1591 = vadd.xlane.f32.xlu0 %v1590
        %v1592 = vpop.xlane.xlu0 %1591
        %v1593 = vsel %vm1463, %v1551, 0.0
        %1594 = vadd.xlane.f32.xlu0 %v1593
        %v1595 = vpop.xlane.xlu0 %1594
        %v1596 = vsel %vm1463, %v1553, 0.0
        %1597 = vadd.xlane.f32.xlu0 %v1596
        %v1598 = vpop.xlane.xlu0 %1597
        %v1599 = vsel %vm1463, %v1555, 0.0
        %1600 = vadd.xlane.f32.xlu0 %v1599
        %v1601 = vpop.xlane.xlu0 %1600
        %v1602 = vsel %vm1463, %v1557, 0.0
        %1603 = vadd.xlane.f32.xlu0 %v1602
        %v1604 = vpop.xlane.xlu0 %1603
        %v1605 = vsel %vm1463, %v1559, 0.0
        %1606 = vadd.xlane.f32.xlu0 %v1605
        %v1607 = vpop.xlane.xlu0 %1606
        %v1608 = vrcp.pop %v1562
        %v1609 = vrcp.pop %v1565
        %v1610 = vrcp.pop %v1568
        %v1611 = vrcp.pop %v1571
        %v1612 = vrcp.pop %v1574
        %v1613 = vrcp.pop %v1577
        %v1614 = vrcp.pop %v1580
        %v1615 = vrcp.pop %v1583
        %v1616 = vrcp.pop %v1586
        %v1617 = vrcp.pop %v1589
        %v1618 = vrcp.pop %v1592
        %v1619 = vrcp.pop %v1595
        %v1620 = vrcp.pop %v1598
        %v1621 = vrcp.pop %v1601
        %v1622 = vrcp.pop %v1604
        %v1623 = vrcp.pop %v1607
        %v1624 = vmul.f32 %v1529, %v1608
        %v1625 = vmul.f32 %v1531, %v1609
        %v1626 = vmul.f32 %v1533, %v1610
        %v1627 = vmul.f32 %v1535, %v1611
        %v1628 = vmul.f32 %v1537, %v1612
        %v1629 = vmul.f32 %v1539, %v1613
        %v1630 = vmul.f32 %v1541, %v1614
        %v1631 = vmul.f32 %v1543, %v1615
        %v1632 = vmul.f32 %v1545, %v1616
        %v1633 = vmul.f32 %v1547, %v1617
        %v1634 = vmul.f32 %v1549, %v1618
        %v1635 = vmul.f32 %v1551, %v1619
        %v1636 = vmul.f32 %v1553, %v1620
        %v1637 = vmul.f32 %v1555, %v1621
        %v1638 = vmul.f32 %v1557, %v1622
        %v1639 = vmul.f32 %v1559, %v1623
        %1640 = vrot.lane.b32.xlu0 %v1123, 64
        %v1641 = vpop.permute.xlu0 %1640
        %1642 = vrot.lane.b32.xlu0 %v1126, 64
        %v1643 = vpop.permute.xlu0 %1642
        %v1647 = vsel %vm1463, %v1624, 0
        %v1650 = vsel %vm1463, %v1625, 0
        %1652 = vmatpush.msra.mxu0 0.0
        %1653 = vmatpush.msra.mxu0 0.0
        %1654 = vmatpush.msra.mxu0 0.0
        %1655 = vmatpush.msra.mxu0 0.0
        %1656 = vmatpush.msra.mxu0 0.0
        %1657 = vmatpush.msra.mxu0 0.0
        %1658 = vmatpush.msra.mxu0 0.0
        %1659 = vmatpush.msra.mxu0 0.0
        %1660 = vmatpush.msra.mxu0 0.0
        %1661 = vmatpush.msra.mxu0 0.0
        %1662 = vmatpush.msra.mxu0 0.0
        %1663 = vmatpush.msra.mxu0 0.0
        %1664 = vmatpush.msra.mxu0 0.0
        %1665 = vmatpush.msra.mxu0 0.0
        %1666 = vmatpush.msra.mxu0 %v1643
        %1667 = vmatpush.msra.mxu0 %v1641
        %1668 = vmatmul.f32.gmra.mxu0 %v1647
        %v1669 = vpop.f32.mrf.mxu0
        %v1670 = vadd.f32 0.0, %v1669
        %1671 = vmatmul.f32.gmra.mxu0 %v1650
        %v1672 = vpop.f32.mrf.mxu0
        %v1673 = vadd.f32 0.0, %v1672
        %1674 = vdwg.mxu0
        %1675 = vrot.lane.b32.xlu0 %v1123, 60
        %v1676 = vpop.permute.xlu0 %1675
        %1677 = vrot.lane.b32.xlu0 %v1126, 60
        %v1678 = vpop.permute.xlu0 %1677
        %v1682 = vsel %vm1463, %v1626, 0
        %v1685 = vsel %vm1463, %v1627, 0
        %1687 = vmatpush.msra.mxu0 0.0
        %1688 = vmatpush.msra.mxu0 0.0
        %1689 = vmatpush.msra.mxu0 0.0
        %1690 = vmatpush.msra.mxu0 0.0
        %1691 = vmatpush.msra.mxu0 0.0
        %1692 = vmatpush.msra.mxu0 0.0
        %1693 = vmatpush.msra.mxu0 0.0
        %1694 = vmatpush.msra.mxu0 0.0
        %1695 = vmatpush.msra.mxu0 0.0
        %1696 = vmatpush.msra.mxu0 0.0
        %1697 = vmatpush.msra.mxu0 0.0
        %1698 = vmatpush.msra.mxu0 0.0
        %1699 = vmatpush.msra.mxu0 0.0
        %1700 = vmatpush.msra.mxu0 0.0
        %1701 = vmatpush.msra.mxu0 %v1678
        %1702 = vmatpush.msra.mxu0 %v1676
        %1703 = vmatmul.f32.gmra.mxu0 %v1682
        %v1704 = vpop.f32.mrf.mxu0
        %v1705 = vadd.f32 0.0, %v1704
        %1706 = vmatmul.f32.gmra.mxu0 %v1685
        %v1707 = vpop.f32.mrf.mxu0
        %v1708 = vadd.f32 0.0, %v1707
        %1709 = vdwg.mxu0
        %1710 = vrot.lane.b32.xlu0 %v1123, 56
        %v1711 = vpop.permute.xlu0 %1710
        %1712 = vrot.lane.b32.xlu0 %v1126, 56
        %v1713 = vpop.permute.xlu0 %1712
        %v1717 = vsel %vm1463, %v1628, 0
        %v1720 = vsel %vm1463, %v1629, 0
        %1722 = vmatpush.msra.mxu0 0.0
        %1723 = vmatpush.msra.mxu0 0.0
        %1724 = vmatpush.msra.mxu0 0.0
        %1725 = vmatpush.msra.mxu0 0.0
        %1726 = vmatpush.msra.mxu0 0.0
        %1727 = vmatpush.msra.mxu0 0.0
        %1728 = vmatpush.msra.mxu0 0.0
        %1729 = vmatpush.msra.mxu0 0.0
        %1730 = vmatpush.msra.mxu0 0.0
        %1731 = vmatpush.msra.mxu0 0.0
        %1732 = vmatpush.msra.mxu0 0.0
        %1733 = vmatpush.msra.mxu0 0.0
        %1734 = vmatpush.msra.mxu0 0.0
        %1735 = vmatpush.msra.mxu0 0.0
        %1736 = vmatpush.msra.mxu0 %v1713
        %1737 = vmatpush.msra.mxu0 %v1711
        %1738 = vmatmul.f32.gmra.mxu0 %v1717
        %v1739 = vpop.f32.mrf.mxu0
        %v1740 = vadd.f32 0.0, %v1739
        %1741 = vmatmul.f32.gmra.mxu0 %v1720
        %v1742 = vpop.f32.mrf.mxu0
        %v1743 = vadd.f32 0.0, %v1742
        %1744 = vdwg.mxu0
        %1745 = vrot.lane.b32.xlu0 %v1123, 52
        %v1746 = vpop.permute.xlu0 %1745
        %1747 = vrot.lane.b32.xlu0 %v1126, 52
        %v1748 = vpop.permute.xlu0 %1747
        %v1752 = vsel %vm1463, %v1630, 0
        %v1755 = vsel %vm1463, %v1631, 0
        %1757 = vmatpush.msra.mxu0 0.0
        %1758 = vmatpush.msra.mxu0 0.0
        %1759 = vmatpush.msra.mxu0 0.0
        %1760 = vmatpush.msra.mxu0 0.0
        %1761 = vmatpush.msra.mxu0 0.0
        %1762 = vmatpush.msra.mxu0 0.0
        %1763 = vmatpush.msra.mxu0 0.0
        %1764 = vmatpush.msra.mxu0 0.0
        %1765 = vmatpush.msra.mxu0 0.0
        %1766 = vmatpush.msra.mxu0 0.0
        %1767 = vmatpush.msra.mxu0 0.0
        %1768 = vmatpush.msra.mxu0 0.0
        %1769 = vmatpush.msra.mxu0 0.0
        %1770 = vmatpush.msra.mxu0 0.0
        %1771 = vmatpush.msra.mxu0 %v1748
        %1772 = vmatpush.msra.mxu0 %v1746
        %1773 = vmatmul.f32.gmra.mxu0 %v1752
        %v1774 = vpop.f32.mrf.mxu0
        %v1775 = vadd.f32 0.0, %v1774
        %1776 = vmatmul.f32.gmra.mxu0 %v1755
        %v1777 = vpop.f32.mrf.mxu0
        %v1778 = vadd.f32 0.0, %v1777
        %1779 = vdwg.mxu0
        %1780 = vrot.lane.b32.xlu0 %v1123, 48
        %v1781 = vpop.permute.xlu0 %1780
        %1782 = vrot.lane.b32.xlu0 %v1126, 48
        %v1783 = vpop.permute.xlu0 %1782
        %v1787 = vsel %vm1463, %v1632, 0
        %v1790 = vsel %vm1463, %v1633, 0
        %1792 = vmatpush.msra.mxu0 0.0
        %1793 = vmatpush.msra.mxu0 0.0
        %1794 = vmatpush.msra.mxu0 0.0
        %1795 = vmatpush.msra.mxu0 0.0
        %1796 = vmatpush.msra.mxu0 0.0
        %1797 = vmatpush.msra.mxu0 0.0
        %1798 = vmatpush.msra.mxu0 0.0
        %1799 = vmatpush.msra.mxu0 0.0
        %1800 = vmatpush.msra.mxu0 0.0
        %1801 = vmatpush.msra.mxu0 0.0
        %1802 = vmatpush.msra.mxu0 0.0
        %1803 = vmatpush.msra.mxu0 0.0
        %1804 = vmatpush.msra.mxu0 0.0
        %1805 = vmatpush.msra.mxu0 0.0
        %1806 = vmatpush.msra.mxu0 %v1783
        %1807 = vmatpush.msra.mxu0 %v1781
        %1808 = vmatmul.f32.gmra.mxu0 %v1787
        %v1809 = vpop.f32.mrf.mxu0
        %v1810 = vadd.f32 0.0, %v1809
        %1811 = vmatmul.f32.gmra.mxu0 %v1790
        %v1812 = vpop.f32.mrf.mxu0
        %v1813 = vadd.f32 0.0, %v1812
        %1814 = vdwg.mxu0
        %1815 = vrot.lane.b32.xlu0 %v1123, 44
        %v1816 = vpop.permute.xlu0 %1815
        %1817 = vrot.lane.b32.xlu0 %v1126, 44
        %v1818 = vpop.permute.xlu0 %1817
        %v1822 = vsel %vm1463, %v1634, 0
        %v1825 = vsel %vm1463, %v1635, 0
        %1827 = vmatpush.msra.mxu0 0.0
        %1828 = vmatpush.msra.mxu0 0.0
        %1829 = vmatpush.msra.mxu0 0.0
        %1830 = vmatpush.msra.mxu0 0.0
        %1831 = vmatpush.msra.mxu0 0.0
        %1832 = vmatpush.msra.mxu0 0.0
        %1833 = vmatpush.msra.mxu0 0.0
        %1834 = vmatpush.msra.mxu0 0.0
        %1835 = vmatpush.msra.mxu0 0.0
        %1836 = vmatpush.msra.mxu0 0.0
        %1837 = vmatpush.msra.mxu0 0.0
        %1838 = vmatpush.msra.mxu0 0.0
        %1839 = vmatpush.msra.mxu0 0.0
        %1840 = vmatpush.msra.mxu0 0.0
        %1841 = vmatpush.msra.mxu0 %v1818
        %1842 = vmatpush.msra.mxu0 %v1816
        %1843 = vmatmul.f32.gmra.mxu0 %v1822
        %v1844 = vpop.f32.mrf.mxu0
        %v1845 = vadd.f32 0.0, %v1844
        %1846 = vmatmul.f32.gmra.mxu0 %v1825
        %v1847 = vpop.f32.mrf.mxu0
        %v1848 = vadd.f32 0.0, %v1847
        %1849 = vdwg.mxu0
        %1850 = vrot.lane.b32.xlu0 %v1123, 40
        %v1851 = vpop.permute.xlu0 %1850
        %1852 = vrot.lane.b32.xlu0 %v1126, 40
        %v1853 = vpop.permute.xlu0 %1852
        %v1857 = vsel %vm1463, %v1636, 0
        %v1860 = vsel %vm1463, %v1637, 0
        %1862 = vmatpush.msra.mxu0 0.0
        %1863 = vmatpush.msra.mxu0 0.0
        %1864 = vmatpush.msra.mxu0 0.0
        %1865 = vmatpush.msra.mxu0 0.0
        %1866 = vmatpush.msra.mxu0 0.0
        %1867 = vmatpush.msra.mxu0 0.0
        %1868 = vmatpush.msra.mxu0 0.0
        %1869 = vmatpush.msra.mxu0 0.0
        %1870 = vmatpush.msra.mxu0 0.0
        %1871 = vmatpush.msra.mxu0 0.0
        %1872 = vmatpush.msra.mxu0 0.0
        %1873 = vmatpush.msra.mxu0 0.0
        %1874 = vmatpush.msra.mxu0 0.0
        %1875 = vmatpush.msra.mxu0 0.0
        %1876 = vmatpush.msra.mxu0 %v1853
        %1877 = vmatpush.msra.mxu0 %v1851
        %1878 = vmatmul.f32.gmra.mxu0 %v1857
        %v1879 = vpop.f32.mrf.mxu0
        %v1880 = vadd.f32 0.0, %v1879
        %1881 = vmatmul.f32.gmra.mxu0 %v1860
        %v1882 = vpop.f32.mrf.mxu0
        %v1883 = vadd.f32 0.0, %v1882
        %1884 = vdwg.mxu0
        %1885 = vrot.lane.b32.xlu0 %v1123, 36
        %v1886 = vpop.permute.xlu0 %1885
        %1887 = vrot.lane.b32.xlu0 %v1126, 36
        %v1888 = vpop.permute.xlu0 %1887
        %v1892 = vsel %vm1463, %v1638, 0
        %v1895 = vsel %vm1463, %v1639, 0
        %1897 = vmatpush.msra.mxu0 0.0
        %1898 = vmatpush.msra.mxu0 0.0
        %1899 = vmatpush.msra.mxu0 0.0
        %1900 = vmatpush.msra.mxu0 0.0
        %1901 = vmatpush.msra.mxu0 0.0
        %1902 = vmatpush.msra.mxu0 0.0
        %1903 = vmatpush.msra.mxu0 0.0
        %1904 = vmatpush.msra.mxu0 0.0
        %1905 = vmatpush.msra.mxu0 0.0
        %1906 = vmatpush.msra.mxu0 0.0
        %1907 = vmatpush.msra.mxu0 0.0
        %1908 = vmatpush.msra.mxu0 0.0
        %1909 = vmatpush.msra.mxu0 0.0
        %1910 = vmatpush.msra.mxu0 0.0
        %1911 = vmatpush.msra.mxu0 %v1888
        %1912 = vmatpush.msra.mxu0 %v1886
        %1913 = vmatmul.f32.gmra.mxu0 %v1892
        %v1914 = vpop.f32.mrf.mxu0
        %v1915 = vadd.f32 0.0, %v1914
        %1916 = vmatmul.f32.gmra.mxu0 %v1895
        %v1917 = vpop.f32.mrf.mxu0
        %v1918 = vadd.f32 0.0, %v1917
        %1919 = vdwg.mxu0
        %1922 = vrot.lane.b32.xlu0 %v1705, 4
        %v1923 = vpop.permute.xlu0 %1922
        %1924 = vrot.lane.b32.xlu0 %v1708, 4
        %v1925 = vpop.permute.xlu0 %1924
        %1930 = vrot.lane.b32.xlu0 %v1740, 8
        %v1931 = vpop.permute.xlu0 %1930
        %1932 = vrot.lane.b32.xlu0 %v1743, 8
        %v1933 = vpop.permute.xlu0 %1932
        %1938 = vrot.lane.b32.xlu0 %v1775, 12
        %v1939 = vpop.permute.xlu0 %1938
        %1940 = vrot.lane.b32.xlu0 %v1778, 12
        %v1941 = vpop.permute.xlu0 %1940
        %1946 = vrot.lane.b32.xlu0 %v1810, 16
        %v1947 = vpop.permute.xlu0 %1946
        %1948 = vrot.lane.b32.xlu0 %v1813, 16
        %v1949 = vpop.permute.xlu0 %1948
        %1954 = vrot.lane.b32.xlu0 %v1845, 20
        %v1955 = vpop.permute.xlu0 %1954
        %1956 = vrot.lane.b32.xlu0 %v1848, 20
        %v1957 = vpop.permute.xlu0 %1956
        %1962 = vrot.lane.b32.xlu0 %v1880, 24
        %v1963 = vpop.permute.xlu0 %1962
        %1964 = vrot.lane.b32.xlu0 %v1883, 24
        %v1965 = vpop.permute.xlu0 %1964
        %1970 = vrot.lane.b32.xlu0 %v1915, 28
        %v1971 = vpop.permute.xlu0 %1970
        %1972 = vrot.lane.b32.xlu0 %v1918, 28
        %v1973 = vpop.permute.xlu0 %1972
        %v1976 = vsel %vm1140, %v1670, %v1923
        %v1977 = vsel %vm1140, %v1673, %v1925
        %vm1978 = vcmask 64512
        %v1979 = vsel %vm1978, %v1976, %v1931
        %v1980 = vsel %vm1978, %v1977, %v1933
        %vm1981 = vcmask 97280
        %v1982 = vsel %vm1981, %v1979, %v1939
        %v1983 = vsel %vm1981, %v1980, %v1941
        %v1984 = vsel %vm1463, %v1982, %v1947
        %v1985 = vsel %vm1463, %v1983, %v1949
        %vm1986 = vcmask 162816
        %v1987 = vsel %vm1986, %v1984, %v1955
        %v1988 = vsel %vm1986, %v1985, %v1957
        %vm1989 = vcmask 195584
        %v1990 = vsel %vm1989, %v1987, %v1963
        %v1991 = vsel %vm1989, %v1988, %v1965
        %vm1992 = vcmask 228352
        %v1993 = vsel %vm1992, %v1990, %v1971
        %v1994 = vsel %vm1992, %v1991, %v1973
        %v1995 = vld [vmem:[%s896] sm:$0xff]
        %v1996 = vld [vmem:[%s896 + $0x8] sm:$0xff]
        %v1997 = vld [vmem:[%s896 + $0x10] sm:$0xff]
        %v1998 = vld [vmem:[%s896 + $0x18] sm:$0xff]
        %v1999 = vld [vmem:[%s899] sm:$0x1]
        %v2001 = vperm.slane %v1999, 0
        %v2004 = vsel %vm1033, %v1993, 0
        %v2007 = vsel %vm1033, %v1994, 0
        %2009 = vmatpush.msra.mxu0 0.0
        %2010 = vmatpush.msra.mxu0 0.0
        %2011 = vmatpush.msra.mxu0 0.0
        %2012 = vmatpush.msra.mxu0 0.0
        %2013 = vmatpush.msra.mxu0 0.0
        %2014 = vmatpush.msra.mxu0 0.0
        %2015 = vmatpush.msra.mxu0 0.0
        %2016 = vmatpush.msra.mxu0 0.0
        %2017 = vmatpush.msra.mxu0 0.0
        %2018 = vmatpush.msra.mxu0 0.0
        %2019 = vmatpush.msra.mxu0 0.0
        %2020 = vmatpush.msra.mxu0 0.0
        %2021 = vmatpush.msra.mxu0 %v1998
        %2022 = vmatpush.msra.mxu0 %v1997
        %2023 = vmatpush.msra.mxu0 %v1996
        %2024 = vmatpush.msra.mxu0 %v1995
        %2025 = vmatmul.f32.gmra.mxu0 %v2004
        %v2026 = vpop.f32.mrf.mxu0
        %v2027 = vadd.f32 %v2001, %v2026
        %2028 = vmatmul.f32.gmra.mxu0 %v2007
        %v2029 = vpop.f32.mrf.mxu0
        %v2030 = vadd.f32 %v2001, %v2029
        %2031 = vdwg.mxu0
        %v2032 = vadd.f32 %v1029, %v2027
        %v2033 = vadd.f32 %v1030, %v2030
        %v2034 = vsel %vm1033, %v2032, 0.0
        %2035 = vadd.xlane.f32.xlu0 %v2034
        %v2036 = vpop.xlane.xlu0 %2035
        %v2037 = vsel %vm1033, %v2033, 0.0
        %2038 = vadd.xlane.f32.xlu0 %v2037
        %v2039 = vpop.xlane.xlu0 %2038
        %v2040 = vmul.f32 %v2036, %v1046
        %v2041 = vmul.f32 %v2039, %v1046
        %v2042 = vsub.f32 %v2032, %v2040
        %v2043 = vsub.f32 %v2033, %v2041
        %v2044 = vmul.f32 %v2042, %v2042
        %v2045 = vmul.f32 %v2043, %v2043
        %v2046 = vsel %vm1033, %v2044, 0.0
        %2047 = vadd.xlane.f32.xlu0 %v2046
        %v2048 = vpop.xlane.xlu0 %2047
        %v2049 = vsel %vm1033, %v2045, 0.0
        %2050 = vadd.xlane.f32.xlu0 %v2049
        %v2051 = vpop.xlane.xlu0 %2050
        %v2052 = vmul.f32 %v2048, %v1046
        %v2053 = vmul.f32 %v2051, %v1046
        %v2054 = vadd.f32 %v2052, 1e-05
        %v2055 = vadd.f32 %v2053, 1e-05
        %v2056 = vrsqrt.pop %v2054
        %v2057 = vmul.f32 %v2056, %v2054
        %v2058 = vmul.f32 %v2057, %v2056
        %v2059 = vmul.f32 0.5, %v2058
        %v2060 = vsub.f32 1.5, %v2059
        %v2061 = vmul.f32 %v2056, %v2060
        %vm2062 = vweird.f32 %v2054
        %vm2063 = vweird.f32 %v2056
        %vm2064 = vmor %vm2062, %vm2063
        %v2065 = vsel %vm2064, %v2056, %v2061
        %v2066 = vrsqrt.pop %v2055
        %v2067 = vmul.f32 %v2066, %v2055
        %v2068 = vmul.f32 %v2067, %v2066
        %v2069 = vmul.f32 0.5, %v2068
        %v2070 = vsub.f32 1.5, %v2069
        %v2071 = vmul.f32 %v2066, %v2070
        %vm2072 = vweird.f32 %v2055
        %vm2073 = vweird.f32 %v2066
        %vm2074 = vmor %vm2072, %vm2073
        %v2075 = vsel %vm2074, %v2066, %v2071
        %v2076 = vmul.f32 %v2042, %v2065
        %v2077 = vmul.f32 %v2043, %v2075
        %v2078 = vperm.slane %v1031, 1
        %v2079 = vmul.f32 %v2076, %v2078
        %v2080 = vmul.f32 %v2077, %v2078
        %v2081 = vperm.slane %v1032, 1
        %v2082 = vadd.f32 %v2079, %v2081
        %v2083 = vadd.f32 %v2080, %v2081
        %v2084 = vld [vmem:[#allocation3] sm:$0xff]
        %v2085 = vld [vmem:[#allocation3 + $0x8] sm:$0xff]
        %2088 = vrot.lane.b32.xlu0 %v2084, 32
        %v2089 = vpop.permute.xlu0 %2088
        %2090 = vrot.lane.b32.xlu0 %v2085, 32
        %v2091 = vpop.permute.xlu0 %2090
        %v2094 = vsel %vm1033, %v2082, %v2089
        %v2095 = vsel %vm1033, %v2083, %v2091
        %v2096 = vld [vmem:[%s904] sm:$0xff]
        %v2097 = vld [vmem:[%s904 + $0x8] sm:$0xff]
        %v2098 = vld [vmem:[%s904 + $0x10] sm:$0xff]
        %v2099 = vld [vmem:[%s904 + $0x18] sm:$0xff]
        %v2100 = vld [vmem:[%s904 + $0x20] sm:$0xff]
        %v2101 = vld [vmem:[%s904 + $0x28] sm:$0xff]
        %v2102 = vld [vmem:[%s904 + $0x30] sm:$0xff]
        %v2103 = vld [vmem:[%s904 + $0x38] sm:$0xff]
        %v2104 = vld [vmem:[%s907] sm:$0x1]
        %v2106 = vperm.slane %v2104, 0
        %vm2108 = vcmask 523264
        %v2110 = vsel %vm2108, %v2094, 0
        %v2113 = vsel %vm2108, %v2095, 0
        %2115 = vmatpush.msra.mxu0 0.0
        %2116 = vmatpush.msra.mxu0 0.0
        %2117 = vmatpush.msra.mxu0 0.0
        %2118 = vmatpush.msra.mxu0 0.0
        %2119 = vmatpush.msra.mxu0 0.0
        %2120 = vmatpush.msra.mxu0 0.0
        %2121 = vmatpush.msra.mxu0 0.0
        %2122 = vmatpush.msra.mxu0 0.0
        %2123 = vmatpush.msra.mxu0 %v2103
        %2124 = vmatpush.msra.mxu0 %v2102
        %2125 = vmatpush.msra.mxu0 %v2101
        %2126 = vmatpush.msra.mxu0 %v2100
        %2127 = vmatpush.msra.mxu0 %v2099
        %2128 = vmatpush.msra.mxu0 %v2098
        %2129 = vmatpush.msra.mxu0 %v2097
        %2130 = vmatpush.msra.mxu0 %v2096
        %2131 = vmatmul.f32.gmra.mxu0 %v2110
        %v2132 = vpop.f32.mrf.mxu0
        %v2133 = vadd.f32 %v2106, %v2132
        %2134 = vmatmul.f32.gmra.mxu0 %v2113
        %v2135 = vpop.f32.mrf.mxu0
        %v2136 = vadd.f32 %v2106, %v2135
        %2137 = vdwg.mxu0
        %v2138 = vxor.u32 %v2133, 2147483648
        %v2139 = vxor.u32 %v2136, 2147483648
        %v2140 = vmul.f32 %v2138, 1.442695
        %v2141 = vpow.pop %v2140
        %v2142 = vmul.f32 %v2139, 1.442695
        %v2143 = vpow.pop %v2142
        %v2144 = vadd.f32 %v2141, 1.0
        %v2145 = vadd.f32 %v2143, 1.0
        %v2146 = vrcp.pop %v2144
        %v2147 = vmul.f32 %v2144, %v2146
        %v2148 = vsub.f32 1.0, %v2147
        %v2149 = vmul.f32 %v2146, %v2148
        %v2150 = vadd.f32 %v2146, %v2149
        %vm2151 = vweird.f32 %v2144
        %vm2152 = vweird.f32 %v2146
        %vm2153 = vmor %vm2151, %vm2152
        %v2154 = vsel %vm2153, %v2146, %v2150
        %v2155 = vand.u32 2147483647, %v2144
        %vm2156 = vcmp.eq.f32.partialorder %v2155, 8.507059e+37
        %v2157 = vand.u32 %v2144, 2147483648
        %v2158 = vor.u32 1.1754944e-38, %v2157
        %v2159 = vsel %vm2156, %v2158, %v2154
        %v2160 = vmul.f32 1.0, %v2159
        %v2161 = vrcp.pop %v2145
        %v2162 = vmul.f32 %v2145, %v2161
        %v2163 = vsub.f32 1.0, %v2162
        %v2164 = vmul.f32 %v2161, %v2163
        %v2165 = vadd.f32 %v2161, %v2164
        %vm2166 = vweird.f32 %v2145
        %vm2167 = vweird.f32 %v2161
        %vm2168 = vmor %vm2166, %vm2167
        %v2169 = vsel %vm2168, %v2161, %v2165
        %v2170 = vand.u32 2147483647, %v2145
        %vm2171 = vcmp.eq.f32.partialorder %v2170, 8.507059e+37
        %v2172 = vand.u32 %v2145, 2147483648
        %v2173 = vor.u32 1.1754944e-38, %v2172
        %v2174 = vsel %vm2171, %v2173, %v2169
        %v2175 = vmul.f32 1.0, %v2174
        %v2176 = vmul.f32 %v2160, %v2082
        %v2177 = vmul.f32 %v2175, %v2083
        %v2178 = vadd.f32 %v2032, %v2176
        %v2179 = vadd.f32 %v2033, %v2177
        %v2180 = vsub.f32 1.0, %v2160
        %v2181 = vsub.f32 1.0, %v2175
        %v2182 = vmul.f32 %v2180, %v2084
        %v2183 = vmul.f32 %v2181, %v2085
        %v2184 = vadd.f32 %v2178, %v2182
        %v2185 = vadd.f32 %v2179, %v2183
        %2186 = vst.msk [vmem:[#allocation2] sm:$0xff] %vm1033, %v2184
        %2187 = vst.msk [vmem:[#allocation2 + $0x8] sm:$0xff] %vm1033, %v2185
        %p2188 = scmp.lt.s32.totalorder %s39, 3
        // Predicated region
        $region105: #{tree_att_encoder.1} parent=99 // pred_check
          %p2189 = pneg %p2188
        $region106: #{tree_att_encoder.1} parent=99 // pred_check_branch
          %2191 = sbr.rel (%p2189) target = $region108
        $region107: #{tree_att_encoder.1} parent=99 // pred_region
          %v2192 = vld [vmem:[#allocation2] sm:$0xff]
          %v2193 = vld [vmem:[#allocation2 + $0x8] sm:$0xff]
          %v2194 = vsel %vm1033, %v2192, 0.0
          %2195 = vadd.xlane.f32.xlu0 %v2194
          %v2196 = vpop.xlane.xlu0 %2195
          %v2197 = vsel %vm1033, %v2193, 0.0
          %2198 = vadd.xlane.f32.xlu0 %v2197
          %v2199 = vpop.xlane.xlu0 %2198
          %v2200 = vmul.f32 %v2196, %v1046
          %v2201 = vmul.f32 %v2199, %v1046
          %v2202 = vsub.f32 %v2192, %v2200
          %v2203 = vsub.f32 %v2193, %v2201
          %v2204 = vmul.f32 %v2202, %v2202
          %v2205 = vmul.f32 %v2203, %v2203
          %v2206 = vsel %vm1033, %v2204, 0.0
          %2207 = vadd.xlane.f32.xlu0 %v2206
          %v2208 = vpop.xlane.xlu0 %2207
          %v2209 = vsel %vm1033, %v2205, 0.0
          %2210 = vadd.xlane.f32.xlu0 %v2209
          %v2211 = vpop.xlane.xlu0 %2210
          %v2212 = vmul.f32 %v2208, %v1046
          %v2213 = vmul.f32 %v2211, %v1046
          %v2214 = vadd.f32 %v2212, 1e-05
          %v2215 = vadd.f32 %v2213, 1e-05
          %v2216 = vrsqrt.pop %v2214
          %v2217 = vmul.f32 %v2216, %v2214
          %v2218 = vmul.f32 %v2217, %v2216
          %v2219 = vmul.f32 0.5, %v2218
          %v2220 = vsub.f32 1.5, %v2219
          %v2221 = vmul.f32 %v2216, %v2220
          %vm2222 = vweird.f32 %v2214
          %vm2223 = vweird.f32 %v2216
          %vm2224 = vmor %vm2222, %vm2223
          %v2225 = vsel %vm2224, %v2216, %v2221
          %v2226 = vrsqrt.pop %v2215
          %v2227 = vmul.f32 %v2226, %v2215
          %v2228 = vmul.f32 %v2227, %v2226
          %v2229 = vmul.f32 0.5, %v2228
          %v2230 = vsub.f32 1.5, %v2229
          %v2231 = vmul.f32 %v2226, %v2230
          %vm2232 = vweird.f32 %v2215
          %vm2233 = vweird.f32 %v2226
          %vm2234 = vmor %vm2232, %vm2233
          %v2235 = vsel %vm2234, %v2226, %v2231
          %v2236 = vmul.f32 %v2202, %v2225
          %v2237 = vmul.f32 %v2203, %v2235
          %v2238 = vperm.slane %v1031, 2
          %v2239 = vmul.f32 %v2236, %v2238
          %v2240 = vmul.f32 %v2237, %v2238
          %v2241 = vperm.slane %v1032, 2
          %v2242 = vadd.f32 %v2239, %v2241
          %v2243 = vadd.f32 %v2240, %v2241
          %v2244 = vld [vmem:[%s875] sm:$0xff]
          %v2245 = vld [vmem:[%s875 + $0x8] sm:$0xff]
          %v2247 = vsel %vm1463, %v2244, 0
          %v2250 = vsel %vm1463, %v2245, 0
          %2252 = vmatpush.msra.mxu0 0.0
          %2253 = vmatpush.msra.mxu0 0.0
          %2254 = vmatpush.msra.mxu0 0.0
          %2255 = vmatpush.msra.mxu0 0.0
          %2256 = vmatpush.msra.mxu0 0.0
          %2257 = vmatpush.msra.mxu0 0.0
          %2258 = vmatpush.msra.mxu0 0.0
          %2259 = vmatpush.msra.mxu0 0.0
          %2260 = vmatpush.msra.mxu0 0.0
          %2261 = vmatpush.msra.mxu0 0.0
          %2262 = vmatpush.msra.mxu0 0.0
          %2263 = vmatpush.msra.mxu0 0.0
          %2264 = vmatpush.msra.mxu0 0.0
          %2265 = vmatpush.msra.mxu0 0.0
          %2266 = vmatpush.msra.mxu0 %v2243
          %2267 = vmatpush.msra.mxu0 %v2242
          %2268 = vmatmul.f32.gmra.mxu0 %v2247
          %v2269 = vpop.f32.mrf.mxu0
          %v2270 = vadd.f32 0.0, %v2269
          %2271 = vmatmul.f32.gmra.mxu0 %v2250
          %v2272 = vpop.f32.mrf.mxu0
          %v2273 = vadd.f32 0.0, %v2272
          %2274 = vdwg.mxu0
          %v2275 = vld [vmem:[%s912] sm:$0xff]
          %v2276 = vld [vmem:[%s912 + $0x8] sm:$0xff]
          %v2277 = vld [vmem:[%s912 + $0x10] sm:$0xff]
          %v2278 = vld [vmem:[%s912 + $0x18] sm:$0xff]
          %v2279 = vld [vmem:[%s915] sm:$0x1]
          %v2281 = vperm.slane %v2279, 0
          %v2284 = vsel %vm1033, %v2270, 0
          %v2287 = vsel %vm1033, %v2273, 0
          %2289 = vmatpush.msra.mxu0 0.0
          %2290 = vmatpush.msra.mxu0 0.0
          %2291 = vmatpush.msra.mxu0 0.0
          %2292 = vmatpush.msra.mxu0 0.0
          %2293 = vmatpush.msra.mxu0 0.0
          %2294 = vmatpush.msra.mxu0 0.0
          %2295 = vmatpush.msra.mxu0 0.0
          %2296 = vmatpush.msra.mxu0 0.0
          %2297 = vmatpush.msra.mxu0 0.0
          %2298 = vmatpush.msra.mxu0 0.0
          %2299 = vmatpush.msra.mxu0 0.0
          %2300 = vmatpush.msra.mxu0 0.0
          %2301 = vmatpush.msra.mxu0 %v2278
          %2302 = vmatpush.msra.mxu0 %v2277
          %2303 = vmatpush.msra.mxu0 %v2276
          %2304 = vmatpush.msra.mxu0 %v2275
          %2305 = vmatmul.f32.gmra.mxu0 %v2284
          %v2306 = vpop.f32.mrf.mxu0
          %v2307 = vadd.f32 %v2281, %v2306
          %2308 = vmatmul.f32.gmra.mxu0 %v2287
          %v2309 = vpop.f32.mrf.mxu0
          %v2310 = vadd.f32 %v2281, %v2309
          %2311 = vdwg.mxu0
          %v2312 = vmul.f32 %v2307, %v2307
          %v2313 = vmul.f32 %v2310, %v2310
          %v2314 = vmul.f32 %v2307, %v2312
          %v2315 = vmul.f32 %v2310, %v2313
          %v2316 = vmul.f32 %v2314, 0.044715
          %v2317 = vmul.f32 %v2315, 0.044715
          %v2318 = vadd.f32 %v2307, %v2316
          %v2319 = vadd.f32 %v2310, %v2317
          %v2320 = vmul.f32 %v2318, 0.7978846
          %v2321 = vmul.f32 %v2319, 0.7978846
          %v2322 = vtanh.pop %v2320
          %v2323 = vtanh.pop %v2321
          %v2324 = vadd.f32 %v2322, 1.0
          %v2325 = vadd.f32 %v2323, 1.0
          %v2326 = vmul.f32 %v2324, 0.5
          %v2327 = vmul.f32 %v2325, 0.5
          %v2328 = vmul.f32 %v2307, %v2326
          %v2329 = vmul.f32 %v2310, %v2327
          %v2330 = vadd.f32 %v2192, %v2328
          %v2331 = vadd.f32 %v2193, %v2329
          %2332 = vst.msk [vmem:[#allocation2] sm:$0xff] %vm1033, %v2330
          %2333 = vst.msk [vmem:[#allocation2 + $0x8] sm:$0xff] %vm1033, %v2331
        $region108: #{tree_att_encoder.1} parent=99 // pred_fallthru
          _
        %v2334 = vld [vmem:[#allocation2] sm:$0xff]
        %v2335 = vld [vmem:[#allocation2 + $0x8] sm:$0xff]
        %v2336 = vsel %vm1033, %v2334, 0.0
        %2337 = vadd.xlane.f32.xlu0 %v2336
        %v2338 = vpop.xlane.xlu0 %2337
        %v2339 = vsel %vm1033, %v2335, 0.0
        %2340 = vadd.xlane.f32.xlu0 %v2339
        %v2341 = vpop.xlane.xlu0 %2340
        %v2342 = vmul.f32 %v2338, %v1046
        %v2343 = vmul.f32 %v2341, %v1046
        %v2344 = vsub.f32 %v2334, %v2342
        %v2345 = vsub.f32 %v2335, %v2343
        %v2346 = vmul.f32 %v2344, %v2344
        %v2347 = vmul.f32 %v2345, %v2345
        %v2348 = vsel %vm1033, %v2346, 0.0
        %2349 = vadd.xlane.f32.xlu0 %v2348
        %v2350 = vpop.xlane.xlu0 %2349
        %v2351 = vsel %vm1033, %v2347, 0.0
        %2352 = vadd.xlane.f32.xlu0 %v2351
        %v2353 = vpop.xlane.xlu0 %2352
        %v2354 = vmul.f32 %v2350, %v1046
        %v2355 = vmul.f32 %v2353, %v1046
        %v2356 = vadd.f32 %v2354, 1e-05
        %v2357 = vadd.f32 %v2355, 1e-05
        %v2358 = vrsqrt.pop %v2356
        %v2359 = vmul.f32 %v2358, %v2356
        %v2360 = vmul.f32 %v2359, %v2358
        %v2361 = vmul.f32 0.5, %v2360
        %v2362 = vsub.f32 1.5, %v2361
        %v2363 = vmul.f32 %v2358, %v2362
        %vm2364 = vweird.f32 %v2356
        %vm2365 = vweird.f32 %v2358
        %vm2366 = vmor %vm2364, %vm2365
        %v2367 = vsel %vm2366, %v2358, %v2363
        %v2368 = vrsqrt.pop %v2357
        %v2369 = vmul.f32 %v2368, %v2357
        %v2370 = vmul.f32 %v2369, %v2368
        %v2371 = vmul.f32 0.5, %v2370
        %v2372 = vsub.f32 1.5, %v2371
        %v2373 = vmul.f32 %v2368, %v2372
        %vm2374 = vweird.f32 %v2357
        %vm2375 = vweird.f32 %v2368
        %vm2376 = vmor %vm2374, %vm2375
        %v2377 = vsel %vm2376, %v2368, %v2373
        %v2378 = vmul.f32 %v2344, %v2367
        %v2379 = vmul.f32 %v2345, %v2377
        %v2380 = vperm.slane %v1031, 3
        %v2381 = vmul.f32 %v2378, %v2380
        %v2382 = vmul.f32 %v2379, %v2380
        %v2383 = vperm.slane %v1032, 3
        %v2384 = vadd.f32 %v2381, %v2383
        %v2385 = vadd.f32 %v2382, %v2383
        %v2386 = vld [vmem:[%s920] sm:$0xff]
        %v2387 = vld [vmem:[%s920 + $0x8] sm:$0xff]
        %v2388 = vld [vmem:[%s920 + $0x10] sm:$0xff]
        %v2389 = vld [vmem:[%s920 + $0x18] sm:$0xff]
        %v2390 = vld [vmem:[%s923] sm:$0x1]
        %v2392 = vperm.slane %v2390, 0
        %v2395 = vsel %vm1033, %v2384, 0
        %v2398 = vsel %vm1033, %v2385, 0
        %2400 = vmatpush.msra.mxu0 0.0
        %2401 = vmatpush.msra.mxu0 0.0
        %2402 = vmatpush.msra.mxu0 0.0
        %2403 = vmatpush.msra.mxu0 0.0
        %2404 = vmatpush.msra.mxu0 0.0
        %2405 = vmatpush.msra.mxu0 0.0
        %2406 = vmatpush.msra.mxu0 0.0
        %2407 = vmatpush.msra.mxu0 0.0
        %2408 = vmatpush.msra.mxu0 0.0
        %2409 = vmatpush.msra.mxu0 0.0
        %2410 = vmatpush.msra.mxu0 0.0
        %2411 = vmatpush.msra.mxu0 0.0
        %2412 = vmatpush.msra.mxu0 %v2389
        %2413 = vmatpush.msra.mxu0 %v2388
        %2414 = vmatpush.msra.mxu0 %v2387
        %2415 = vmatpush.msra.mxu0 %v2386
        %2416 = vmatmul.f32.gmra.mxu0 %v2395
        %v2417 = vpop.f32.mrf.mxu0
        %v2418 = vadd.f32 %v2392, %v2417
        %2419 = vmatmul.f32.gmra.mxu0 %v2398
        %v2420 = vpop.f32.mrf.mxu0
        %v2421 = vadd.f32 %v2392, %v2420
        %2422 = vdwg.mxu0
        %v2423 = vmul.f32 %v2418, %v2418
        %v2424 = vmul.f32 %v2421, %v2421
        %v2425 = vmul.f32 %v2418, %v2423
        %v2426 = vmul.f32 %v2421, %v2424
        %v2427 = vmul.f32 %v2425, 0.044715
        %v2428 = vmul.f32 %v2426, 0.044715
        %v2429 = vadd.f32 %v2418, %v2427
        %v2430 = vadd.f32 %v2421, %v2428
        %v2431 = vmul.f32 %v2429, 0.7978846
        %v2432 = vmul.f32 %v2430, 0.7978846
        %v2433 = vtanh.pop %v2431
        %v2434 = vtanh.pop %v2432
        %v2435 = vadd.f32 %v2433, 1.0
        %v2436 = vadd.f32 %v2434, 1.0
        %v2437 = vmul.f32 %v2435, 0.5
        %v2438 = vmul.f32 %v2436, 0.5
        %v2439 = vmul.f32 %v2418, %v2437
        %v2440 = vmul.f32 %v2421, %v2438
        %v2441 = vld [vmem:[%s928] sm:$0xff]
        %v2442 = vld [vmem:[%s928 + $0x8] sm:$0xff]
        %v2443 = vld [vmem:[%s928 + $0x10] sm:$0xff]
        %v2444 = vld [vmem:[%s928 + $0x18] sm:$0xff]
        %v2445 = vld [vmem:[%s928 + $0x20] sm:$0xff]
        %v2446 = vld [vmem:[%s928 + $0x28] sm:$0xff]
        %v2447 = vld [vmem:[%s928 + $0x30] sm:$0xff]
        %v2448 = vld [vmem:[%s928 + $0x38] sm:$0xff]
        %v2449 = vld [vmem:[%s928 + $0x40] sm:$0xff]
        %v2450 = vld [vmem:[%s928 + $0x48] sm:$0xff]
        %v2451 = vld [vmem:[%s928 + $0x50] sm:$0xff]
        %v2452 = vld [vmem:[%s928 + $0x58] sm:$0xff]
        %v2453 = vld [vmem:[%s928 + $0x60] sm:$0xff]
        %v2454 = vld [vmem:[%s928 + $0x68] sm:$0xff]
        %v2455 = vld [vmem:[%s928 + $0x70] sm:$0xff]
        %v2456 = vld [vmem:[%s928 + $0x78] sm:$0xff]
        %v2457 = vld [vmem:[%s931] sm:$0x1]
        %v2459 = vperm.slane %v2457, 0
        %2461 = vmatpush.msra.mxu0 %v2456
        %2462 = vmatpush.msra.mxu0 %v2455
        %2463 = vmatpush.msra.mxu0 %v2454
        %2464 = vmatpush.msra.mxu0 %v2453
        %2465 = vmatpush.msra.mxu0 %v2452
        %2466 = vmatpush.msra.mxu0 %v2451
        %2467 = vmatpush.msra.mxu0 %v2450
        %2468 = vmatpush.msra.mxu0 %v2449
        %2469 = vmatpush.msra.mxu0 %v2448
        %2470 = vmatpush.msra.mxu0 %v2447
        %2471 = vmatpush.msra.mxu0 %v2446
        %2472 = vmatpush.msra.mxu0 %v2445
        %2473 = vmatpush.msra.mxu0 %v2444
        %2474 = vmatpush.msra.mxu0 %v2443
        %2475 = vmatpush.msra.mxu0 %v2442
        %2476 = vmatpush.msra.mxu0 %v2441
        %2477 = vmatmul.f32.gmra.mxu0 %v2439
        %v2478 = vpop.f32.mrf.mxu0
        %v2479 = vadd.f32 %v2459, %v2478
        %2480 = vmatmul.f32.gmra.mxu0 %v2440
        %v2481 = vpop.f32.mrf.mxu0
        %v2482 = vadd.f32 %v2459, %v2481
        %2483 = vdwg.mxu0
        %v2484 = vadd.f32 %v2334, %v2479
        %v2485 = vadd.f32 %v2335, %v2482
        %2486 = vst.msk [vmem:[#allocation2] sm:$0xff] %vm1033, %v2484
        %2487 = vst.msk [vmem:[#allocation2 + $0x8] sm:$0xff] %vm1033, %v2485
        %p2488 = scmp.eq.s32.totalorder %s39, 5
        // Predicated region
        $region109: #{tree_att_encoder.1} parent=99 // pred_check
          %p2489 = pneg %p2488
        $region110: #{tree_att_encoder.1} parent=99 // pred_check_branch
          %2491 = sbr.rel (%p2489) target = $region112
        $region111: #{tree_att_encoder.1} parent=99 // pred_region
          %v2492 = vld [vmem:[#allocation2] sm:$0xff]
          %v2493 = vld [vmem:[#allocation2 + $0x8] sm:$0xff]
          %2494 = vst.msk [vmem:[%s857] sm:$0xff] %vm1033, %v2492
          %2495 = vst.msk [vmem:[%s857 + $0x8] sm:$0xff] %vm1033, %v2493
        $region112: #{tree_att_encoder.1} parent=99 // pred_fallthru
          _
        %s2496 = sand.u32 %s564, 1
        %s2497 = scalar_lea.sflag [#allocation5], %s2496
        %s2498 = sand.u32 %s564, 1
        %s2499 = smul.addr %s2498, 16
        %s2500 = scalar_lea.vmem [#allocation4], %s2499
        // Predicated region
        $region113: #{tree_att_encoder.1} parent=99 // pred_check
          %p2501 = pneg %p574
        $region114: #{tree_att_encoder.1} parent=99 // pred_check_branch
          %2503 = sbr.rel (%p2501) target = $region116
        $region115: #{tree_att_encoder.1} parent=99 // pred_region
          %2505 = vsyncadd %s2497, 0
          %s2506 = smul.addr %s38, 2
          %s2507 = smul.addr %s2506, 8
          %s2508 = scalar_lea.hbm %s20, %s2507
          %s2509 = sshll.u32 %s2500, 4
          %s2510 = int_to_ptr.vmem [resolvable:$true] %s2509
          %s2511 = sshll.u32 %s2508, 4
          %s2512 = int_to_ptr.hbm [resolvable:$true] %s2511
          %2517 = dma.vmem_to_hbm [thread:$0]  %s2510, 256, %s2512, %s2497, 128, 128, 8
        $region116: #{tree_att_encoder.1} parent=99 // pred_fallthru
          _
      $region100: #{tree_att_encoder.1} parent=5 // pred_fallthru
        _
      %p2518 = scmp.le.s32.totalorder 2, %s29
      // Predicated region
      $region117: #{tree_att_encoder.1} parent=5 // pred_check
        %p2519 = pneg %p2518
      $region118: #{tree_att_encoder.1} parent=5 // pred_check_branch
        %2521 = sbr.rel (%p2519) target = $region120
      $region119: #{tree_att_encoder.1} parent=5 // pred_region
        %s2522 = ssub.s32 %s29, 2
        // Predicated region
        $region121: #{tree_att_encoder.1} parent=119 // pred_check
          %p2523 = pneg %p580
        $region122: #{tree_att_encoder.1} parent=119 // pred_check_branch
          %2525 = sbr.rel (%p2523) target = $region124
        $region123: #{tree_att_encoder.1} parent=119 // pred_region
          %s2526 = sand.u32 %s565, 1
          %s2527 = scalar_lea.sflag [#allocation5], %s2526
          %s2528 = sand.u32 %s565, 1
          %s2529 = smul.addr %s2528, 16
          %s2530 = scalar_lea.vmem [#allocation4], %s2529
          %2532 = dma.done %s2527, 256
        $region124: #{tree_att_encoder.1} parent=119 // pred_fallthru
          _
      $region120: #{tree_att_encoder.1} parent=5 // pred_fallthru
        _
    $region6: #{tree_att_encoder.1} parent=1 // loop_footer
      %s33 = sadd.s32 1, %s29
    $region7: #{tree_att_encoder.1} parent=1 // loop_footer_branch
      %28 = sbr.rel target = $region3
    $region8: #{tree_att_encoder.1} parent=1 // loop_exit
      _
    %2533 = vsyncpa [#allocation5], 1
    %s2534 = scalar_lea.sflag [#allocation5], 1
    %2535 = vsyncpa %s2534, 1

</llo_original>
